<compile_context>
chip_gen: v6e
topology: v6e:2x2x1
jax: 0.10.0
libtpu: 0.0.40
codegen_flags: <defaults>
</compile_context>

<pallas_src>
import functools
import math

import jax
import jax.numpy as jnp
from jax.experimental import pallas as pl
from jax.experimental.pallas import tpu as pltpu


def _albert_layers_kernel(
    x_ref,                    # (TB, S, D)  TB sequences of one batch group
    pe_ref,                   # (S, D)      learned positional rows [0:S]
    wqkv_ref, bqkv_ref,       # (D, 3D), (1, 3D)   fused QKV (scale folded in)
    wo_ref, bo_ref,           # (D, D),  (1, D)    attention out-projection
    g1_ref, be1_ref,          # (1, D)             LayerNorm1 gamma/beta
    w1_ref, b1_ref,           # (D, F), (1, F)
    w2_ref, b2_ref,           # (F, D), (1, D)
    g2_ref, be2_ref,          # (1, D)             LayerNorm2 gamma/beta
    o_ref,                    # (1, TB, D)   token-0 activations per sequence
    *, num_layers, nhead,
):
    f32 = jnp.float32
    eps = 1e-5
    TB, S, D = x_ref.shape
    H = nhead
    Dh = D // H
    mm_dt = wqkv_ref.dtype            # matmul operand dtype (f32 or bf16)

    # Positional-encoding add, then flatten sequences into MXU rows.
    x = x_ref[...].astype(f32) + pe_ref[...].astype(f32)[None]      # (TB, S, D)
    h0 = x.reshape(TB * S, D)

    def layer_norm(y, g_ref, b_ref):
        mu = jnp.mean(y, axis=-1, keepdims=True)
        yc = y - mu
        var = jnp.mean(yc * yc, axis=-1, keepdims=True)
        return yc * jax.lax.rsqrt(var + eps) * g_ref[...] + b_ref[...]

    def layer(_, h):
        # ---- fused QKV projection: one (TB*S, D) x (D, 3D) matmul ----
        qkv = (jnp.dot(h.astype(mm_dt), wqkv_ref[...],
                       preferred_element_type=f32) + bqkv_ref[...])   # (TB*S, 3D)
        q3 = qkv[:, 0 * D:1 * D].reshape(TB, S, D)   # already scaled by 1/sqrt(Dh)
        k3 = qkv[:, 1 * D:2 * D].reshape(TB, S, D)
        v3 = qkv[:, 2 * D:3 * D].reshape(TB, S, D)

        # ---- per-head scores / softmax / weighted sum, batched over TB ----
        heads = []
        for hd in range(H):                          # small static unroll
            sl = slice(hd * Dh, (hd + 1) * Dh)
            qh, kh, vh = q3[:, :, sl], k3[:, :, sl], v3[:, :, sl]
            s = jnp.einsum('bqd,bkd->bqk', qh, kh,
                           preferred_element_type=f32)               # (TB, S, S)
            s = s - jnp.max(s, axis=-1, keepdims=True)
            p = jnp.exp(s)
            p = p * pl.reciprocal(jnp.sum(p, axis=-1, keepdims=True),
                                  approx=True)                       # EUP slot
            heads.append(jnp.einsum('bqk,bkd->bqd', p, vh,
                                    preferred_element_type=f32))     # (TB, S, Dh)
        ctx = jnp.concatenate(heads, axis=-1).reshape(TB * S, D)

        # ---- single fused out-projection ----
        attn = (jnp.dot(ctx.astype(mm_dt), wo_ref[...],
                        preferred_element_type=f32) + bo_ref[...])

        # ---- residual + LayerNorm1 ----
        y = layer_norm(h + attn, g1_ref, be1_ref)

        # ---- feed-forward ----
        f = (jnp.dot(y.astype(mm_dt), w1_ref[...],
                     preferred_element_type=f32) + b1_ref[...])
        f = jnp.maximum(f, 0.0)
        f = (jnp.dot(f.astype(mm_dt), w2_ref[...],
                     preferred_element_type=f32) + b2_ref[...])

        # ---- residual + LayerNorm2 ----
        return layer_norm(y + f, g2_ref, be2_ref)

    # ALBERT weight sharing: same weights applied num_layers times on a
    # VMEM-resident carry.  Rolled loop bounds vreg live ranges / code size.
    y = jax.lax.fori_loop(0, num_layers, layer, h0)

    # Emit token-0 activations; the linear reducer runs outside the kernel.
    o_ref[0] = y.reshape(TB, S, D)[:, 0, :].astype(o_ref.dtype)


def _pick_block_batch(B, S, target_rows=256, max_rows=1024):
    """Largest divisor TB of B with TB*S <= max_rows (stop once >= target)."""
    best = 1
    for tb in range(1, B + 1):
        if B % tb:
            continue
        if tb * S <= max_rows:
            best = tb
        if tb * S >= target_rows:
            break
    return best


def _vmem_limit_bytes(TB, S, D, F, w_itemsize):
    weights = (D * 3 * D + D * D + D * F + F * D) * w_itemsize
    small = (3 * D + 7 * D + F) * 4
    acts = TB * S * (5 * D + F) * 4          # f32 working set per layer
    scores = 2 * TB * S * S * 4
    io = 3 * TB * S * D * 4 + 2 * TB * D * 4
    est = 2 * (weights + small + acts + scores + io)   # 2x headroom
    return int(min(max(est, 32 * 1024 * 1024), 64 * 1024 * 1024))


def albert_encoder_forward(src, params, *, num_layers, nhead,
                           matmul_dtype=None, single_buffer_weights=True):
    """src: [batch, d_model, seq_len] -> [batch, num_outputs]."""
    B, D, S = src.shape
    assert D % nhead == 0
    f32 = jnp.float32
    # Glue: the two torch permutes fold into a single batch-major transpose.
    x = jnp.transpose(src, (0, 2, 1))                              # [B, S, D]
    mm_dt = matmul_dtype if matmul_dtype is not None else x.dtype  # MXU operand dtype
    dh = D // nhead
    Fdim = params['w1'].shape[1]

    # --- lane-dense weight prep (done once, outside the kernel) ---
    scale = 1.0 / math.sqrt(dh)
    wqkv = jnp.concatenate(
        [params['wq'] * scale, params['wk'], params['wv']], axis=1).astype(mm_dt)
    bqkv = jnp.concatenate(
        [params['bq'] * scale, params['bk'], params['bv']]).reshape(1, 3 * D).astype(f32)
    wo = params['wo'].astype(mm_dt)                                # (D, D)
    bo = params['bo'].reshape(1, D).astype(f32)
    g1 = params['g1'].reshape(1, D).astype(f32)
    be1 = params['be1'].reshape(1, D).astype(f32)
    w1 = params['w1'].astype(mm_dt)                                # (D, F)
    b1 = params['b1'].reshape(1, Fdim).astype(f32)
    w2 = params['w2'].astype(mm_dt)                                # (F, D)
    b2 = params['b2'].reshape(1, D).astype(f32)
    g2 = params['g2'].reshape(1, D).astype(f32)
    be2 = params['be2'].reshape(1, D).astype(f32)
    pe = params['pos_table'][:S].astype(f32)   # wrapper-side window: full-dim block

    TB = _pick_block_batch(B, S)
    G = B // TB

    kernel = functools.partial(_albert_layers_kernel,
                               num_layers=num_layers, nhead=nhead)

    def const_spec(shape):
        idx = lambda b, _shape=shape: (0,) * len(_shape)
        if single_buffer_weights:
            # Constant block index: one VMEM buffer is enough (no double buffer).
            return pl.BlockSpec(shape, idx,
                                pipeline_mode=pl.Buffered(buffer_count=1))
        return pl.BlockSpec(shape, idx)

    tok0 = pl.pallas_call(
        kernel,
        out_shape=jax.ShapeDtypeStruct((G, TB, D), f32),
        grid_spec=pltpu.PrefetchScalarGridSpec(
            num_scalar_prefetch=0,
            grid=(G,),
            in_specs=[
                pl.BlockSpec((TB, S, D), lambda b: (b, 0, 0)),     # x (double-buffered)
                const_spec((S, D)),                                # pos rows
                const_spec((D, 3 * D)),                            # wqkv
                const_spec((1, 3 * D)),                            # bqkv
                const_spec((D, D)),                                # wo
                const_spec((1, D)),                                # bo
                const_spec((1, D)),                                # g1
                const_spec((1, D)),                                # be1
                const_spec((D, Fdim)),                             # w1
                const_spec((1, Fdim)),                             # b1
                const_spec((Fdim, D)),                             # w2
                const_spec((1, D)),                                # b2
                const_spec((1, D)),                                # g2
                const_spec((1, D)),                                # be2
            ],
            out_specs=pl.BlockSpec((1, TB, D), lambda b: (b, 0, 0)),
        ),
        compiler_params=pltpu.CompilerParams(
            dimension_semantics=("parallel",),       # batch groups split across TCs
            vmem_limit_bytes=_vmem_limit_bytes(TB, S, D, Fdim,
                                               jnp.dtype(mm_dt).itemsize),
        ),
    )(x, pe, wqkv, bqkv, wo, bo, g1, be1, w1, b1, w2, b2, g2, be2)

    # First-token pooling + linear reducer as one lane-dense XLA matmul.
    tok0 = tok0.reshape(B, D).astype(f32)
    out = tok0 @ params['wr'].astype(f32) + params['br'].astype(f32)
    return out.astype(src.dtype)


# ----------------------------- pure-JAX reference -----------------------------

def _layer_norm_ref(x, g, b, eps=1e-5):
    mu = jnp.mean(x, axis=-1, keepdims=True)
    var = jnp.mean((x - mu) ** 2, axis=-1, keepdims=True)
    return (x - mu) * jax.lax.rsqrt(var + eps) * g + b


def reference_forward(src, p, *, num_layers, nhead):
    B, D, S = src.shape
    dh = D // nhead
    scale = 1.0 / math.sqrt(dh)
    x = jnp.transpose(src, (0, 2, 1)).astype(jnp.float32)          # [B, S, D]
    x = x + p['pos_table'][:S][None, :, :]
    for _ in range(num_layers):
        q = x @ p['wq'] + p['bq']
        k = x @ p['wk'] + p['bk']
        v = x @ p['wv'] + p['bv']
        qh = q.reshape(B, S, nhead, dh).transpose(0, 2, 1, 3)
        kh = k.reshape(B, S, nhead, dh).transpose(0, 2, 1, 3)
        vh = v.reshape(B, S, nhead, dh).transpose(0, 2, 1, 3)
        s = jnp.einsum('bhqe,bhke->bhqk', qh * scale, kh)
        a = jax.nn.softmax(s, axis=-1)
        o = jnp.einsum('bhqk,bhke->bhqe', a, vh)
        o = o.transpose(0, 2, 1, 3).reshape(B, S, D) @ p['wo'] + p['bo']
        x = _layer_norm_ref(x + o, p['g1'], p['be1'])
        f = jax.nn.relu(x @ p['w1'] + p['b1']) @ p['w2'] + p['b2']
        x = _layer_norm_ref(x + f, p['g2'], p['be2'])
    return x[:, 0, :] @ p['wr'] + p['br']


if __name__ == "__main__":
    num_layers = 2
    d_model = 32
    nhead = 4
    dim_feedforward = 64
    seq_len = 8
    batch = 2
    num_outputs = 8
    max_seq_len = 32

    key = jax.random.PRNGKey(0)
    ks = jax.random.split(key, 20)
    sd = 1.0 / math.sqrt(d_model)
    sf = 1.0 / math.sqrt(dim_feedforward)
    params = dict(
        pos_table=0.1 * jax.random.normal(ks[0], (max_seq_len, d_model), jnp.float32),
        wq=sd * jax.random.normal(ks[1], (d_model, d_model), jnp.float32),
        wk=sd * jax.random.normal(ks[2], (d_model, d_model), jnp.float32),
        wv=sd * jax.random.normal(ks[3], (d_model, d_model), jnp.float32),
        bq=0.02 * jax.random.normal(ks[4], (d_model,), jnp.float32),
        bk=0.02 * jax.random.normal(ks[5], (d_model,), jnp.float32),
        bv=0.02 * jax.random.normal(ks[6], (d_model,), jnp.float32),
        wo=sd * jax.random.normal(ks[7], (d_model, d_model), jnp.float32),
        bo=0.02 * jax.random.normal(ks[8], (d_model,), jnp.float32),
        g1=1.0 + 0.1 * jax.random.normal(ks[9], (d_model,), jnp.float32),
        be1=0.1 * jax.random.normal(ks[10], (d_model,), jnp.float32),
        w1=sd * jax.random.normal(ks[11], (d_model, dim_feedforward), jnp.float32),
        b1=0.02 * jax.random.normal(ks[12], (dim_feedforward,), jnp.float32),
        w2=sf * jax.random.normal(ks[13], (dim_feedforward, d_model), jnp.float32),
        b2=0.02 * jax.random.normal(ks[14], (d_model,), jnp.float32),
        g2=1.0 + 0.1 * jax.random.normal(ks[15], (d_model,), jnp.float32),
        be2=0.1 * jax.random.normal(ks[16], (d_model,), jnp.float32),
        wr=sd * jax.random.normal(ks[17], (d_model, num_outputs), jnp.float32),
        br=0.02 * jax.random.normal(ks[18], (num_outputs,), jnp.float32),
    )

    # Module input: [batch, d_model, seq_len]
    src = jax.random.normal(ks[19], (batch, d_model, seq_len), jnp.float32)

    fwd_fast = jax.jit(functools.partial(
        albert_encoder_forward, num_layers=num_layers, nhead=nhead,
        single_buffer_weights=True))
    fwd_safe = jax.jit(functools.partial(
        albert_encoder_forward, num_layers=num_layers, nhead=nhead,
        single_buffer_weights=False))

    try:
        out = jax.block_until_ready(fwd_fast(src, params))
    except Exception:
        # TODO(synk): pipeline_mode=pl.Buffered(1) unavailable on this JAX build;
        # fall back to default double-buffered weight blocks.
        out = jax.block_until_ready(fwd_safe(src, params))

    ref = reference_forward(src, params, num_layers=num_layers, nhead=nhead)
    assert out.shape == (batch, num_outputs)
    err = float(jnp.max(jnp.abs(out - ref)))
    # Tolerance accounts for pl.reciprocal(approx=True) in the softmax denominator.
    assert jnp.allclose(out, ref, atol=2e-3, rtol=2e-3), \
        f"mismatch vs reference, max abs err {err}"

    print("KERNEL_OK")
</pallas_src>

<mosaic_0001>
module attributes {stable_mosaic.version = 11 : i64} {
  func.func @_albert_layers_kernel(%arg0: i32, %arg1: memref<2x8x32xf32, #tpu.memory_space<vmem>>, %arg2: memref<8x32xf32, #tpu.memory_space<vmem>>, %arg3: memref<32x96xf32, #tpu.memory_space<vmem>>, %arg4: memref<1x96xf32, #tpu.memory_space<vmem>>, %arg5: memref<32x32xf32, #tpu.memory_space<vmem>>, %arg6: memref<1x32xf32, #tpu.memory_space<vmem>>, %arg7: memref<1x32xf32, #tpu.memory_space<vmem>>, %arg8: memref<1x32xf32, #tpu.memory_space<vmem>>, %arg9: memref<32x64xf32, #tpu.memory_space<vmem>>, %arg10: memref<1x64xf32, #tpu.memory_space<vmem>>, %arg11: memref<64x32xf32, #tpu.memory_space<vmem>>, %arg12: memref<1x32xf32, #tpu.memory_space<vmem>>, %arg13: memref<1x32xf32, #tpu.memory_space<vmem>>, %arg14: memref<1x32xf32, #tpu.memory_space<vmem>>, %arg15: memref<1x2x32xf32, #tpu.memory_space<vmem>>) attributes {dimension_semantics = [#tpu.dimension_semantics<parallel>], iteration_bounds = array<i64: 1>, scalar_prefetch = 0 : i64, scratch_operands = 0 : i64, tpu.core_type = #tpu.core_type<tc>, window_params = [{transform_indices = @transform_0, window_bounds = array<i64: 2, 8, 32>}, {pipeline_mode = #tpu.pipeline_mode<synchronous>, transform_indices = @transform_1, window_bounds = array<i64: 8, 32>}, {pipeline_mode = #tpu.pipeline_mode<synchronous>, transform_indices = @transform_2, window_bounds = array<i64: 32, 96>}, {pipeline_mode = #tpu.pipeline_mode<synchronous>, transform_indices = @transform_3, window_bounds = array<i64: 1, 96>}, {pipeline_mode = #tpu.pipeline_mode<synchronous>, transform_indices = @transform_4, window_bounds = array<i64: 32, 32>}, {pipeline_mode = #tpu.pipeline_mode<synchronous>, transform_indices = @transform_5, window_bounds = array<i64: 1, 32>}, {pipeline_mode = #tpu.pipeline_mode<synchronous>, transform_indices = @transform_6, window_bounds = array<i64: 1, 32>}, {pipeline_mode = #tpu.pipeline_mode<synchronous>, transform_indices = @transform_7, window_bounds = array<i64: 1, 32>}, {pipeline_mode = #tpu.pipeline_mode<synchronous>, transform_indices = @transform_8, window_bounds = array<i64: 32, 64>}, {pipeline_mode = #tpu.pipeline_mode<synchronous>, transform_indices = @transform_9, window_bounds = array<i64: 1, 64>}, {pipeline_mode = #tpu.pipeline_mode<synchronous>, transform_indices = @transform_10, window_bounds = array<i64: 64, 32>}, {pipeline_mode = #tpu.pipeline_mode<synchronous>, transform_indices = @transform_11, window_bounds = array<i64: 1, 32>}, {pipeline_mode = #tpu.pipeline_mode<synchronous>, transform_indices = @transform_12, window_bounds = array<i64: 1, 32>}, {pipeline_mode = #tpu.pipeline_mode<synchronous>, transform_indices = @transform_13, window_bounds = array<i64: 1, 32>}, {transform_indices = @transform_14, window_bounds = array<i64: 1, 2, 32>}]} {
    %c0 = arith.constant 0 : index
    %c0_0 = arith.constant 0 : index
    %c0_1 = arith.constant 0 : index
    %0 = vector.load %arg1[%c0, %c0_0, %c0_1] : memref<2x8x32xf32, #tpu.memory_space<vmem>>, vector<2x8x32xf32>
    %c0_2 = arith.constant 0 : index
    %c0_3 = arith.constant 0 : index
    %1 = vector.load %arg2[%c0_2, %c0_3] : memref<8x32xf32, #tpu.memory_space<vmem>>, vector<8x32xf32>
    %2 = vector.shape_cast %1 : vector<8x32xf32> to vector<1x8x32xf32>
    %3 = vector.broadcast %2 : vector<1x8x32xf32> to vector<2x8x32xf32>
    %4 = arith.addf %0, %3 : vector<2x8x32xf32>
    %5 = vector.shape_cast %4 : vector<2x8x32xf32> to vector<16x32xf32>
    %c0_i32 = arith.constant 0 : i32
    %c2_i32 = arith.constant 2 : i32
    %6 = arith.addi %c0_i32, %c2_i32 : i32
    %c1_i32 = arith.constant 1 : i32
    %7 = scf.for %arg16 = %c0_i32 to %6 step %c1_i32 iter_args(%arg17 = %5) -> (vector<16x32xf32>)  : i32 {
      %c0_7 = arith.constant 0 : index
      %c0_8 = arith.constant 0 : index
      %14 = vector.load %arg3[%c0_7, %c0_8] : memref<32x96xf32, #tpu.memory_space<vmem>>, vector<32x96xf32>
      %cst = arith.constant dense<0.000000e+00> : vector<16x96xf32>
      %15 = tpu.matmul %arg17, %14, %cst {dimension_numbers = #tpu.dot_dimension_numbers<[1], [0], [0], [1], [0, 0, 1, 1], [], []>} : vector<16x32xf32>, vector<32x96xf32>, vector<16x96xf32> -> vector<16x96xf32>
      %c0_9 = arith.constant 0 : index
      %c0_10 = arith.constant 0 : index
      %16 = vector.load %arg4[%c0_9, %c0_10] : memref<1x96xf32, #tpu.memory_space<vmem>>, vector<1x96xf32>
      %17 = vector.broadcast %16 : vector<1x96xf32> to vector<16x96xf32>
      %18 = arith.addf %15, %17 : vector<16x96xf32>
      %19 = vector.extract_strided_slice %18 {offsets = [0, 0], sizes = [16, 32], strides = [1, 1]} : vector<16x96xf32> to vector<16x32xf32>
      %20 = vector.shape_cast %19 : vector<16x32xf32> to vector<2x8x32xf32>
      %21 = vector.extract_strided_slice %18 {offsets = [0, 32], sizes = [16, 32], strides = [1, 1]} : vector<16x96xf32> to vector<16x32xf32>
      %22 = vector.shape_cast %21 : vector<16x32xf32> to vector<2x8x32xf32>
      %23 = vector.extract_strided_slice %18 {offsets = [0, 64], sizes = [16, 32], strides = [1, 1]} : vector<16x96xf32> to vector<16x32xf32>
      %24 = vector.shape_cast %23 : vector<16x32xf32> to vector<2x8x32xf32>
      %25 = vector.extract_strided_slice %20 {offsets = [0, 0, 0], sizes = [2, 8, 8], strides = [1, 1, 1]} : vector<2x8x32xf32> to vector<2x8x8xf32>
      %26 = vector.extract_strided_slice %22 {offsets = [0, 0, 0], sizes = [2, 8, 8], strides = [1, 1, 1]} : vector<2x8x32xf32> to vector<2x8x8xf32>
      %27 = vector.extract_strided_slice %24 {offsets = [0, 0, 0], sizes = [2, 8, 8], strides = [1, 1, 1]} : vector<2x8x32xf32> to vector<2x8x8xf32>
      "tpu.trace_start"() <{level = 10 : i32, message = "bqd,bkd->bqk"}> : () -> ()
      %cst_11 = arith.constant dense<0.000000e+00> : vector<2x8x8xf32>
      %28 = tpu.matmul %25, %26, %cst_11 {dimension_numbers = #tpu.dot_dimension_numbers<[2], [2], [1], [1], [0, 0, 0, 1, 1, 1], [0], [0]>} : vector<2x8x8xf32>, vector<2x8x8xf32>, vector<2x8x8xf32> -> vector<2x8x8xf32>
      "tpu.trace_stop"() : () -> ()
      %cst_12 = arith.constant dense<0xFF800000> : vector<2x8xf32>
      %29 = vector.multi_reduction <maximumf>, %28, %cst_12 [2] : vector<2x8x8xf32> to vector<2x8xf32>
      %30 = vector.shape_cast %29 : vector<2x8xf32> to vector<2x8x1xf32>
      %31 = vector.broadcast %30 : vector<2x8x1xf32> to vector<2x8x8xf32>
      %32 = arith.subf %28, %31 : vector<2x8x8xf32>
      %33 = math.exp %32 : vector<2x8x8xf32>
      %cst_13 = arith.constant dense<0.000000e+00> : vector<2x8xf32>
      %34 = vector.multi_reduction <add>, %33, %cst_13 [2] : vector<2x8x8xf32> to vector<2x8xf32>
      %35 = vector.shape_cast %34 : vector<2x8xf32> to vector<2x8x1xf32>
      %36 = tpu.reciprocal %35 {approx = true} : vector<2x8x1xf32> -> vector<2x8x1xf32>
      %37 = vector.broadcast %36 : vector<2x8x1xf32> to vector<2x8x8xf32>
      %38 = arith.mulf %33, %37 : vector<2x8x8xf32>
      "tpu.trace_start"() <{level = 10 : i32, message = "bqk,bkd->bqd"}> : () -> ()
      %cst_14 = arith.constant dense<0.000000e+00> : vector<2x8x8xf32>
      %39 = tpu.matmul %38, %27, %cst_14 {dimension_numbers = #tpu.dot_dimension_numbers<[2], [1], [1], [2], [0, 0, 0, 1, 1, 2], [0], [0]>} : vector<2x8x8xf32>, vector<2x8x8xf32>, vector<2x8x8xf32> -> vector<2x8x8xf32>
      "tpu.trace_stop"() : () -> ()
      %40 = vector.extract_strided_slice %20 {offsets = [0, 0, 8], sizes = [2, 8, 8], strides = [1, 1, 1]} : vector<2x8x32xf32> to vector<2x8x8xf32>
      %41 = vector.extract_strided_slice %22 {offsets = [0, 0, 8], sizes = [2, 8, 8], strides = [1, 1, 1]} : vector<2x8x32xf32> to vector<2x8x8xf32>
      %42 = vector.extract_strided_slice %24 {offsets = [0, 0, 8], sizes = [2, 8, 8], strides = [1, 1, 1]} : vector<2x8x32xf32> to vector<2x8x8xf32>
      "tpu.trace_start"() <{level = 10 : i32, message = "bqd,bkd->bqk"}> : () -> ()
      %cst_15 = arith.constant dense<0.000000e+00> : vector<2x8x8xf32>
      %43 = tpu.matmul %40, %41, %cst_15 {dimension_numbers = #tpu.dot_dimension_numbers<[2], [2], [1], [1], [0, 0, 0, 1, 1, 1], [0], [0]>} : vector<2x8x8xf32>, vector<2x8x8xf32>, vector<2x8x8xf32> -> vector<2x8x8xf32>
      "tpu.trace_stop"() : () -> ()
      %cst_16 = arith.constant dense<0xFF800000> : vector<2x8xf32>
      %44 = vector.multi_reduction <maximumf>, %43, %cst_16 [2] : vector<2x8x8xf32> to vector<2x8xf32>
      %45 = vector.shape_cast %44 : vector<2x8xf32> to vector<2x8x1xf32>
      %46 = vector.broadcast %45 : vector<2x8x1xf32> to vector<2x8x8xf32>
      %47 = arith.subf %43, %46 : vector<2x8x8xf32>
      %48 = math.exp %47 : vector<2x8x8xf32>
      %cst_17 = arith.constant dense<0.000000e+00> : vector<2x8xf32>
      %49 = vector.multi_reduction <add>, %48, %cst_17 [2] : vector<2x8x8xf32> to vector<2x8xf32>
      %50 = vector.shape_cast %49 : vector<2x8xf32> to vector<2x8x1xf32>
      %51 = tpu.reciprocal %50 {approx = true} : vector<2x8x1xf32> -> vector<2x8x1xf32>
      %52 = vector.broadcast %51 : vector<2x8x1xf32> to vector<2x8x8xf32>
      %53 = arith.mulf %48, %52 : vector<2x8x8xf32>
      "tpu.trace_start"() <{level = 10 : i32, message = "bqk,bkd->bqd"}> : () -> ()
      %cst_18 = arith.constant dense<0.000000e+00> : vector<2x8x8xf32>
      %54 = tpu.matmul %53, %42, %cst_18 {dimension_numbers = #tpu.dot_dimension_numbers<[2], [1], [1], [2], [0, 0, 0, 1, 1, 2], [0], [0]>} : vector<2x8x8xf32>, vector<2x8x8xf32>, vector<2x8x8xf32> -> vector<2x8x8xf32>
      "tpu.trace_stop"() : () -> ()
      %55 = vector.extract_strided_slice %20 {offsets = [0, 0, 16], sizes = [2, 8, 8], strides = [1, 1, 1]} : vector<2x8x32xf32> to vector<2x8x8xf32>
      %56 = vector.extract_strided_slice %22 {offsets = [0, 0, 16], sizes = [2, 8, 8], strides = [1, 1, 1]} : vector<2x8x32xf32> to vector<2x8x8xf32>
      %57 = vector.extract_strided_slice %24 {offsets = [0, 0, 16], sizes = [2, 8, 8], strides = [1, 1, 1]} : vector<2x8x32xf32> to vector<2x8x8xf32>
      "tpu.trace_start"() <{level = 10 : i32, message = "bqd,bkd->bqk"}> : () -> ()
      %cst_19 = arith.constant dense<0.000000e+00> : vector<2x8x8xf32>
      %58 = tpu.matmul %55, %56, %cst_19 {dimension_numbers = #tpu.dot_dimension_numbers<[2], [2], [1], [1], [0, 0, 0, 1, 1, 1], [0], [0]>} : vector<2x8x8xf32>, vector<2x8x8xf32>, vector<2x8x8xf32> -> vector<2x8x8xf32>
      "tpu.trace_stop"() : () -> ()
      %cst_20 = arith.constant dense<0xFF800000> : vector<2x8xf32>
      %59 = vector.multi_reduction <maximumf>, %58, %cst_20 [2] : vector<2x8x8xf32> to vector<2x8xf32>
      %60 = vector.shape_cast %59 : vector<2x8xf32> to vector<2x8x1xf32>
      %61 = vector.broadcast %60 : vector<2x8x1xf32> to vector<2x8x8xf32>
      %62 = arith.subf %58, %61 : vector<2x8x8xf32>
      %63 = math.exp %62 : vector<2x8x8xf32>
      %cst_21 = arith.constant dense<0.000000e+00> : vector<2x8xf32>
      %64 = vector.multi_reduction <add>, %63, %cst_21 [2] : vector<2x8x8xf32> to vector<2x8xf32>
      %65 = vector.shape_cast %64 : vector<2x8xf32> to vector<2x8x1xf32>
      %66 = tpu.reciprocal %65 {approx = true} : vector<2x8x1xf32> -> vector<2x8x1xf32>
      %67 = vector.broadcast %66 : vector<2x8x1xf32> to vector<2x8x8xf32>
      %68 = arith.mulf %63, %67 : vector<2x8x8xf32>
      "tpu.trace_start"() <{level = 10 : i32, message = "bqk,bkd->bqd"}> : () -> ()
      %cst_22 = arith.constant dense<0.000000e+00> : vector<2x8x8xf32>
      %69 = tpu.matmul %68, %57, %cst_22 {dimension_numbers = #tpu.dot_dimension_numbers<[2], [1], [1], [2], [0, 0, 0, 1, 1, 2], [0], [0]>} : vector<2x8x8xf32>, vector<2x8x8xf32>, vector<2x8x8xf32> -> vector<2x8x8xf32>
      "tpu.trace_stop"() : () -> ()
      %70 = vector.extract_strided_slice %20 {offsets = [0, 0, 24], sizes = [2, 8, 8], strides = [1, 1, 1]} : vector<2x8x32xf32> to vector<2x8x8xf32>
      %71 = vector.extract_strided_slice %22 {offsets = [0, 0, 24], sizes = [2, 8, 8], strides = [1, 1, 1]} : vector<2x8x32xf32> to vector<2x8x8xf32>
      %72 = vector.extract_strided_slice %24 {offsets = [0, 0, 24], sizes = [2, 8, 8], strides = [1, 1, 1]} : vector<2x8x32xf32> to vector<2x8x8xf32>
      "tpu.trace_start"() <{level = 10 : i32, message = "bqd,bkd->bqk"}> : () -> ()
      %cst_23 = arith.constant dense<0.000000e+00> : vector<2x8x8xf32>
      %73 = tpu.matmul %70, %71, %cst_23 {dimension_numbers = #tpu.dot_dimension_numbers<[2], [2], [1], [1], [0, 0, 0, 1, 1, 1], [0], [0]>} : vector<2x8x8xf32>, vector<2x8x8xf32>, vector<2x8x8xf32> -> vector<2x8x8xf32>
      "tpu.trace_stop"() : () -> ()
      %cst_24 = arith.constant dense<0xFF800000> : vector<2x8xf32>
      %74 = vector.multi_reduction <maximumf>, %73, %cst_24 [2] : vector<2x8x8xf32> to vector<2x8xf32>
      %75 = vector.shape_cast %74 : vector<2x8xf32> to vector<2x8x1xf32>
      %76 = vector.broadcast %75 : vector<2x8x1xf32> to vector<2x8x8xf32>
      %77 = arith.subf %73, %76 : vector<2x8x8xf32>
      %78 = math.exp %77 : vector<2x8x8xf32>
      %cst_25 = arith.constant dense<0.000000e+00> : vector<2x8xf32>
      %79 = vector.multi_reduction <add>, %78, %cst_25 [2] : vector<2x8x8xf32> to vector<2x8xf32>
      %80 = vector.shape_cast %79 : vector<2x8xf32> to vector<2x8x1xf32>
      %81 = tpu.reciprocal %80 {approx = true} : vector<2x8x1xf32> -> vector<2x8x1xf32>
      %82 = vector.broadcast %81 : vector<2x8x1xf32> to vector<2x8x8xf32>
      %83 = arith.mulf %78, %82 : vector<2x8x8xf32>
      "tpu.trace_start"() <{level = 10 : i32, message = "bqk,bkd->bqd"}> : () -> ()
      %cst_26 = arith.constant dense<0.000000e+00> : vector<2x8x8xf32>
      %84 = tpu.matmul %83, %72, %cst_26 {dimension_numbers = #tpu.dot_dimension_numbers<[2], [1], [1], [2], [0, 0, 0, 1, 1, 2], [0], [0]>} : vector<2x8x8xf32>, vector<2x8x8xf32>, vector<2x8x8xf32> -> vector<2x8x8xf32>
      "tpu.trace_stop"() : () -> ()
      %85 = tpu.concatenate %39, %54, %69, %84 in 2 : vector<2x8x8xf32>, vector<2x8x8xf32>, vector<2x8x8xf32>, vector<2x8x8xf32> -> vector<2x8x32xf32>
      %86 = vector.shape_cast %85 : vector<2x8x32xf32> to vector<16x32xf32>
      %c0_27 = arith.constant 0 : index
      %c0_28 = arith.constant 0 : index
      %87 = vector.load %arg5[%c0_27, %c0_28] : memref<32x32xf32, #tpu.memory_space<vmem>>, vector<32x32xf32>
      %cst_29 = arith.constant dense<0.000000e+00> : vector<16x32xf32>
      %88 = tpu.matmul %86, %87, %cst_29 {dimension_numbers = #tpu.dot_dimension_numbers<[1], [0], [0], [1], [0, 0, 1, 1], [], []>} : vector<16x32xf32>, vector<32x32xf32>, vector<16x32xf32> -> vector<16x32xf32>
      %c0_30 = arith.constant 0 : index
      %c0_31 = arith.constant 0 : index
      %89 = vector.load %arg6[%c0_30, %c0_31] : memref<1x32xf32, #tpu.memory_space<vmem>>, vector<1x32xf32>
      %90 = vector.broadcast %89 : vector<1x32xf32> to vector<16x32xf32>
      %91 = arith.addf %88, %90 : vector<16x32xf32>
      %92 = arith.addf %arg17, %91 : vector<16x32xf32>
      %cst_32 = arith.constant dense<0.000000e+00> : vector<16xf32>
      %93 = vector.multi_reduction <add>, %92, %cst_32 [1] : vector<16x32xf32> to vector<16xf32>
      %94 = vector.shape_cast %93 : vector<16xf32> to vector<16x1xf32>
      %cst_33 = arith.constant 3.200000e+01 : f32
      %95 = vector.broadcast %cst_33 : f32 to vector<16x1xf32>
      %96 = arith.divf %94, %95 : vector<16x1xf32>
      %97 = vector.broadcast %96 : vector<16x1xf32> to vector<16x32xf32>
      %98 = arith.subf %92, %97 : vector<16x32xf32>
      %99 = arith.mulf %98, %98 : vector<16x32xf32>
      %cst_34 = arith.constant dense<0.000000e+00> : vector<16xf32>
      %100 = vector.multi_reduction <add>, %99, %cst_34 [1] : vector<16x32xf32> to vector<16xf32>
      %101 = vector.shape_cast %100 : vector<16xf32> to vector<16x1xf32>
      %cst_35 = arith.constant 3.200000e+01 : f32
      %102 = vector.broadcast %cst_35 : f32 to vector<16x1xf32>
      %103 = arith.divf %101, %102 : vector<16x1xf32>
      %cst_36 = arith.constant 9.99999974E-6 : f32
      %104 = vector.broadcast %cst_36 : f32 to vector<16x1xf32>
      %105 = arith.addf %103, %104 : vector<16x1xf32>
      %106 = math.rsqrt %105 : vector<16x1xf32>
      %107 = vector.broadcast %106 : vector<16x1xf32> to vector<16x32xf32>
      %108 = arith.mulf %98, %107 : vector<16x32xf32>
      %c0_37 = arith.constant 0 : index
      %c0_38 = arith.constant 0 : index
      %109 = vector.load %arg7[%c0_37, %c0_38] : memref<1x32xf32, #tpu.memory_space<vmem>>, vector<1x32xf32>
      %110 = vector.broadcast %109 : vector<1x32xf32> to vector<16x32xf32>
      %111 = arith.mulf %108, %110 : vector<16x32xf32>
      %c0_39 = arith.constant 0 : index
      %c0_40 = arith.constant 0 : index
      %112 = vector.load %arg8[%c0_39, %c0_40] : memref<1x32xf32, #tpu.memory_space<vmem>>, vector<1x32xf32>
      %113 = vector.broadcast %112 : vector<1x32xf32> to vector<16x32xf32>
      %114 = arith.addf %111, %113 : vector<16x32xf32>
      %c0_41 = arith.constant 0 : index
      %c0_42 = arith.constant 0 : index
      %115 = vector.load %arg9[%c0_41, %c0_42] : memref<32x64xf32, #tpu.memory_space<vmem>>, vector<32x64xf32>
      %cst_43 = arith.constant dense<0.000000e+00> : vector<16x64xf32>
      %116 = tpu.matmul %114, %115, %cst_43 {dimension_numbers = #tpu.dot_dimension_numbers<[1], [0], [0], [1], [0, 0, 1, 1], [], []>} : vector<16x32xf32>, vector<32x64xf32>, vector<16x64xf32> -> vector<16x64xf32>
      %c0_44 = arith.constant 0 : index
      %c0_45 = arith.constant 0 : index
      %117 = vector.load %arg10[%c0_44, %c0_45] : memref<1x64xf32, #tpu.memory_space<vmem>>, vector<1x64xf32>
      %118 = vector.broadcast %117 : vector<1x64xf32> to vector<16x64xf32>
      %119 = arith.addf %116, %118 : vector<16x64xf32>
      %cst_46 = arith.constant 0.000000e+00 : f32
      %120 = vector.broadcast %cst_46 : f32 to vector<16x64xf32>
      %121 = arith.maximumf %119, %120 : vector<16x64xf32>
      %c0_47 = arith.constant 0 : index
      %c0_48 = arith.constant 0 : index
      %122 = vector.load %arg11[%c0_47, %c0_48] : memref<64x32xf32, #tpu.memory_space<vmem>>, vector<64x32xf32>
      %cst_49 = arith.constant dense<0.000000e+00> : vector<16x32xf32>
      %123 = tpu.matmul %121, %122, %cst_49 {dimension_numbers = #tpu.dot_dimension_numbers<[1], [0], [0], [1], [0, 0, 1, 1], [], []>} : vector<16x64xf32>, vector<64x32xf32>, vector<16x32xf32> -> vector<16x32xf32>
      %c0_50 = arith.constant 0 : index
      %c0_51 = arith.constant 0 : index
      %124 = vector.load %arg12[%c0_50, %c0_51] : memref<1x32xf32, #tpu.memory_space<vmem>>, vector<1x32xf32>
      %125 = vector.broadcast %124 : vector<1x32xf32> to vector<16x32xf32>
      %126 = arith.addf %123, %125 : vector<16x32xf32>
      %127 = arith.addf %114, %126 : vector<16x32xf32>
      %cst_52 = arith.constant dense<0.000000e+00> : vector<16xf32>
      %128 = vector.multi_reduction <add>, %127, %cst_52 [1] : vector<16x32xf32> to vector<16xf32>
      %129 = vector.shape_cast %128 : vector<16xf32> to vector<16x1xf32>
      %cst_53 = arith.constant 3.200000e+01 : f32
      %130 = vector.broadcast %cst_53 : f32 to vector<16x1xf32>
      %131 = arith.divf %129, %130 : vector<16x1xf32>
      %132 = vector.broadcast %131 : vector<16x1xf32> to vector<16x32xf32>
      %133 = arith.subf %127, %132 : vector<16x32xf32>
      %134 = arith.mulf %133, %133 : vector<16x32xf32>
      %cst_54 = arith.constant dense<0.000000e+00> : vector<16xf32>
      %135 = vector.multi_reduction <add>, %134, %cst_54 [1] : vector<16x32xf32> to vector<16xf32>
      %136 = vector.shape_cast %135 : vector<16xf32> to vector<16x1xf32>
      %cst_55 = arith.constant 3.200000e+01 : f32
      %137 = vector.broadcast %cst_55 : f32 to vector<16x1xf32>
      %138 = arith.divf %136, %137 : vector<16x1xf32>
      %cst_56 = arith.constant 9.99999974E-6 : f32
      %139 = vector.broadcast %cst_56 : f32 to vector<16x1xf32>
      %140 = arith.addf %138, %139 : vector<16x1xf32>
      %141 = math.rsqrt %140 : vector<16x1xf32>
      %142 = vector.broadcast %141 : vector<16x1xf32> to vector<16x32xf32>
      %143 = arith.mulf %133, %142 : vector<16x32xf32>
      %c0_57 = arith.constant 0 : index
      %c0_58 = arith.constant 0 : index
      %144 = vector.load %arg13[%c0_57, %c0_58] : memref<1x32xf32, #tpu.memory_space<vmem>>, vector<1x32xf32>
      %145 = vector.broadcast %144 : vector<1x32xf32> to vector<16x32xf32>
      %146 = arith.mulf %143, %145 : vector<16x32xf32>
      %c0_59 = arith.constant 0 : index
      %c0_60 = arith.constant 0 : index
      %147 = vector.load %arg14[%c0_59, %c0_60] : memref<1x32xf32, #tpu.memory_space<vmem>>, vector<1x32xf32>
      %148 = vector.broadcast %147 : vector<1x32xf32> to vector<16x32xf32>
      %149 = arith.addf %146, %148 : vector<16x32xf32>
      scf.yield %149 : vector<16x32xf32>
    }
    %8 = vector.shape_cast %7 : vector<16x32xf32> to vector<2x8x32xf32>
    %9 = vector.extract_strided_slice %8 {offsets = [0, 0, 0], sizes = [2, 1, 32], strides = [1, 1, 1]} : vector<2x8x32xf32> to vector<2x1x32xf32>
    %10 = vector.shape_cast %9 : vector<2x1x32xf32> to vector<2x32xf32>
    %c0_4 = arith.constant 0 : index
    %c0_5 = arith.constant 0 : index
    %c0_6 = arith.constant 0 : index
    %11 = vector.load %arg15[%c0_4, %c0_5, %c0_6] : memref<1x2x32xf32, #tpu.memory_space<vmem>>, vector<1x2x32xf32>
    %12 = vector.shape_cast %11 : vector<1x2x32xf32> to vector<2x32xf32>
    %13 = vector.shape_cast %10 : vector<2x32xf32> to vector<1x2x32xf32>
    tpu.vector_store %arg15[%c0_4, %c0_5, %c0_6], %13 {strides = array<i32>} : memref<1x2x32xf32, #tpu.memory_space<vmem>>, vector<1x2x32xf32>,
    return
  }
  func.func @transform_0(%arg0: i32) -> (i32, i32, i32) {
    %c0_i32 = arith.constant 0 : i32
    %c0_i32_0 = arith.constant 0 : i32
    %c0_i32_1 = arith.constant 0 : i32
    return %arg0, %c0_i32, %c0_i32_0 : i32, i32, i32
  }
  func.func @transform_1(%arg0: i32) -> (i32, i32) {
    %c0_i32 = arith.constant 0 : i32
    %c0_i32_0 = arith.constant 0 : i32
    %c0_i32_1 = arith.constant 0 : i32
    return %c0_i32, %c0_i32_0 : i32, i32
  }
  func.func @transform_2(%arg0: i32) -> (i32, i32) {
    %c0_i32 = arith.constant 0 : i32
    %c0_i32_0 = arith.constant 0 : i32
    %c0_i32_1 = arith.constant 0 : i32
    return %c0_i32, %c0_i32_0 : i32, i32
  }
  func.func @transform_3(%arg0: i32) -> (i32, i32) {
    %c0_i32 = arith.constant 0 : i32
    %c0_i32_0 = arith.constant 0 : i32
    %c0_i32_1 = arith.constant 0 : i32
    return %c0_i32, %c0_i32_0 : i32, i32
  }
  func.func @transform_4(%arg0: i32) -> (i32, i32) {
    %c0_i32 = arith.constant 0 : i32
    %c0_i32_0 = arith.constant 0 : i32
    %c0_i32_1 = arith.constant 0 : i32
    return %c0_i32, %c0_i32_0 : i32, i32
  }
  func.func @transform_5(%arg0: i32) -> (i32, i32) {
    %c0_i32 = arith.constant 0 : i32
    %c0_i32_0 = arith.constant 0 : i32
    %c0_i32_1 = arith.constant 0 : i32
    return %c0_i32, %c0_i32_0 : i32, i32
  }
  func.func @transform_6(%arg0: i32) -> (i32, i32) {
    %c0_i32 = arith.constant 0 : i32
    %c0_i32_0 = arith.constant 0 : i32
    %c0_i32_1 = arith.constant 0 : i32
    return %c0_i32, %c0_i32_0 : i32, i32
  }
  func.func @transform_7(%arg0: i32) -> (i32, i32) {
    %c0_i32 = arith.constant 0 : i32
    %c0_i32_0 = arith.constant 0 : i32
    %c0_i32_1 = arith.constant 0 : i32
    return %c0_i32, %c0_i32_0 : i32, i32
  }
  func.func @transform_8(%arg0: i32) -> (i32, i32) {
    %c0_i32 = arith.constant 0 : i32
    %c0_i32_0 = arith.constant 0 : i32
    %c0_i32_1 = arith.constant 0 : i32
    return %c0_i32, %c0_i32_0 : i32, i32
  }
  func.func @transform_9(%arg0: i32) -> (i32, i32) {
    %c0_i32 = arith.constant 0 : i32
    %c0_i32_0 = arith.constant 0 : i32
    %c0_i32_1 = arith.constant 0 : i32
    return %c0_i32, %c0_i32_0 : i32, i32
  }
  func.func @transform_10(%arg0: i32) -> (i32, i32) {
    %c0_i32 = arith.constant 0 : i32
    %c0_i32_0 = arith.constant 0 : i32
    %c0_i32_1 = arith.constant 0 : i32
    return %c0_i32, %c0_i32_0 : i32, i32
  }
  func.func @transform_11(%arg0: i32) -> (i32, i32) {
    %c0_i32 = arith.constant 0 : i32
    %c0_i32_0 = arith.constant 0 : i32
    %c0_i32_1 = arith.constant 0 : i32
    return %c0_i32, %c0_i32_0 : i32, i32
  }
  func.func @transform_12(%arg0: i32) -> (i32, i32) {
    %c0_i32 = arith.constant 0 : i32
    %c0_i32_0 = arith.constant 0 : i32
    %c0_i32_1 = arith.constant 0 : i32
    return %c0_i32, %c0_i32_0 : i32, i32
  }
  func.func @transform_13(%arg0: i32) -> (i32, i32) {
    %c0_i32 = arith.constant 0 : i32
    %c0_i32_0 = arith.constant 0 : i32
    %c0_i32_1 = arith.constant 0 : i32
    return %c0_i32, %c0_i32_0 : i32, i32
  }
  func.func @transform_14(%arg0: i32) -> (i32, i32, i32) {
    %c0_i32 = arith.constant 0 : i32
    %c0_i32_0 = arith.constant 0 : i32
    %c0_i32_1 = arith.constant 0 : i32
    return %arg0, %c0_i32, %c0_i32_0 : i32, i32, i32
  }
}

module attributes {stable_mosaic.version = 11 : i64} {
  func.func @_albert_layers_kernel(%arg0: i32, %arg1: memref<2x8x32xf32, #tpu.memory_space<vmem>>, %arg2: memref<8x32xf32, #tpu.memory_space<vmem>>, %arg3: memref<32x96xf32, #tpu.memory_space<vmem>>, %arg4: memref<1x96xf32, #tpu.memory_space<vmem>>, %arg5: memref<32x32xf32, #tpu.memory_space<vmem>>, %arg6: memref<1x32xf32, #tpu.memory_space<vmem>>, %arg7: memref<1x32xf32, #tpu.memory_space<vmem>>, %arg8: memref<1x32xf32, #tpu.memory_space<vmem>>, %arg9: memref<32x64xf32, #tpu.memory_space<vmem>>, %arg10: memref<1x64xf32, #tpu.memory_space<vmem>>, %arg11: memref<64x32xf32, #tpu.memory_space<vmem>>, %arg12: memref<1x32xf32, #tpu.memory_space<vmem>>, %arg13: memref<1x32xf32, #tpu.memory_space<vmem>>, %arg14: memref<1x32xf32, #tpu.memory_space<vmem>>, %arg15: memref<1x2x32xf32, #tpu.memory_space<vmem>>) attributes {dimension_semantics = [#tpu.dimension_semantics<parallel>], iteration_bounds = array<i64: 1>, scalar_prefetch = 0 : i64, scratch_operands = 0 : i64, tpu.core_type = #tpu.core_type<tc>, window_params = [{transform_indices = @transform_0, window_bounds = array<i64: 2, 8, 32>}, {pipeline_mode = #tpu.pipeline_mode<synchronous>, transform_indices = @transform_1, window_bounds = array<i64: 8, 32>}, {pipeline_mode = #tpu.pipeline_mode<synchronous>, transform_indices = @transform_2, window_bounds = array<i64: 32, 96>}, {pipeline_mode = #tpu.pipeline_mode<synchronous>, transform_indices = @transform_3, window_bounds = array<i64: 1, 96>}, {pipeline_mode = #tpu.pipeline_mode<synchronous>, transform_indices = @transform_4, window_bounds = array<i64: 32, 32>}, {pipeline_mode = #tpu.pipeline_mode<synchronous>, transform_indices = @transform_5, window_bounds = array<i64: 1, 32>}, {pipeline_mode = #tpu.pipeline_mode<synchronous>, transform_indices = @transform_6, window_bounds = array<i64: 1, 32>}, {pipeline_mode = #tpu.pipeline_mode<synchronous>, transform_indices = @transform_7, window_bounds = array<i64: 1, 32>}, {pipeline_mode = #tpu.pipeline_mode<synchronous>, transform_indices = @transform_8, window_bounds = array<i64: 32, 64>}, {pipeline_mode = #tpu.pipeline_mode<synchronous>, transform_indices = @transform_9, window_bounds = array<i64: 1, 64>}, {pipeline_mode = #tpu.pipeline_mode<synchronous>, transform_indices = @transform_10, window_bounds = array<i64: 64, 32>}, {pipeline_mode = #tpu.pipeline_mode<synchronous>, transform_indices = @transform_11, window_bounds = array<i64: 1, 32>}, {pipeline_mode = #tpu.pipeline_mode<synchronous>, transform_indices = @transform_12, window_bounds = array<i64: 1, 32>}, {pipeline_mode = #tpu.pipeline_mode<synchronous>, transform_indices = @transform_13, window_bounds = array<i64: 1, 32>}, {transform_indices = @transform_14, window_bounds = array<i64: 1, 2, 32>}]} {
    %c0 = arith.constant 0 : index
    %c0_0 = arith.constant 0 : index
    %c0_1 = arith.constant 0 : index
    %0 = vector.load %arg1[%c0, %c0_0, %c0_1] : memref<2x8x32xf32, #tpu.memory_space<vmem>>, vector<2x8x32xf32>
    %c0_2 = arith.constant 0 : index
    %c0_3 = arith.constant 0 : index
    %1 = vector.load %arg2[%c0_2, %c0_3] : memref<8x32xf32, #tpu.memory_space<vmem>>, vector<8x32xf32>
    %2 = vector.shape_cast %1 : vector<8x32xf32> to vector<1x8x32xf32>
    %3 = vector.broadcast %2 : vector<1x8x32xf32> to vector<2x8x32xf32>
    %4 = arith.addf %0, %3 : vector<2x8x32xf32>
    %5 = vector.shape_cast %4 : vector<2x8x32xf32> to vector<16x32xf32>
    %c0_i32 = arith.constant 0 : i32
    %c2_i32 = arith.constant 2 : i32
    %6 = arith.addi %c0_i32, %c2_i32 : i32
    %c1_i32 = arith.constant 1 : i32
    %7 = scf.for %arg16 = %c0_i32 to %6 step %c1_i32 iter_args(%arg17 = %5) -> (vector<16x32xf32>)  : i32 {
      %c0_7 = arith.constant 0 : index
      %c0_8 = arith.constant 0 : index
      %14 = vector.load %arg3[%c0_7, %c0_8] : memref<32x96xf32, #tpu.memory_space<vmem>>, vector<32x96xf32>
      %cst = arith.constant dense<0.000000e+00> : vector<16x96xf32>
      %15 = tpu.matmul %arg17, %14, %cst {dimension_numbers = #tpu.dot_dimension_numbers<[1], [0], [0], [1], [0, 0, 1, 1], [], []>} : vector<16x32xf32>, vector<32x96xf32>, vector<16x96xf32> -> vector<16x96xf32>
      %c0_9 = arith.constant 0 : index
      %c0_10 = arith.constant 0 : index
      %16 = vector.load %arg4[%c0_9, %c0_10] : memref<1x96xf32, #tpu.memory_space<vmem>>, vector<1x96xf32>
      %17 = vector.broadcast %16 : vector<1x96xf32> to vector<16x96xf32>
      %18 = arith.addf %15, %17 : vector<16x96xf32>
      %19 = vector.extract_strided_slice %18 {offsets = [0, 0], sizes = [16, 32], strides = [1, 1]} : vector<16x96xf32> to vector<16x32xf32>
      %20 = vector.shape_cast %19 : vector<16x32xf32> to vector<2x8x32xf32>
      %21 = vector.extract_strided_slice %18 {offsets = [0, 32], sizes = [16, 32], strides = [1, 1]} : vector<16x96xf32> to vector<16x32xf32>
      %22 = vector.shape_cast %21 : vector<16x32xf32> to vector<2x8x32xf32>
      %23 = vector.extract_strided_slice %18 {offsets = [0, 64], sizes = [16, 32], strides = [1, 1]} : vector<16x96xf32> to vector<16x32xf32>
      %24 = vector.shape_cast %23 : vector<16x32xf32> to vector<2x8x32xf32>
      %25 = vector.extract_strided_slice %20 {offsets = [0, 0, 0], sizes = [2, 8, 8], strides = [1, 1, 1]} : vector<2x8x32xf32> to vector<2x8x8xf32>
      %26 = vector.extract_strided_slice %22 {offsets = [0, 0, 0], sizes = [2, 8, 8], strides = [1, 1, 1]} : vector<2x8x32xf32> to vector<2x8x8xf32>
      %27 = vector.extract_strided_slice %24 {offsets = [0, 0, 0], sizes = [2, 8, 8], strides = [1, 1, 1]} : vector<2x8x32xf32> to vector<2x8x8xf32>
      "tpu.trace_start"() <{level = 10 : i32, message = "bqd,bkd->bqk"}> : () -> ()
      %cst_11 = arith.constant dense<0.000000e+00> : vector<2x8x8xf32>
      %28 = tpu.matmul %25, %26, %cst_11 {dimension_numbers = #tpu.dot_dimension_numbers<[2], [2], [1], [1], [0, 0, 0, 1, 1, 1], [0], [0]>} : vector<2x8x8xf32>, vector<2x8x8xf32>, vector<2x8x8xf32> -> vector<2x8x8xf32>
      "tpu.trace_stop"() : () -> ()
      %cst_12 = arith.constant dense<0xFF800000> : vector<2x8xf32>
      %29 = vector.multi_reduction <maximumf>, %28, %cst_12 [2] : vector<2x8x8xf32> to vector<2x8xf32>
      %30 = vector.shape_cast %29 : vector<2x8xf32> to vector<2x8x1xf32>
      %31 = vector.broadcast %30 : vector<2x8x1xf32> to vector<2x8x8xf32>
      %32 = arith.subf %28, %31 : vector<2x8x8xf32>
      %33 = math.exp %32 : vector<2x8x8xf32>
      %cst_13 = arith.constant dense<0.000000e+00> : vector<2x8xf32>
      %34 = vector.multi_reduction <add>, %33, %cst_13 [2] : vector<2x8x8xf32> to vector<2x8xf32>
      %35 = vector.shape_cast %34 : vector<2x8xf32> to vector<2x8x1xf32>
      %36 = tpu.reciprocal %35 {approx = true} : vector<2x8x1xf32> -> vector<2x8x1xf32>
      %37 = vector.broadcast %36 : vector<2x8x1xf32> to vector<2x8x8xf32>
      %38 = arith.mulf %33, %37 : vector<2x8x8xf32>
      "tpu.trace_start"() <{level = 10 : i32, message = "bqk,bkd->bqd"}> : () -> ()
      %cst_14 = arith.constant dense<0.000000e+00> : vector<2x8x8xf32>
      %39 = tpu.matmul %38, %27, %cst_14 {dimension_numbers = #tpu.dot_dimension_numbers<[2], [1], [1], [2], [0, 0, 0, 1, 1, 2], [0], [0]>} : vector<2x8x8xf32>, vector<2x8x8xf32>, vector<2x8x8xf32> -> vector<2x8x8xf32>
      "tpu.trace_stop"() : () -> ()
      %40 = vector.extract_strided_slice %20 {offsets = [0, 0, 8], sizes = [2, 8, 8], strides = [1, 1, 1]} : vector<2x8x32xf32> to vector<2x8x8xf32>
      %41 = vector.extract_strided_slice %22 {offsets = [0, 0, 8], sizes = [2, 8, 8], strides = [1, 1, 1]} : vector<2x8x32xf32> to vector<2x8x8xf32>
      %42 = vector.extract_strided_slice %24 {offsets = [0, 0, 8], sizes = [2, 8, 8], strides = [1, 1, 1]} : vector<2x8x32xf32> to vector<2x8x8xf32>
      "tpu.trace_start"() <{level = 10 : i32, message = "bqd,bkd->bqk"}> : () -> ()
      %cst_15 = arith.constant dense<0.000000e+00> : vector<2x8x8xf32>
      %43 = tpu.matmul %40, %41, %cst_15 {dimension_numbers = #tpu.dot_dimension_numbers<[2], [2], [1], [1], [0, 0, 0, 1, 1, 1], [0], [0]>} : vector<2x8x8xf32>, vector<2x8x8xf32>, vector<2x8x8xf32> -> vector<2x8x8xf32>
      "tpu.trace_stop"() : () -> ()
      %cst_16 = arith.constant dense<0xFF800000> : vector<2x8xf32>
      %44 = vector.multi_reduction <maximumf>, %43, %cst_16 [2] : vector<2x8x8xf32> to vector<2x8xf32>
      %45 = vector.shape_cast %44 : vector<2x8xf32> to vector<2x8x1xf32>
      %46 = vector.broadcast %45 : vector<2x8x1xf32> to vector<2x8x8xf32>
      %47 = arith.subf %43, %46 : vector<2x8x8xf32>
      %48 = math.exp %47 : vector<2x8x8xf32>
      %cst_17 = arith.constant dense<0.000000e+00> : vector<2x8xf32>
      %49 = vector.multi_reduction <add>, %48, %cst_17 [2] : vector<2x8x8xf32> to vector<2x8xf32>
      %50 = vector.shape_cast %49 : vector<2x8xf32> to vector<2x8x1xf32>
      %51 = tpu.reciprocal %50 {approx = true} : vector<2x8x1xf32> -> vector<2x8x1xf32>
      %52 = vector.broadcast %51 : vector<2x8x1xf32> to vector<2x8x8xf32>
      %53 = arith.mulf %48, %52 : vector<2x8x8xf32>
      "tpu.trace_start"() <{level = 10 : i32, message = "bqk,bkd->bqd"}> : () -> ()
      %cst_18 = arith.constant dense<0.000000e+00> : vector<2x8x8xf32>
      %54 = tpu.matmul %53, %42, %cst_18 {dimension_numbers = #tpu.dot_dimension_numbers<[2], [1], [1], [2], [0, 0, 0, 1, 1, 2], [0], [0]>} : vector<2x8x8xf32>, vector<2x8x8xf32>, vector<2x8x8xf32> -> vector<2x8x8xf32>
      "tpu.trace_stop"() : () -> ()
      %55 = vector.extract_strided_slice %20 {offsets = [0, 0, 16], sizes = [2, 8, 8], strides = [1, 1, 1]} : vector<2x8x32xf32> to vector<2x8x8xf32>
      %56 = vector.extract_strided_slice %22 {offsets = [0, 0, 16], sizes = [2, 8, 8], strides = [1, 1, 1]} : vector<2x8x32xf32> to vector<2x8x8xf32>
      %57 = vector.extract_strided_slice %24 {offsets = [0, 0, 16], sizes = [2, 8, 8], strides = [1, 1, 1]} : vector<2x8x32xf32> to vector<2x8x8xf32>
      "tpu.trace_start"() <{level = 10 : i32, message = "bqd,bkd->bqk"}> : () -> ()
      %cst_19 = arith.constant dense<0.000000e+00> : vector<2x8x8xf32>
      %58 = tpu.matmul %55, %56, %cst_19 {dimension_numbers = #tpu.dot_dimension_numbers<[2], [2], [1], [1], [0, 0, 0, 1, 1, 1], [0], [0]>} : vector<2x8x8xf32>, vector<2x8x8xf32>, vector<2x8x8xf32> -> vector<2x8x8xf32>
      "tpu.trace_stop"() : () -> ()
      %cst_20 = arith.constant dense<0xFF800000> : vector<2x8xf32>
      %59 = vector.multi_reduction <maximumf>, %58, %cst_20 [2] : vector<2x8x8xf32> to vector<2x8xf32>
      %60 = vector.shape_cast %59 : vector<2x8xf32> to vector<2x8x1xf32>
      %61 = vector.broadcast %60 : vector<2x8x1xf32> to vector<2x8x8xf32>
      %62 = arith.subf %58, %61 : vector<2x8x8xf32>
      %63 = math.exp %62 : vector<2x8x8xf32>
      %cst_21 = arith.constant dense<0.000000e+00> : vector<2x8xf32>
      %64 = vector.multi_reduction <add>, %63, %cst_21 [2] : vector<2x8x8xf32> to vector<2x8xf32>
      %65 = vector.shape_cast %64 : vector<2x8xf32> to vector<2x8x1xf32>
      %66 = tpu.reciprocal %65 {approx = true} : vector<2x8x1xf32> -> vector<2x8x1xf32>
      %67 = vector.broadcast %66 : vector<2x8x1xf32> to vector<2x8x8xf32>
      %68 = arith.mulf %63, %67 : vector<2x8x8xf32>
      "tpu.trace_start"() <{level = 10 : i32, message = "bqk,bkd->bqd"}> : () -> ()
      %cst_22 = arith.constant dense<0.000000e+00> : vector<2x8x8xf32>
      %69 = tpu.matmul %68, %57, %cst_22 {dimension_numbers = #tpu.dot_dimension_numbers<[2], [1], [1], [2], [0, 0, 0, 1, 1, 2], [0], [0]>} : vector<2x8x8xf32>, vector<2x8x8xf32>, vector<2x8x8xf32> -> vector<2x8x8xf32>
      "tpu.trace_stop"() : () -> ()
      %70 = vector.extract_strided_slice %20 {offsets = [0, 0, 24], sizes = [2, 8, 8], strides = [1, 1, 1]} : vector<2x8x32xf32> to vector<2x8x8xf32>
      %71 = vector.extract_strided_slice %22 {offsets = [0, 0, 24], sizes = [2, 8, 8], strides = [1, 1, 1]} : vector<2x8x32xf32> to vector<2x8x8xf32>
      %72 = vector.extract_strided_slice %24 {offsets = [0, 0, 24], sizes = [2, 8, 8], strides = [1, 1, 1]} : vector<2x8x32xf32> to vector<2x8x8xf32>
      "tpu.trace_start"() <{level = 10 : i32, message = "bqd,bkd->bqk"}> : () -> ()
      %cst_23 = arith.constant dense<0.000000e+00> : vector<2x8x8xf32>
      %73 = tpu.matmul %70, %71, %cst_23 {dimension_numbers = #tpu.dot_dimension_numbers<[2], [2], [1], [1], [0, 0, 0, 1, 1, 1], [0], [0]>} : vector<2x8x8xf32>, vector<2x8x8xf32>, vector<2x8x8xf32> -> vector<2x8x8xf32>
      "tpu.trace_stop"() : () -> ()
      %cst_24 = arith.constant dense<0xFF800000> : vector<2x8xf32>
      %74 = vector.multi_reduction <maximumf>, %73, %cst_24 [2] : vector<2x8x8xf32> to vector<2x8xf32>
      %75 = vector.shape_cast %74 : vector<2x8xf32> to vector<2x8x1xf32>
      %76 = vector.broadcast %75 : vector<2x8x1xf32> to vector<2x8x8xf32>
      %77 = arith.subf %73, %76 : vector<2x8x8xf32>
      %78 = math.exp %77 : vector<2x8x8xf32>
      %cst_25 = arith.constant dense<0.000000e+00> : vector<2x8xf32>
      %79 = vector.multi_reduction <add>, %78, %cst_25 [2] : vector<2x8x8xf32> to vector<2x8xf32>
      %80 = vector.shape_cast %79 : vector<2x8xf32> to vector<2x8x1xf32>
      %81 = tpu.reciprocal %80 {approx = true} : vector<2x8x1xf32> -> vector<2x8x1xf32>
      %82 = vector.broadcast %81 : vector<2x8x1xf32> to vector<2x8x8xf32>
      %83 = arith.mulf %78, %82 : vector<2x8x8xf32>
      "tpu.trace_start"() <{level = 10 : i32, message = "bqk,bkd->bqd"}> : () -> ()
      %cst_26 = arith.constant dense<0.000000e+00> : vector<2x8x8xf32>
      %84 = tpu.matmul %83, %72, %cst_26 {dimension_numbers = #tpu.dot_dimension_numbers<[2], [1], [1], [2], [0, 0, 0, 1, 1, 2], [0], [0]>} : vector<2x8x8xf32>, vector<2x8x8xf32>, vector<2x8x8xf32> -> vector<2x8x8xf32>
      "tpu.trace_stop"() : () -> ()
      %85 = tpu.concatenate %39, %54, %69, %84 in 2 : vector<2x8x8xf32>, vector<2x8x8xf32>, vector<2x8x8xf32>, vector<2x8x8xf32> -> vector<2x8x32xf32>
      %86 = vector.shape_cast %85 : vector<2x8x32xf32> to vector<16x32xf32>
      %c0_27 = arith.constant 0 : index
      %c0_28 = arith.constant 0 : index
      %87 = vector.load %arg5[%c0_27, %c0_28] : memref<32x32xf32, #tpu.memory_space<vmem>>, vector<32x32xf32>
      %cst_29 = arith.constant dense<0.000000e+00> : vector<16x32xf32>
      %88 = tpu.matmul %86, %87, %cst_29 {dimension_numbers = #tpu.dot_dimension_numbers<[1], [0], [0], [1], [0, 0, 1, 1], [], []>} : vector<16x32xf32>, vector<32x32xf32>, vector<16x32xf32> -> vector<16x32xf32>
      %c0_30 = arith.constant 0 : index
      %c0_31 = arith.constant 0 : index
      %89 = vector.load %arg6[%c0_30, %c0_31] : memref<1x32xf32, #tpu.memory_space<vmem>>, vector<1x32xf32>
      %90 = vector.broadcast %89 : vector<1x32xf32> to vector<16x32xf32>
      %91 = arith.addf %88, %90 : vector<16x32xf32>
      %92 = arith.addf %arg17, %91 : vector<16x32xf32>
      %cst_32 = arith.constant dense<0.000000e+00> : vector<16xf32>
      %93 = vector.multi_reduction <add>, %92, %cst_32 [1] : vector<16x32xf32> to vector<16xf32>
      %94 = vector.shape_cast %93 : vector<16xf32> to vector<16x1xf32>
      %cst_33 = arith.constant 3.200000e+01 : f32
      %95 = vector.broadcast %cst_33 : f32 to vector<16x1xf32>
      %96 = arith.divf %94, %95 : vector<16x1xf32>
      %97 = vector.broadcast %96 : vector<16x1xf32> to vector<16x32xf32>
      %98 = arith.subf %92, %97 : vector<16x32xf32>
      %99 = arith.mulf %98, %98 : vector<16x32xf32>
      %cst_34 = arith.constant dense<0.000000e+00> : vector<16xf32>
      %100 = vector.multi_reduction <add>, %99, %cst_34 [1] : vector<16x32xf32> to vector<16xf32>
      %101 = vector.shape_cast %100 : vector<16xf32> to vector<16x1xf32>
      %cst_35 = arith.constant 3.200000e+01 : f32
      %102 = vector.broadcast %cst_35 : f32 to vector<16x1xf32>
      %103 = arith.divf %101, %102 : vector<16x1xf32>
      %cst_36 = arith.constant 9.99999974E-6 : f32
      %104 = vector.broadcast %cst_36 : f32 to vector<16x1xf32>
      %105 = arith.addf %103, %104 : vector<16x1xf32>
      %106 = math.rsqrt %105 : vector<16x1xf32>
      %107 = vector.broadcast %106 : vector<16x1xf32> to vector<16x32xf32>
      %108 = arith.mulf %98, %107 : vector<16x32xf32>
      %c0_37 = arith.constant 0 : index
      %c0_38 = arith.constant 0 : index
      %109 = vector.load %arg7[%c0_37, %c0_38] : memref<1x32xf32, #tpu.memory_space<vmem>>, vector<1x32xf32>
      %110 = vector.broadcast %109 : vector<1x32xf32> to vector<16x32xf32>
      %111 = arith.mulf %108, %110 : vector<16x32xf32>
      %c0_39 = arith.constant 0 : index
      %c0_40 = arith.constant 0 : index
      %112 = vector.load %arg8[%c0_39, %c0_40] : memref<1x32xf32, #tpu.memory_space<vmem>>, vector<1x32xf32>
      %113 = vector.broadcast %112 : vector<1x32xf32> to vector<16x32xf32>
      %114 = arith.addf %111, %113 : vector<16x32xf32>
      %c0_41 = arith.constant 0 : index
      %c0_42 = arith.constant 0 : index
      %115 = vector.load %arg9[%c0_41, %c0_42] : memref<32x64xf32, #tpu.memory_space<vmem>>, vector<32x64xf32>
      %cst_43 = arith.constant dense<0.000000e+00> : vector<16x64xf32>
      %116 = tpu.matmul %114, %115, %cst_43 {dimension_numbers = #tpu.dot_dimension_numbers<[1], [0], [0], [1], [0, 0, 1, 1], [], []>} : vector<16x32xf32>, vector<32x64xf32>, vector<16x64xf32> -> vector<16x64xf32>
      %c0_44 = arith.constant 0 : index
      %c0_45 = arith.constant 0 : index
      %117 = vector.load %arg10[%c0_44, %c0_45] : memref<1x64xf32, #tpu.memory_space<vmem>>, vector<1x64xf32>
      %118 = vector.broadcast %117 : vector<1x64xf32> to vector<16x64xf32>
      %119 = arith.addf %116, %118 : vector<16x64xf32>
      %cst_46 = arith.constant 0.000000e+00 : f32
      %120 = vector.broadcast %cst_46 : f32 to vector<16x64xf32>
      %121 = arith.maximumf %119, %120 : vector<16x64xf32>
      %c0_47 = arith.constant 0 : index
      %c0_48 = arith.constant 0 : index
      %122 = vector.load %arg11[%c0_47, %c0_48] : memref<64x32xf32, #tpu.memory_space<vmem>>, vector<64x32xf32>
      %cst_49 = arith.constant dense<0.000000e+00> : vector<16x32xf32>
      %123 = tpu.matmul %121, %122, %cst_49 {dimension_numbers = #tpu.dot_dimension_numbers<[1], [0], [0], [1], [0, 0, 1, 1], [], []>} : vector<16x64xf32>, vector<64x32xf32>, vector<16x32xf32> -> vector<16x32xf32>
      %c0_50 = arith.constant 0 : index
      %c0_51 = arith.constant 0 : index
      %124 = vector.load %arg12[%c0_50, %c0_51] : memref<1x32xf32, #tpu.memory_space<vmem>>, vector<1x32xf32>
      %125 = vector.broadcast %124 : vector<1x32xf32> to vector<16x32xf32>
      %126 = arith.addf %123, %125 : vector<16x32xf32>
      %127 = arith.addf %114, %126 : vector<16x32xf32>
      %cst_52 = arith.constant dense<0.000000e+00> : vector<16xf32>
      %128 = vector.multi_reduction <add>, %127, %cst_52 [1] : vector<16x32xf32> to vector<16xf32>
      %129 = vector.shape_cast %128 : vector<16xf32> to vector<16x1xf32>
      %cst_53 = arith.constant 3.200000e+01 : f32
      %130 = vector.broadcast %cst_53 : f32 to vector<16x1xf32>
      %131 = arith.divf %129, %130 : vector<16x1xf32>
      %132 = vector.broadcast %131 : vector<16x1xf32> to vector<16x32xf32>
      %133 = arith.subf %127, %132 : vector<16x32xf32>
      %134 = arith.mulf %133, %133 : vector<16x32xf32>
      %cst_54 = arith.constant dense<0.000000e+00> : vector<16xf32>
      %135 = vector.multi_reduction <add>, %134, %cst_54 [1] : vector<16x32xf32> to vector<16xf32>
      %136 = vector.shape_cast %135 : vector<16xf32> to vector<16x1xf32>
      %cst_55 = arith.constant 3.200000e+01 : f32
      %137 = vector.broadcast %cst_55 : f32 to vector<16x1xf32>
      %138 = arith.divf %136, %137 : vector<16x1xf32>
      %cst_56 = arith.constant 9.99999974E-6 : f32
      %139 = vector.broadcast %cst_56 : f32 to vector<16x1xf32>
      %140 = arith.addf %138, %139 : vector<16x1xf32>
      %141 = math.rsqrt %140 : vector<16x1xf32>
      %142 = vector.broadcast %141 : vector<16x1xf32> to vector<16x32xf32>
      %143 = arith.mulf %133, %142 : vector<16x32xf32>
      %c0_57 = arith.constant 0 : index
      %c0_58 = arith.constant 0 : index
      %144 = vector.load %arg13[%c0_57, %c0_58] : memref<1x32xf32, #tpu.memory_space<vmem>>, vector<1x32xf32>
      %145 = vector.broadcast %144 : vector<1x32xf32> to vector<16x32xf32>
      %146 = arith.mulf %143, %145 : vector<16x32xf32>
      %c0_59 = arith.constant 0 : index
      %c0_60 = arith.constant 0 : index
      %147 = vector.load %arg14[%c0_59, %c0_60] : memref<1x32xf32, #tpu.memory_space<vmem>>, vector<1x32xf32>
      %148 = vector.broadcast %147 : vector<1x32xf32> to vector<16x32xf32>
      %149 = arith.addf %146, %148 : vector<16x32xf32>
      scf.yield %149 : vector<16x32xf32>
    }
    %8 = vector.shape_cast %7 : vector<16x32xf32> to vector<2x8x32xf32>
    %9 = vector.extract_strided_slice %8 {offsets = [0, 0, 0], sizes = [2, 1, 32], strides = [1, 1, 1]} : vector<2x8x32xf32> to vector<2x1x32xf32>
    %10 = vector.shape_cast %9 : vector<2x1x32xf32> to vector<2x32xf32>
    %c0_4 = arith.constant 0 : index
    %c0_5 = arith.constant 0 : index
    %c0_6 = arith.constant 0 : index
    %11 = vector.load %arg15[%c0_4, %c0_5, %c0_6] : memref<1x2x32xf32, #tpu.memory_space<vmem>>, vector<1x2x32xf32>
    %12 = vector.shape_cast %11 : vector<1x2x32xf32> to vector<2x32xf32>
    %13 = vector.shape_cast %10 : vector<2x32xf32> to vector<1x2x32xf32>
    tpu.vector_store %arg15[%c0_4, %c0_5, %c0_6], %13 {strides = array<i32>} : memref<1x2x32xf32, #tpu.memory_space<vmem>>, vector<1x2x32xf32>,
    return
  }
  func.func @transform_0(%arg0: i32) -> (i32, i32, i32) {
    %c0_i32 = arith.constant 0 : i32
    %c0_i32_0 = arith.constant 0 : i32
    %c0_i32_1 = arith.constant 0 : i32
    return %arg0, %c0_i32, %c0_i32_0 : i32, i32, i32
  }
  func.func @transform_1(%arg0: i32) -> (i32, i32) {
    %c0_i32 = arith.constant 0 : i32
    %c0_i32_0 = arith.constant 0 : i32
    %c0_i32_1 = arith.constant 0 : i32
    return %c0_i32, %c0_i32_0 : i32, i32
  }
  func.func @transform_2(%arg0: i32) -> (i32, i32) {
    %c0_i32 = arith.constant 0 : i32
    %c0_i32_0 = arith.constant 0 : i32
    %c0_i32_1 = arith.constant 0 : i32
    return %c0_i32, %c0_i32_0 : i32, i32
  }
  func.func @transform_3(%arg0: i32) -> (i32, i32) {
    %c0_i32 = arith.constant 0 : i32
    %c0_i32_0 = arith.constant 0 : i32
    %c0_i32_1 = arith.constant 0 : i32
    return %c0_i32, %c0_i32_0 : i32, i32
  }
  func.func @transform_4(%arg0: i32) -> (i32, i32) {
    %c0_i32 = arith.constant 0 : i32
    %c0_i32_0 = arith.constant 0 : i32
    %c0_i32_1 = arith.constant 0 : i32
    return %c0_i32, %c0_i32_0 : i32, i32
  }
  func.func @transform_5(%arg0: i32) -> (i32, i32) {
    %c0_i32 = arith.constant 0 : i32
    %c0_i32_0 = arith.constant 0 : i32
    %c0_i32_1 = arith.constant 0 : i32
    return %c0_i32, %c0_i32_0 : i32, i32
  }
  func.func @transform_6(%arg0: i32) -> (i32, i32) {
    %c0_i32 = arith.constant 0 : i32
    %c0_i32_0 = arith.constant 0 : i32
    %c0_i32_1 = arith.constant 0 : i32
    return %c0_i32, %c0_i32_0 : i32, i32
  }
  func.func @transform_7(%arg0: i32) -> (i32, i32) {
    %c0_i32 = arith.constant 0 : i32
    %c0_i32_0 = arith.constant 0 : i32
    %c0_i32_1 = arith.constant 0 : i32
    return %c0_i32, %c0_i32_0 : i32, i32
  }
  func.func @transform_8(%arg0: i32) -> (i32, i32) {
    %c0_i32 = arith.constant 0 : i32
    %c0_i32_0 = arith.constant 0 : i32
    %c0_i32_1 = arith.constant 0 : i32
    return %c0_i32, %c0_i32_0 : i32, i32
  }
  func.func @transform_9(%arg0: i32) -> (i32, i32) {
    %c0_i32 = arith.constant 0 : i32
    %c0_i32_0 = arith.constant 0 : i32
    %c0_i32_1 = arith.constant 0 : i32
    return %c0_i32, %c0_i32_0 : i32, i32
  }
  func.func @transform_10(%arg0: i32) -> (i32, i32) {
    %c0_i32 = arith.constant 0 : i32
    %c0_i32_0 = arith.constant 0 : i32
    %c0_i32_1 = arith.constant 0 : i32
    return %c0_i32, %c0_i32_0 : i32, i32
  }
  func.func @transform_11(%arg0: i32) -> (i32, i32) {
    %c0_i32 = arith.constant 0 : i32
    %c0_i32_0 = arith.constant 0 : i32
    %c0_i32_1 = arith.constant 0 : i32
    return %c0_i32, %c0_i32_0 : i32, i32
  }
  func.func @transform_12(%arg0: i32) -> (i32, i32) {
    %c0_i32 = arith.constant 0 : i32
    %c0_i32_0 = arith.constant 0 : i32
    %c0_i32_1 = arith.constant 0 : i32
    return %c0_i32, %c0_i32_0 : i32, i32
  }
  func.func @transform_13(%arg0: i32) -> (i32, i32) {
    %c0_i32 = arith.constant 0 : i32
    %c0_i32_0 = arith.constant 0 : i32
    %c0_i32_1 = arith.constant 0 : i32
    return %c0_i32, %c0_i32_0 : i32, i32
  }
  func.func @transform_14(%arg0: i32) -> (i32, i32, i32) {
    %c0_i32 = arith.constant 0 : i32
    %c0_i32_0 = arith.constant 0 : i32
    %c0_i32_1 = arith.constant 0 : i32
    return %arg0, %c0_i32, %c0_i32_0 : i32, i32, i32
  }
}

</mosaic_0001>

<llo_original>
// kernel: albert_encoder_forward.1
$region0: #{albert_encoder_forward.1}
  #allocation0 [shape = 'u32[]', space=smem, size = 0x4, offset = 0x4, fixed_abs, tag = 'smem constant byte address 0x4 - core index']
  #allocation1 [shape = 'u32[144,128]{1,0:T(1,128)}', space=vmem, size = 0x12000, scoped, tag = 'internal scratch']
  %s0 = inlined_call_operand.vmem [shape: f32[2,8,32], index: 0, kind: input, shape index: {}]
  %s1 = inlined_call_operand.vmem [shape: f32[8,32], index: 1, kind: input, shape index: {}]
  %s2 = inlined_call_operand.vmem [shape: f32[32,96], index: 2, kind: input, shape index: {}]
  %s3 = inlined_call_operand.vmem [shape: f32[1,96], index: 3, kind: input, shape index: {}]
  %s4 = inlined_call_operand.vmem [shape: f32[32,32], index: 4, kind: input, shape index: {}]
  %s5 = inlined_call_operand.vmem [shape: f32[1,32], index: 5, kind: input, shape index: {}]
  %s6 = inlined_call_operand.vmem [shape: f32[1,32], index: 6, kind: input, shape index: {}]
  %s7 = inlined_call_operand.vmem [shape: f32[1,32], index: 7, kind: input, shape index: {}]
  %s8 = inlined_call_operand.vmem [shape: f32[32,64], index: 8, kind: input, shape index: {}]
  %s9 = inlined_call_operand.vmem [shape: f32[1,64], index: 9, kind: input, shape index: {}]
  %s10 = inlined_call_operand.vmem [shape: f32[64,32], index: 10, kind: input, shape index: {}]
  %s11 = inlined_call_operand.vmem [shape: f32[1,32], index: 11, kind: input, shape index: {}]
  %s12 = inlined_call_operand.vmem [shape: f32[1,32], index: 12, kind: input, shape index: {}]
  %s13 = inlined_call_operand.vmem [shape: f32[1,32], index: 13, kind: input, shape index: {}]
  %s14 = inlined_call_operand.vmem [shape: f32[1,2,32], index: 14, kind: output, shape index: {}]
  %s15 = sld [smem:[#allocation0]]
  $region73: #{albert_encoder_forward.1} parent=0
    _
  %s17 = ssub.s32 1, %s15
  %s18 = scalar_select 0, %s17, %s15
  // Predicated region
  $region2: #{albert_encoder_forward.1} parent=0 // pred_check
    _
  $region3: #{albert_encoder_forward.1} parent=0 // pred_check_branch
    %20 = sbr.rel (0) target = $region5
  $region4: #{albert_encoder_forward.1} parent=0 // pred_region
    _
  $region5: #{albert_encoder_forward.1} parent=0 // pred_fallthru
    _
  // Predicated region
  $region6: #{albert_encoder_forward.1} parent=0 // pred_check
    _
  $region7: #{albert_encoder_forward.1} parent=0 // pred_check_branch
    %22 = sbr.rel (0) target = $region9
  $region8: #{albert_encoder_forward.1} parent=0 // pred_region
    _
  $region9: #{albert_encoder_forward.1} parent=0 // pred_fallthru
    _
  // Predicated region
  $region10: #{albert_encoder_forward.1} parent=0 // pred_check
    _
  $region11: #{albert_encoder_forward.1} parent=0 // pred_check_branch
    %24 = sbr.rel (0) target = $region13
  $region12: #{albert_encoder_forward.1} parent=0 // pred_region
    _
  $region13: #{albert_encoder_forward.1} parent=0 // pred_fallthru
    _
  // Predicated region
  $region14: #{albert_encoder_forward.1} parent=0 // pred_check
    _
  $region15: #{albert_encoder_forward.1} parent=0 // pred_check_branch
    %26 = sbr.rel (0) target = $region17
  $region16: #{albert_encoder_forward.1} parent=0 // pred_region
    _
  $region17: #{albert_encoder_forward.1} parent=0 // pred_fallthru
    _
  // Predicated region
  $region18: #{albert_encoder_forward.1} parent=0 // pred_check
    _
  $region19: #{albert_encoder_forward.1} parent=0 // pred_check_branch
    %28 = sbr.rel (0) target = $region21
  $region20: #{albert_encoder_forward.1} parent=0 // pred_region
    _
  $region21: #{albert_encoder_forward.1} parent=0 // pred_fallthru
    _
  // Predicated region
  $region22: #{albert_encoder_forward.1} parent=0 // pred_check
    _
  $region23: #{albert_encoder_forward.1} parent=0 // pred_check_branch
    %30 = sbr.rel (0) target = $region25
  $region24: #{albert_encoder_forward.1} parent=0 // pred_region
    _
  $region25: #{albert_encoder_forward.1} parent=0 // pred_fallthru
    _
  // Predicated region
  $region26: #{albert_encoder_forward.1} parent=0 // pred_check
    _
  $region27: #{albert_encoder_forward.1} parent=0 // pred_check_branch
    %32 = sbr.rel (0) target = $region29
  $region28: #{albert_encoder_forward.1} parent=0 // pred_region
    _
  $region29: #{albert_encoder_forward.1} parent=0 // pred_fallthru
    _
  // Predicated region
  $region30: #{albert_encoder_forward.1} parent=0 // pred_check
    _
  $region31: #{albert_encoder_forward.1} parent=0 // pred_check_branch
    %34 = sbr.rel (0) target = $region33
  $region32: #{albert_encoder_forward.1} parent=0 // pred_region
    _
  $region33: #{albert_encoder_forward.1} parent=0 // pred_fallthru
    _
  // Predicated region
  $region34: #{albert_encoder_forward.1} parent=0 // pred_check
    _
  $region35: #{albert_encoder_forward.1} parent=0 // pred_check_branch
    %36 = sbr.rel (0) target = $region37
  $region36: #{albert_encoder_forward.1} parent=0 // pred_region
    _
  $region37: #{albert_encoder_forward.1} parent=0 // pred_fallthru
    _
  // Predicated region
  $region38: #{albert_encoder_forward.1} parent=0 // pred_check
    _
  $region39: #{albert_encoder_forward.1} parent=0 // pred_check_branch
    %38 = sbr.rel (0) target = $region41
  $region40: #{albert_encoder_forward.1} parent=0 // pred_region
    _
  $region41: #{albert_encoder_forward.1} parent=0 // pred_fallthru
    _
  // Predicated region
  $region42: #{albert_encoder_forward.1} parent=0 // pred_check
    _
  $region43: #{albert_encoder_forward.1} parent=0 // pred_check_branch
    %40 = sbr.rel (0) target = $region45
  $region44: #{albert_encoder_forward.1} parent=0 // pred_region
    _
  $region45: #{albert_encoder_forward.1} parent=0 // pred_fallthru
    _
  // Predicated region
  $region46: #{albert_encoder_forward.1} parent=0 // pred_check
    _
  $region47: #{albert_encoder_forward.1} parent=0 // pred_check_branch
    %42 = sbr.rel (0) target = $region49
  $region48: #{albert_encoder_forward.1} parent=0 // pred_region
    _
  $region49: #{albert_encoder_forward.1} parent=0 // pred_fallthru
    _
  // Predicated region
  $region50: #{albert_encoder_forward.1} parent=0 // pred_check
    _
  $region51: #{albert_encoder_forward.1} parent=0 // pred_check_branch
    %44 = sbr.rel (0) target = $region53
  $region52: #{albert_encoder_forward.1} parent=0 // pred_region
    _
  $region53: #{albert_encoder_forward.1} parent=0 // pred_fallthru
    _
  // Predicated region
  $region54: #{albert_encoder_forward.1} parent=0 // pred_check
    _
  $region55: #{albert_encoder_forward.1} parent=0 // pred_check_branch
    %46 = sbr.rel (0) target = $region57
  $region56: #{albert_encoder_forward.1} parent=0 // pred_region
    _
  $region57: #{albert_encoder_forward.1} parent=0 // pred_fallthru
    _
  %v47 = vld [vmem:[%s0] sm:$0xff]
  %v48 = vld [vmem:[%s0 + $0x8] sm:$0xff]
  %v49 = vld [vmem:[%s1] sm:$0xff]
  %v50 = vadd.f32 %v47, %v49
  %v51 = vadd.f32 %v48, %v49
  loop: start=0, step=1, limit=2
  $region58: #{albert_encoder_forward.1} parent=0 // loop_pre_header
    _
  $region59: #{albert_encoder_forward.1} parent=0 // loop_header
    %s53 = sphi 0, %s57
    %p54 = scmp.ge.s32.totalorder %s53, 2
    %v58 = vphi %v50, %v1878
    %v59 = vphi %v51, %v1879
  $region60: #{albert_encoder_forward.1} parent=0 // loop_header_branch
    %56 = sbr.rel (%p54) target = $region64
  $region61: #{albert_encoder_forward.1} parent=0 // loop_body
    %v60 = vld [vmem:[%s2] sm:$0xff]
    %v61 = vld [vmem:[%s2 + $0x8] sm:$0xff]
    %v62 = vld [vmem:[%s2 + $0x10] sm:$0xff]
    %v63 = vld [vmem:[%s2 + $0x18] sm:$0xff]
    %v64 = vld [vmem:[%s3] sm:$0x1]
    %v66 = vlaneseq
    %v67 = vshrl.u32 %v66, 7
    %v68 = vsub.s32 0, %v67
    %v69 = vrot.slane %v64, %v68
    %vm71 = vcmask 261120
    %v73 = vsel %vm71, %v58, 0
    %v76 = vsel %vm71, %v59, 0
    %78 = vmatprep.subr.mxu0 0.0
    %79 = vmatpush1.msra.mxu0 0.0
    %80 = vmatprep.subr.mxu0 0.0
    %81 = vmatpush1.msra.mxu0 0.0
    %82 = vmatprep.subr.mxu0 0.0
    %83 = vmatpush1.msra.mxu0 0.0
    %84 = vmatprep.subr.mxu0 0.0
    %85 = vmatpush1.msra.mxu0 0.0
    %86 = vmatprep.subr.mxu0 0.0
    %87 = vmatpush1.msra.mxu0 0.0
    %88 = vmatprep.subr.mxu0 0.0
    %89 = vmatpush1.msra.mxu0 0.0
    %90 = vmatprep.subr.mxu0 0.0
    %91 = vmatpush1.msra.mxu0 0.0
    %92 = vmatprep.subr.mxu0 0.0
    %93 = vmatpush1.msra.mxu0 0.0
    %94 = vmatprep.subr.mxu0 0.0
    %95 = vmatpush1.msra.mxu0 0.0
    %96 = vmatprep.subr.mxu0 0.0
    %97 = vmatpush1.msra.mxu0 0.0
    %98 = vmatprep.subr.mxu0 0.0
    %99 = vmatpush1.msra.mxu0 0.0
    %100 = vmatprep.subr.mxu0 0.0
    %101 = vmatpush1.msra.mxu0 0.0
    %102 = vmatprep.subr.mxu0 0.0
    %103 = vmatpush1.msra.mxu0 %v63
    %104 = vmatprep.subr.mxu0 0.0
    %105 = vmatpush1.msra.mxu0 %v62
    %106 = vmatprep.subr.mxu0 0.0
    %107 = vmatpush1.msra.mxu0 %v61
    %108 = vmatprep.subr.mxu0 0.0
    %109 = vmatpush1.msra.mxu0 %v60
    %110 = vmatprep.subr.mxu0 0.0
    %111 = vmatpush2.msra.mxu0 0.0
    %112 = vmatprep.subr.mxu0 0.0
    %113 = vmatpush2.msra.mxu0 0.0
    %114 = vmatprep.subr.mxu0 0.0
    %115 = vmatpush2.msra.mxu0 0.0
    %116 = vmatprep.subr.mxu0 0.0
    %117 = vmatpush2.msra.mxu0 0.0
    %118 = vmatprep.subr.mxu0 0.0
    %119 = vmatpush2.msra.mxu0 0.0
    %120 = vmatprep.subr.mxu0 0.0
    %121 = vmatpush2.msra.mxu0 0.0
    %122 = vmatprep.subr.mxu0 0.0
    %123 = vmatpush2.msra.mxu0 0.0
    %124 = vmatprep.subr.mxu0 0.0
    %125 = vmatpush2.msra.mxu0 0.0
    %126 = vmatprep.subr.mxu0 0.0
    %127 = vmatpush2.msra.mxu0 0.0
    %128 = vmatprep.subr.mxu0 0.0
    %129 = vmatpush2.msra.mxu0 0.0
    %130 = vmatprep.subr.mxu0 0.0
    %131 = vmatpush2.msra.mxu0 0.0
    %132 = vmatprep.subr.mxu0 0.0
    %133 = vmatpush2.msra.mxu0 0.0
    %134 = vmatprep.subr.mxu0 0.0
    %135 = vmatpush2.msra.mxu0 0.0
    %136 = vmatprep.subr.mxu0 0.0
    %137 = vmatpush2.msra.mxu0 0.0
    %138 = vmatprep.subr.mxu0 0.0
    %139 = vmatpush2.msra.mxu0 0.0
    %140 = vmatprep.subr.mxu0 0.0
    %141 = vmatpush2.msra.mxu0 0.0
    %142 = vmatprep.mubr.f32.mxu0 0.0
    %143 = vmatmul.mubr.f32.gmra.mxu0 %v73
    %v144 = vpop.f32.mrf.mxu0
    %v145 = vadd.f32 %v69, %v144
    %v146 = vpop.f32.mrf.mxu0
    %147 = vmatprep.mubr.f32.mxu0 0.0
    %148 = vmatmul.mubr.f32.gmra.mxu0 %v76
    %v149 = vpop.f32.mrf.mxu0
    %v150 = vadd.f32 %v69, %v149
    %v151 = vpop.f32.mrf.mxu0
    %152 = vdwg.mxu0
    %154 = vrot.lane.b32.xlu0 %v145, 96
    %v155 = vpop.permute.xlu0 %154
    %vm156 = vcmask 64512
    %v157 = vsel %vm156, %v145, 0
    %v159 = vsel %vm156, %v155, 0
    %161 = vmatprep.subr.mxu0 0.0
    %162 = vmatpush1.xpose.msra.mxu0 0.0
    %163 = vmatprep.subr.mxu0 0.0
    %164 = vmatpush1.xpose.msra.mxu0 0.0
    %165 = vmatprep.subr.mxu0 0.0
    %166 = vmatpush1.xpose.msra.mxu0 0.0
    %167 = vmatprep.subr.mxu0 0.0
    %168 = vmatpush1.xpose.msra.mxu0 0.0
    %169 = vmatprep.subr.mxu0 0.0
    %170 = vmatpush1.xpose.msra.mxu0 0.0
    %171 = vmatprep.subr.mxu0 0.0
    %172 = vmatpush1.xpose.msra.mxu0 0.0
    %173 = vmatprep.subr.mxu0 0.0
    %174 = vmatpush1.xpose.msra.mxu0 0.0
    %175 = vmatprep.subr.mxu0 0.0
    %176 = vmatpush1.xpose.msra.mxu0 0.0
    %177 = vmatprep.subr.mxu0 0.0
    %178 = vmatpush1.xpose.msra.mxu0 0.0
    %179 = vmatprep.subr.mxu0 0.0
    %180 = vmatpush1.xpose.msra.mxu0 0.0
    %181 = vmatprep.subr.mxu0 0.0
    %182 = vmatpush1.xpose.msra.mxu0 0.0
    %183 = vmatprep.subr.mxu0 0.0
    %184 = vmatpush1.xpose.msra.mxu0 0.0
    %185 = vmatprep.subr.mxu0 0.0
    %186 = vmatpush1.xpose.msra.mxu0 0.0
    %187 = vmatprep.subr.mxu0 0.0
    %188 = vmatpush1.xpose.msra.mxu0 0.0
    %189 = vmatprep.subr.mxu0 0.0
    %190 = vmatpush1.xpose.msra.mxu0 0.0
    %191 = vmatprep.subr.mxu0 0.0
    %192 = vmatpush1.xpose.msra.mxu0 %v159
    %193 = vmatprep.subr.mxu0 0.0
    %194 = vmatpush2.xpose.msra.mxu0 0.0
    %195 = vmatprep.subr.mxu0 0.0
    %196 = vmatpush2.xpose.msra.mxu0 0.0
    %197 = vmatprep.subr.mxu0 0.0
    %198 = vmatpush2.xpose.msra.mxu0 0.0
    %199 = vmatprep.subr.mxu0 0.0
    %200 = vmatpush2.xpose.msra.mxu0 0.0
    %201 = vmatprep.subr.mxu0 0.0
    %202 = vmatpush2.xpose.msra.mxu0 0.0
    %203 = vmatprep.subr.mxu0 0.0
    %204 = vmatpush2.xpose.msra.mxu0 0.0
    %205 = vmatprep.subr.mxu0 0.0
    %206 = vmatpush2.xpose.msra.mxu0 0.0
    %207 = vmatprep.subr.mxu0 0.0
    %208 = vmatpush2.xpose.msra.mxu0 0.0
    %209 = vmatprep.subr.mxu0 0.0
    %210 = vmatpush2.xpose.msra.mxu0 0.0
    %211 = vmatprep.subr.mxu0 0.0
    %212 = vmatpush2.xpose.msra.mxu0 0.0
    %213 = vmatprep.subr.mxu0 0.0
    %214 = vmatpush2.xpose.msra.mxu0 0.0
    %215 = vmatprep.subr.mxu0 0.0
    %216 = vmatpush2.xpose.msra.mxu0 0.0
    %217 = vmatprep.subr.mxu0 0.0
    %218 = vmatpush2.xpose.msra.mxu0 0.0
    %219 = vmatprep.subr.mxu0 0.0
    %220 = vmatpush2.xpose.msra.mxu0 0.0
    %221 = vmatprep.subr.mxu0 0.0
    %222 = vmatpush2.xpose.msra.mxu0 0.0
    %223 = vmatprep.subr.mxu0 0.0
    %224 = vmatpush2.xpose.msra.mxu0 0.0
    %225 = vmatprep.mubr.f32.mxu0 0.0
    %226 = vmatmul.mubr.f32.gmra.mxu0 %v157
    %v227 = vpop.f32.mrf.mxu0
    %v228 = vadd.f32 0.0, %v227
    %v229 = vpop.f32.mrf.mxu0
    %230 = vdwg.mxu0
    %232 = vrot.lane.b32.xlu0 %v150, 96
    %v233 = vpop.permute.xlu0 %232
    %v234 = vsel %vm156, %v150, 0
    %v236 = vsel %vm156, %v233, 0
    %238 = vmatprep.subr.mxu0 0.0
    %239 = vmatpush1.xpose.msra.mxu0 0.0
    %240 = vmatprep.subr.mxu0 0.0
    %241 = vmatpush1.xpose.msra.mxu0 0.0
    %242 = vmatprep.subr.mxu0 0.0
    %243 = vmatpush1.xpose.msra.mxu0 0.0
    %244 = vmatprep.subr.mxu0 0.0
    %245 = vmatpush1.xpose.msra.mxu0 0.0
    %246 = vmatprep.subr.mxu0 0.0
    %247 = vmatpush1.xpose.msra.mxu0 0.0
    %248 = vmatprep.subr.mxu0 0.0
    %249 = vmatpush1.xpose.msra.mxu0 0.0
    %250 = vmatprep.subr.mxu0 0.0
    %251 = vmatpush1.xpose.msra.mxu0 0.0
    %252 = vmatprep.subr.mxu0 0.0
    %253 = vmatpush1.xpose.msra.mxu0 0.0
    %254 = vmatprep.subr.mxu0 0.0
    %255 = vmatpush1.xpose.msra.mxu0 0.0
    %256 = vmatprep.subr.mxu0 0.0
    %257 = vmatpush1.xpose.msra.mxu0 0.0
    %258 = vmatprep.subr.mxu0 0.0
    %259 = vmatpush1.xpose.msra.mxu0 0.0
    %260 = vmatprep.subr.mxu0 0.0
    %261 = vmatpush1.xpose.msra.mxu0 0.0
    %262 = vmatprep.subr.mxu0 0.0
    %263 = vmatpush1.xpose.msra.mxu0 0.0
    %264 = vmatprep.subr.mxu0 0.0
    %265 = vmatpush1.xpose.msra.mxu0 0.0
    %266 = vmatprep.subr.mxu0 0.0
    %267 = vmatpush1.xpose.msra.mxu0 0.0
    %268 = vmatprep.subr.mxu0 0.0
    %269 = vmatpush1.xpose.msra.mxu0 %v236
    %270 = vmatprep.subr.mxu0 0.0
    %271 = vmatpush2.xpose.msra.mxu0 0.0
    %272 = vmatprep.subr.mxu0 0.0
    %273 = vmatpush2.xpose.msra.mxu0 0.0
    %274 = vmatprep.subr.mxu0 0.0
    %275 = vmatpush2.xpose.msra.mxu0 0.0
    %276 = vmatprep.subr.mxu0 0.0
    %277 = vmatpush2.xpose.msra.mxu0 0.0
    %278 = vmatprep.subr.mxu0 0.0
    %279 = vmatpush2.xpose.msra.mxu0 0.0
    %280 = vmatprep.subr.mxu0 0.0
    %281 = vmatpush2.xpose.msra.mxu0 0.0
    %282 = vmatprep.subr.mxu0 0.0
    %283 = vmatpush2.xpose.msra.mxu0 0.0
    %284 = vmatprep.subr.mxu0 0.0
    %285 = vmatpush2.xpose.msra.mxu0 0.0
    %286 = vmatprep.subr.mxu0 0.0
    %287 = vmatpush2.xpose.msra.mxu0 0.0
    %288 = vmatprep.subr.mxu0 0.0
    %289 = vmatpush2.xpose.msra.mxu0 0.0
    %290 = vmatprep.subr.mxu0 0.0
    %291 = vmatpush2.xpose.msra.mxu0 0.0
    %292 = vmatprep.subr.mxu0 0.0
    %293 = vmatpush2.xpose.msra.mxu0 0.0
    %294 = vmatprep.subr.mxu0 0.0
    %295 = vmatpush2.xpose.msra.mxu0 0.0
    %296 = vmatprep.subr.mxu0 0.0
    %297 = vmatpush2.xpose.msra.mxu0 0.0
    %298 = vmatprep.subr.mxu0 0.0
    %299 = vmatpush2.xpose.msra.mxu0 0.0
    %300 = vmatprep.subr.mxu0 0.0
    %301 = vmatpush2.xpose.msra.mxu0 0.0
    %302 = vmatprep.mubr.f32.mxu0 0.0
    %303 = vmatmul.mubr.f32.gmra.mxu0 %v234
    %v304 = vpop.f32.mrf.mxu0
    %v305 = vadd.f32 0.0, %v304
    %v306 = vpop.f32.mrf.mxu0
    %307 = vdwg.mxu0
    %v308 = vsel %vm156, %v228, -inf
    %309 = vmax.xlane.f32.xlu0 %v308
    %v310 = vpop.xlane.xlu0 %309
    %v311 = vsel %vm156, %v305, -inf
    %312 = vmax.xlane.f32.xlu0 %v311
    %v313 = vpop.xlane.xlu0 %312
    %v314 = vsub.f32 %v228, %v310
    %v315 = vsub.f32 %v305, %v313
    %v316 = vmul.f32 %v314, 1.442695
    %v317 = vpow.pop %v316
    %v318 = vmul.f32 %v315, 1.442695
    %v319 = vpow.pop %v318
    %v320 = vsel %vm156, %v317, 0.0
    %321 = vadd.xlane.f32.xlu0 %v320
    %v322 = vpop.xlane.xlu0 %321
    %v323 = vsel %vm156, %v319, 0.0
    %324 = vadd.xlane.f32.xlu0 %v323
    %v325 = vpop.xlane.xlu0 %324
    %v326 = vrcp.pop %v322
    %v327 = vrcp.pop %v325
    %v328 = vmul.f32 %v317, %v326
    %v329 = vmul.f32 %v319, %v327
    %330 = vrot.lane.b32.xlu0 %v145, 64
    %v331 = vpop.permute.xlu0 %330
    %v334 = vsel %vm156, %v328, 0
    %336 = vmatprep.subr.mxu0 0.0
    %337 = vmatpush1.msra.mxu0 0.0
    %338 = vmatprep.subr.mxu0 0.0
    %339 = vmatpush1.msra.mxu0 0.0
    %340 = vmatprep.subr.mxu0 0.0
    %341 = vmatpush1.msra.mxu0 0.0
    %342 = vmatprep.subr.mxu0 0.0
    %343 = vmatpush1.msra.mxu0 0.0
    %344 = vmatprep.subr.mxu0 0.0
    %345 = vmatpush1.msra.mxu0 0.0
    %346 = vmatprep.subr.mxu0 0.0
    %347 = vmatpush1.msra.mxu0 0.0
    %348 = vmatprep.subr.mxu0 0.0
    %349 = vmatpush1.msra.mxu0 0.0
    %350 = vmatprep.subr.mxu0 0.0
    %351 = vmatpush1.msra.mxu0 0.0
    %352 = vmatprep.subr.mxu0 0.0
    %353 = vmatpush1.msra.mxu0 0.0
    %354 = vmatprep.subr.mxu0 0.0
    %355 = vmatpush1.msra.mxu0 0.0
    %356 = vmatprep.subr.mxu0 0.0
    %357 = vmatpush1.msra.mxu0 0.0
    %358 = vmatprep.subr.mxu0 0.0
    %359 = vmatpush1.msra.mxu0 0.0
    %360 = vmatprep.subr.mxu0 0.0
    %361 = vmatpush1.msra.mxu0 0.0
    %362 = vmatprep.subr.mxu0 0.0
    %363 = vmatpush1.msra.mxu0 0.0
    %364 = vmatprep.subr.mxu0 0.0
    %365 = vmatpush1.msra.mxu0 0.0
    %366 = vmatprep.subr.mxu0 0.0
    %367 = vmatpush1.msra.mxu0 %v331
    %368 = vmatprep.subr.mxu0 0.0
    %369 = vmatpush2.msra.mxu0 0.0
    %370 = vmatprep.subr.mxu0 0.0
    %371 = vmatpush2.msra.mxu0 0.0
    %372 = vmatprep.subr.mxu0 0.0
    %373 = vmatpush2.msra.mxu0 0.0
    %374 = vmatprep.subr.mxu0 0.0
    %375 = vmatpush2.msra.mxu0 0.0
    %376 = vmatprep.subr.mxu0 0.0
    %377 = vmatpush2.msra.mxu0 0.0
    %378 = vmatprep.subr.mxu0 0.0
    %379 = vmatpush2.msra.mxu0 0.0
    %380 = vmatprep.subr.mxu0 0.0
    %381 = vmatpush2.msra.mxu0 0.0
    %382 = vmatprep.subr.mxu0 0.0
    %383 = vmatpush2.msra.mxu0 0.0
    %384 = vmatprep.subr.mxu0 0.0
    %385 = vmatpush2.msra.mxu0 0.0
    %386 = vmatprep.subr.mxu0 0.0
    %387 = vmatpush2.msra.mxu0 0.0
    %388 = vmatprep.subr.mxu0 0.0
    %389 = vmatpush2.msra.mxu0 0.0
    %390 = vmatprep.subr.mxu0 0.0
    %391 = vmatpush2.msra.mxu0 0.0
    %392 = vmatprep.subr.mxu0 0.0
    %393 = vmatpush2.msra.mxu0 0.0
    %394 = vmatprep.subr.mxu0 0.0
    %395 = vmatpush2.msra.mxu0 0.0
    %396 = vmatprep.subr.mxu0 0.0
    %397 = vmatpush2.msra.mxu0 0.0
    %398 = vmatprep.subr.mxu0 0.0
    %399 = vmatpush2.msra.mxu0 0.0
    %400 = vmatprep.mubr.f32.mxu0 0.0
    %401 = vmatmul.mubr.f32.gmra.mxu0 %v334
    %v402 = vpop.f32.mrf.mxu0
    %v403 = vadd.f32 0.0, %v402
    %v404 = vpop.f32.mrf.mxu0
    %405 = vdwg.mxu0
    %406 = vrot.lane.b32.xlu0 %v150, 64
    %v407 = vpop.permute.xlu0 %406
    %v410 = vsel %vm156, %v329, 0
    %412 = vmatprep.subr.mxu0 0.0
    %413 = vmatpush1.msra.mxu0 0.0
    %414 = vmatprep.subr.mxu0 0.0
    %415 = vmatpush1.msra.mxu0 0.0
    %416 = vmatprep.subr.mxu0 0.0
    %417 = vmatpush1.msra.mxu0 0.0
    %418 = vmatprep.subr.mxu0 0.0
    %419 = vmatpush1.msra.mxu0 0.0
    %420 = vmatprep.subr.mxu0 0.0
    %421 = vmatpush1.msra.mxu0 0.0
    %422 = vmatprep.subr.mxu0 0.0
    %423 = vmatpush1.msra.mxu0 0.0
    %424 = vmatprep.subr.mxu0 0.0
    %425 = vmatpush1.msra.mxu0 0.0
    %426 = vmatprep.subr.mxu0 0.0
    %427 = vmatpush1.msra.mxu0 0.0
    %428 = vmatprep.subr.mxu0 0.0
    %429 = vmatpush1.msra.mxu0 0.0
    %430 = vmatprep.subr.mxu0 0.0
    %431 = vmatpush1.msra.mxu0 0.0
    %432 = vmatprep.subr.mxu0 0.0
    %433 = vmatpush1.msra.mxu0 0.0
    %434 = vmatprep.subr.mxu0 0.0
    %435 = vmatpush1.msra.mxu0 0.0
    %436 = vmatprep.subr.mxu0 0.0
    %437 = vmatpush1.msra.mxu0 0.0
    %438 = vmatprep.subr.mxu0 0.0
    %439 = vmatpush1.msra.mxu0 0.0
    %440 = vmatprep.subr.mxu0 0.0
    %441 = vmatpush1.msra.mxu0 0.0
    %442 = vmatprep.subr.mxu0 0.0
    %443 = vmatpush1.msra.mxu0 %v407
    %444 = vmatprep.subr.mxu0 0.0
    %445 = vmatpush2.msra.mxu0 0.0
    %446 = vmatprep.subr.mxu0 0.0
    %447 = vmatpush2.msra.mxu0 0.0
    %448 = vmatprep.subr.mxu0 0.0
    %449 = vmatpush2.msra.mxu0 0.0
    %450 = vmatprep.subr.mxu0 0.0
    %451 = vmatpush2.msra.mxu0 0.0
    %452 = vmatprep.subr.mxu0 0.0
    %453 = vmatpush2.msra.mxu0 0.0
    %454 = vmatprep.subr.mxu0 0.0
    %455 = vmatpush2.msra.mxu0 0.0
    %456 = vmatprep.subr.mxu0 0.0
    %457 = vmatpush2.msra.mxu0 0.0
    %458 = vmatprep.subr.mxu0 0.0
    %459 = vmatpush2.msra.mxu0 0.0
    %460 = vmatprep.subr.mxu0 0.0
    %461 = vmatpush2.msra.mxu0 0.0
    %462 = vmatprep.subr.mxu0 0.0
    %463 = vmatpush2.msra.mxu0 0.0
    %464 = vmatprep.subr.mxu0 0.0
    %465 = vmatpush2.msra.mxu0 0.0
    %466 = vmatprep.subr.mxu0 0.0
    %467 = vmatpush2.msra.mxu0 0.0
    %468 = vmatprep.subr.mxu0 0.0
    %469 = vmatpush2.msra.mxu0 0.0
    %470 = vmatprep.subr.mxu0 0.0
    %471 = vmatpush2.msra.mxu0 0.0
    %472 = vmatprep.subr.mxu0 0.0
    %473 = vmatpush2.msra.mxu0 0.0
    %474 = vmatprep.subr.mxu0 0.0
    %475 = vmatpush2.msra.mxu0 0.0
    %476 = vmatprep.mubr.f32.mxu0 0.0
    %477 = vmatmul.mubr.f32.gmra.mxu0 %v410
    %v478 = vpop.f32.mrf.mxu0
    %v479 = vadd.f32 0.0, %v478
    %v480 = vpop.f32.mrf.mxu0
    %481 = vdwg.mxu0
    %482 = vrot.lane.b32.xlu0 %v145, 120
    %v483 = vpop.permute.xlu0 %482
    %484 = vrot.lane.b32.xlu0 %v145, 88
    %v485 = vpop.permute.xlu0 %484
    %v486 = vsel %vm156, %v483, 0
    %v488 = vsel %vm156, %v485, 0
    %490 = vmatprep.subr.mxu0 0.0
    %491 = vmatpush1.xpose.msra.mxu0 0.0
    %492 = vmatprep.subr.mxu0 0.0
    %493 = vmatpush1.xpose.msra.mxu0 0.0
    %494 = vmatprep.subr.mxu0 0.0
    %495 = vmatpush1.xpose.msra.mxu0 0.0
    %496 = vmatprep.subr.mxu0 0.0
    %497 = vmatpush1.xpose.msra.mxu0 0.0
    %498 = vmatprep.subr.mxu0 0.0
    %499 = vmatpush1.xpose.msra.mxu0 0.0
    %500 = vmatprep.subr.mxu0 0.0
    %501 = vmatpush1.xpose.msra.mxu0 0.0
    %502 = vmatprep.subr.mxu0 0.0
    %503 = vmatpush1.xpose.msra.mxu0 0.0
    %504 = vmatprep.subr.mxu0 0.0
    %505 = vmatpush1.xpose.msra.mxu0 0.0
    %506 = vmatprep.subr.mxu0 0.0
    %507 = vmatpush1.xpose.msra.mxu0 0.0
    %508 = vmatprep.subr.mxu0 0.0
    %509 = vmatpush1.xpose.msra.mxu0 0.0
    %510 = vmatprep.subr.mxu0 0.0
    %511 = vmatpush1.xpose.msra.mxu0 0.0
    %512 = vmatprep.subr.mxu0 0.0
    %513 = vmatpush1.xpose.msra.mxu0 0.0
    %514 = vmatprep.subr.mxu0 0.0
    %515 = vmatpush1.xpose.msra.mxu0 0.0
    %516 = vmatprep.subr.mxu0 0.0
    %517 = vmatpush1.xpose.msra.mxu0 0.0
    %518 = vmatprep.subr.mxu0 0.0
    %519 = vmatpush1.xpose.msra.mxu0 0.0
    %520 = vmatprep.subr.mxu0 0.0
    %521 = vmatpush1.xpose.msra.mxu0 %v488
    %522 = vmatprep.subr.mxu0 0.0
    %523 = vmatpush2.xpose.msra.mxu0 0.0
    %524 = vmatprep.subr.mxu0 0.0
    %525 = vmatpush2.xpose.msra.mxu0 0.0
    %526 = vmatprep.subr.mxu0 0.0
    %527 = vmatpush2.xpose.msra.mxu0 0.0
    %528 = vmatprep.subr.mxu0 0.0
    %529 = vmatpush2.xpose.msra.mxu0 0.0
    %530 = vmatprep.subr.mxu0 0.0
    %531 = vmatpush2.xpose.msra.mxu0 0.0
    %532 = vmatprep.subr.mxu0 0.0
    %533 = vmatpush2.xpose.msra.mxu0 0.0
    %534 = vmatprep.subr.mxu0 0.0
    %535 = vmatpush2.xpose.msra.mxu0 0.0
    %536 = vmatprep.subr.mxu0 0.0
    %537 = vmatpush2.xpose.msra.mxu0 0.0
    %538 = vmatprep.subr.mxu0 0.0
    %539 = vmatpush2.xpose.msra.mxu0 0.0
    %540 = vmatprep.subr.mxu0 0.0
    %541 = vmatpush2.xpose.msra.mxu0 0.0
    %542 = vmatprep.subr.mxu0 0.0
    %543 = vmatpush2.xpose.msra.mxu0 0.0
    %544 = vmatprep.subr.mxu0 0.0
    %545 = vmatpush2.xpose.msra.mxu0 0.0
    %546 = vmatprep.subr.mxu0 0.0
    %547 = vmatpush2.xpose.msra.mxu0 0.0
    %548 = vmatprep.subr.mxu0 0.0
    %549 = vmatpush2.xpose.msra.mxu0 0.0
    %550 = vmatprep.subr.mxu0 0.0
    %551 = vmatpush2.xpose.msra.mxu0 0.0
    %552 = vmatprep.subr.mxu0 0.0
    %553 = vmatpush2.xpose.msra.mxu0 0.0
    %554 = vmatprep.mubr.f32.mxu0 0.0
    %555 = vmatmul.mubr.f32.gmra.mxu0 %v486
    %v556 = vpop.f32.mrf.mxu0
    %v557 = vadd.f32 0.0, %v556
    %v558 = vpop.f32.mrf.mxu0
    %559 = vdwg.mxu0
    %560 = vrot.lane.b32.xlu0 %v150, 120
    %v561 = vpop.permute.xlu0 %560
    %562 = vrot.lane.b32.xlu0 %v150, 88
    %v563 = vpop.permute.xlu0 %562
    %v564 = vsel %vm156, %v561, 0
    %v566 = vsel %vm156, %v563, 0
    %568 = vmatprep.subr.mxu0 0.0
    %569 = vmatpush1.xpose.msra.mxu0 0.0
    %570 = vmatprep.subr.mxu0 0.0
    %571 = vmatpush1.xpose.msra.mxu0 0.0
    %572 = vmatprep.subr.mxu0 0.0
    %573 = vmatpush1.xpose.msra.mxu0 0.0
    %574 = vmatprep.subr.mxu0 0.0
    %575 = vmatpush1.xpose.msra.mxu0 0.0
    %576 = vmatprep.subr.mxu0 0.0
    %577 = vmatpush1.xpose.msra.mxu0 0.0
    %578 = vmatprep.subr.mxu0 0.0
    %579 = vmatpush1.xpose.msra.mxu0 0.0
    %580 = vmatprep.subr.mxu0 0.0
    %581 = vmatpush1.xpose.msra.mxu0 0.0
    %582 = vmatprep.subr.mxu0 0.0
    %583 = vmatpush1.xpose.msra.mxu0 0.0
    %584 = vmatprep.subr.mxu0 0.0
    %585 = vmatpush1.xpose.msra.mxu0 0.0
    %586 = vmatprep.subr.mxu0 0.0
    %587 = vmatpush1.xpose.msra.mxu0 0.0
    %588 = vmatprep.subr.mxu0 0.0
    %589 = vmatpush1.xpose.msra.mxu0 0.0
    %590 = vmatprep.subr.mxu0 0.0
    %591 = vmatpush1.xpose.msra.mxu0 0.0
    %592 = vmatprep.subr.mxu0 0.0
    %593 = vmatpush1.xpose.msra.mxu0 0.0
    %594 = vmatprep.subr.mxu0 0.0
    %595 = vmatpush1.xpose.msra.mxu0 0.0
    %596 = vmatprep.subr.mxu0 0.0
    %597 = vmatpush1.xpose.msra.mxu0 0.0
    %598 = vmatprep.subr.mxu0 0.0
    %599 = vmatpush1.xpose.msra.mxu0 %v566
    %600 = vmatprep.subr.mxu0 0.0
    %601 = vmatpush2.xpose.msra.mxu0 0.0
    %602 = vmatprep.subr.mxu0 0.0
    %603 = vmatpush2.xpose.msra.mxu0 0.0
    %604 = vmatprep.subr.mxu0 0.0
    %605 = vmatpush2.xpose.msra.mxu0 0.0
    %606 = vmatprep.subr.mxu0 0.0
    %607 = vmatpush2.xpose.msra.mxu0 0.0
    %608 = vmatprep.subr.mxu0 0.0
    %609 = vmatpush2.xpose.msra.mxu0 0.0
    %610 = vmatprep.subr.mxu0 0.0
    %611 = vmatpush2.xpose.msra.mxu0 0.0
    %612 = vmatprep.subr.mxu0 0.0
    %613 = vmatpush2.xpose.msra.mxu0 0.0
    %614 = vmatprep.subr.mxu0 0.0
    %615 = vmatpush2.xpose.msra.mxu0 0.0
    %616 = vmatprep.subr.mxu0 0.0
    %617 = vmatpush2.xpose.msra.mxu0 0.0
    %618 = vmatprep.subr.mxu0 0.0
    %619 = vmatpush2.xpose.msra.mxu0 0.0
    %620 = vmatprep.subr.mxu0 0.0
    %621 = vmatpush2.xpose.msra.mxu0 0.0
    %622 = vmatprep.subr.mxu0 0.0
    %623 = vmatpush2.xpose.msra.mxu0 0.0
    %624 = vmatprep.subr.mxu0 0.0
    %625 = vmatpush2.xpose.msra.mxu0 0.0
    %626 = vmatprep.subr.mxu0 0.0
    %627 = vmatpush2.xpose.msra.mxu0 0.0
    %628 = vmatprep.subr.mxu0 0.0
    %629 = vmatpush2.xpose.msra.mxu0 0.0
    %630 = vmatprep.subr.mxu0 0.0
    %631 = vmatpush2.xpose.msra.mxu0 0.0
    %632 = vmatprep.mubr.f32.mxu0 0.0
    %633 = vmatmul.mubr.f32.gmra.mxu0 %v564
    %v634 = vpop.f32.mrf.mxu0
    %v635 = vadd.f32 0.0, %v634
    %v636 = vpop.f32.mrf.mxu0
    %637 = vdwg.mxu0
    %v638 = vsel %vm156, %v557, -inf
    %639 = vmax.xlane.f32.xlu0 %v638
    %v640 = vpop.xlane.xlu0 %639
    %v641 = vsel %vm156, %v635, -inf
    %642 = vmax.xlane.f32.xlu0 %v641
    %v643 = vpop.xlane.xlu0 %642
    %v644 = vsub.f32 %v557, %v640
    %v645 = vsub.f32 %v635, %v643
    %v646 = vmul.f32 %v644, 1.442695
    %v647 = vpow.pop %v646
    %v648 = vmul.f32 %v645, 1.442695
    %v649 = vpow.pop %v648
    %v650 = vsel %vm156, %v647, 0.0
    %651 = vadd.xlane.f32.xlu0 %v650
    %v652 = vpop.xlane.xlu0 %651
    %v653 = vsel %vm156, %v649, 0.0
    %654 = vadd.xlane.f32.xlu0 %v653
    %v655 = vpop.xlane.xlu0 %654
    %v656 = vrcp.pop %v652
    %v657 = vrcp.pop %v655
    %v658 = vmul.f32 %v647, %v656
    %v659 = vmul.f32 %v649, %v657
    %660 = vrot.lane.b32.xlu0 %v145, 56
    %v661 = vpop.permute.xlu0 %660
    %v664 = vsel %vm156, %v658, 0
    %666 = vmatprep.subr.mxu0 0.0
    %667 = vmatpush1.msra.mxu0 0.0
    %668 = vmatprep.subr.mxu0 0.0
    %669 = vmatpush1.msra.mxu0 0.0
    %670 = vmatprep.subr.mxu0 0.0
    %671 = vmatpush1.msra.mxu0 0.0
    %672 = vmatprep.subr.mxu0 0.0
    %673 = vmatpush1.msra.mxu0 0.0
    %674 = vmatprep.subr.mxu0 0.0
    %675 = vmatpush1.msra.mxu0 0.0
    %676 = vmatprep.subr.mxu0 0.0
    %677 = vmatpush1.msra.mxu0 0.0
    %678 = vmatprep.subr.mxu0 0.0
    %679 = vmatpush1.msra.mxu0 0.0
    %680 = vmatprep.subr.mxu0 0.0
    %681 = vmatpush1.msra.mxu0 0.0
    %682 = vmatprep.subr.mxu0 0.0
    %683 = vmatpush1.msra.mxu0 0.0
    %684 = vmatprep.subr.mxu0 0.0
    %685 = vmatpush1.msra.mxu0 0.0
    %686 = vmatprep.subr.mxu0 0.0
    %687 = vmatpush1.msra.mxu0 0.0
    %688 = vmatprep.subr.mxu0 0.0
    %689 = vmatpush1.msra.mxu0 0.0
    %690 = vmatprep.subr.mxu0 0.0
    %691 = vmatpush1.msra.mxu0 0.0
    %692 = vmatprep.subr.mxu0 0.0
    %693 = vmatpush1.msra.mxu0 0.0
    %694 = vmatprep.subr.mxu0 0.0
    %695 = vmatpush1.msra.mxu0 0.0
    %696 = vmatprep.subr.mxu0 0.0
    %697 = vmatpush1.msra.mxu0 %v661
    %698 = vmatprep.subr.mxu0 0.0
    %699 = vmatpush2.msra.mxu0 0.0
    %700 = vmatprep.subr.mxu0 0.0
    %701 = vmatpush2.msra.mxu0 0.0
    %702 = vmatprep.subr.mxu0 0.0
    %703 = vmatpush2.msra.mxu0 0.0
    %704 = vmatprep.subr.mxu0 0.0
    %705 = vmatpush2.msra.mxu0 0.0
    %706 = vmatprep.subr.mxu0 0.0
    %707 = vmatpush2.msra.mxu0 0.0
    %708 = vmatprep.subr.mxu0 0.0
    %709 = vmatpush2.msra.mxu0 0.0
    %710 = vmatprep.subr.mxu0 0.0
    %711 = vmatpush2.msra.mxu0 0.0
    %712 = vmatprep.subr.mxu0 0.0
    %713 = vmatpush2.msra.mxu0 0.0
    %714 = vmatprep.subr.mxu0 0.0
    %715 = vmatpush2.msra.mxu0 0.0
    %716 = vmatprep.subr.mxu0 0.0
    %717 = vmatpush2.msra.mxu0 0.0
    %718 = vmatprep.subr.mxu0 0.0
    %719 = vmatpush2.msra.mxu0 0.0
    %720 = vmatprep.subr.mxu0 0.0
    %721 = vmatpush2.msra.mxu0 0.0
    %722 = vmatprep.subr.mxu0 0.0
    %723 = vmatpush2.msra.mxu0 0.0
    %724 = vmatprep.subr.mxu0 0.0
    %725 = vmatpush2.msra.mxu0 0.0
    %726 = vmatprep.subr.mxu0 0.0
    %727 = vmatpush2.msra.mxu0 0.0
    %728 = vmatprep.subr.mxu0 0.0
    %729 = vmatpush2.msra.mxu0 0.0
    %730 = vmatprep.mubr.f32.mxu0 0.0
    %731 = vmatmul.mubr.f32.gmra.mxu0 %v664
    %v732 = vpop.f32.mrf.mxu0
    %v733 = vadd.f32 0.0, %v732
    %v734 = vpop.f32.mrf.mxu0
    %735 = vdwg.mxu0
    %736 = vrot.lane.b32.xlu0 %v150, 56
    %v737 = vpop.permute.xlu0 %736
    %v740 = vsel %vm156, %v659, 0
    %742 = vmatprep.subr.mxu0 0.0
    %743 = vmatpush1.msra.mxu0 0.0
    %744 = vmatprep.subr.mxu0 0.0
    %745 = vmatpush1.msra.mxu0 0.0
    %746 = vmatprep.subr.mxu0 0.0
    %747 = vmatpush1.msra.mxu0 0.0
    %748 = vmatprep.subr.mxu0 0.0
    %749 = vmatpush1.msra.mxu0 0.0
    %750 = vmatprep.subr.mxu0 0.0
    %751 = vmatpush1.msra.mxu0 0.0
    %752 = vmatprep.subr.mxu0 0.0
    %753 = vmatpush1.msra.mxu0 0.0
    %754 = vmatprep.subr.mxu0 0.0
    %755 = vmatpush1.msra.mxu0 0.0
    %756 = vmatprep.subr.mxu0 0.0
    %757 = vmatpush1.msra.mxu0 0.0
    %758 = vmatprep.subr.mxu0 0.0
    %759 = vmatpush1.msra.mxu0 0.0
    %760 = vmatprep.subr.mxu0 0.0
    %761 = vmatpush1.msra.mxu0 0.0
    %762 = vmatprep.subr.mxu0 0.0
    %763 = vmatpush1.msra.mxu0 0.0
    %764 = vmatprep.subr.mxu0 0.0
    %765 = vmatpush1.msra.mxu0 0.0
    %766 = vmatprep.subr.mxu0 0.0
    %767 = vmatpush1.msra.mxu0 0.0
    %768 = vmatprep.subr.mxu0 0.0
    %769 = vmatpush1.msra.mxu0 0.0
    %770 = vmatprep.subr.mxu0 0.0
    %771 = vmatpush1.msra.mxu0 0.0
    %772 = vmatprep.subr.mxu0 0.0
    %773 = vmatpush1.msra.mxu0 %v737
    %774 = vmatprep.subr.mxu0 0.0
    %775 = vmatpush2.msra.mxu0 0.0
    %776 = vmatprep.subr.mxu0 0.0
    %777 = vmatpush2.msra.mxu0 0.0
    %778 = vmatprep.subr.mxu0 0.0
    %779 = vmatpush2.msra.mxu0 0.0
    %780 = vmatprep.subr.mxu0 0.0
    %781 = vmatpush2.msra.mxu0 0.0
    %782 = vmatprep.subr.mxu0 0.0
    %783 = vmatpush2.msra.mxu0 0.0
    %784 = vmatprep.subr.mxu0 0.0
    %785 = vmatpush2.msra.mxu0 0.0
    %786 = vmatprep.subr.mxu0 0.0
    %787 = vmatpush2.msra.mxu0 0.0
    %788 = vmatprep.subr.mxu0 0.0
    %789 = vmatpush2.msra.mxu0 0.0
    %790 = vmatprep.subr.mxu0 0.0
    %791 = vmatpush2.msra.mxu0 0.0
    %792 = vmatprep.subr.mxu0 0.0
    %793 = vmatpush2.msra.mxu0 0.0
    %794 = vmatprep.subr.mxu0 0.0
    %795 = vmatpush2.msra.mxu0 0.0
    %796 = vmatprep.subr.mxu0 0.0
    %797 = vmatpush2.msra.mxu0 0.0
    %798 = vmatprep.subr.mxu0 0.0
    %799 = vmatpush2.msra.mxu0 0.0
    %800 = vmatprep.subr.mxu0 0.0
    %801 = vmatpush2.msra.mxu0 0.0
    %802 = vmatprep.subr.mxu0 0.0
    %803 = vmatpush2.msra.mxu0 0.0
    %804 = vmatprep.subr.mxu0 0.0
    %805 = vmatpush2.msra.mxu0 0.0
    %806 = vmatprep.mubr.f32.mxu0 0.0
    %807 = vmatmul.mubr.f32.gmra.mxu0 %v740
    %v808 = vpop.f32.mrf.mxu0
    %v809 = vadd.f32 0.0, %v808
    %v810 = vpop.f32.mrf.mxu0
    %811 = vdwg.mxu0
    %812 = vrot.lane.b32.xlu0 %v145, 112
    %v813 = vpop.permute.xlu0 %812
    %814 = vrot.lane.b32.xlu0 %v145, 80
    %v815 = vpop.permute.xlu0 %814
    %v816 = vsel %vm156, %v813, 0
    %v818 = vsel %vm156, %v815, 0
    %820 = vmatprep.subr.mxu0 0.0
    %821 = vmatpush1.xpose.msra.mxu0 0.0
    %822 = vmatprep.subr.mxu0 0.0
    %823 = vmatpush1.xpose.msra.mxu0 0.0
    %824 = vmatprep.subr.mxu0 0.0
    %825 = vmatpush1.xpose.msra.mxu0 0.0
    %826 = vmatprep.subr.mxu0 0.0
    %827 = vmatpush1.xpose.msra.mxu0 0.0
    %828 = vmatprep.subr.mxu0 0.0
    %829 = vmatpush1.xpose.msra.mxu0 0.0
    %830 = vmatprep.subr.mxu0 0.0
    %831 = vmatpush1.xpose.msra.mxu0 0.0
    %832 = vmatprep.subr.mxu0 0.0
    %833 = vmatpush1.xpose.msra.mxu0 0.0
    %834 = vmatprep.subr.mxu0 0.0
    %835 = vmatpush1.xpose.msra.mxu0 0.0
    %836 = vmatprep.subr.mxu0 0.0
    %837 = vmatpush1.xpose.msra.mxu0 0.0
    %838 = vmatprep.subr.mxu0 0.0
    %839 = vmatpush1.xpose.msra.mxu0 0.0
    %840 = vmatprep.subr.mxu0 0.0
    %841 = vmatpush1.xpose.msra.mxu0 0.0
    %842 = vmatprep.subr.mxu0 0.0
    %843 = vmatpush1.xpose.msra.mxu0 0.0
    %844 = vmatprep.subr.mxu0 0.0
    %845 = vmatpush1.xpose.msra.mxu0 0.0
    %846 = vmatprep.subr.mxu0 0.0
    %847 = vmatpush1.xpose.msra.mxu0 0.0
    %848 = vmatprep.subr.mxu0 0.0
    %849 = vmatpush1.xpose.msra.mxu0 0.0
    %850 = vmatprep.subr.mxu0 0.0
    %851 = vmatpush1.xpose.msra.mxu0 %v818
    %852 = vmatprep.subr.mxu0 0.0
    %853 = vmatpush2.xpose.msra.mxu0 0.0
    %854 = vmatprep.subr.mxu0 0.0
    %855 = vmatpush2.xpose.msra.mxu0 0.0
    %856 = vmatprep.subr.mxu0 0.0
    %857 = vmatpush2.xpose.msra.mxu0 0.0
    %858 = vmatprep.subr.mxu0 0.0
    %859 = vmatpush2.xpose.msra.mxu0 0.0
    %860 = vmatprep.subr.mxu0 0.0
    %861 = vmatpush2.xpose.msra.mxu0 0.0
    %862 = vmatprep.subr.mxu0 0.0
    %863 = vmatpush2.xpose.msra.mxu0 0.0
    %864 = vmatprep.subr.mxu0 0.0
    %865 = vmatpush2.xpose.msra.mxu0 0.0
    %866 = vmatprep.subr.mxu0 0.0
    %867 = vmatpush2.xpose.msra.mxu0 0.0
    %868 = vmatprep.subr.mxu0 0.0
    %869 = vmatpush2.xpose.msra.mxu0 0.0
    %870 = vmatprep.subr.mxu0 0.0
    %871 = vmatpush2.xpose.msra.mxu0 0.0
    %872 = vmatprep.subr.mxu0 0.0
    %873 = vmatpush2.xpose.msra.mxu0 0.0
    %874 = vmatprep.subr.mxu0 0.0
    %875 = vmatpush2.xpose.msra.mxu0 0.0
    %876 = vmatprep.subr.mxu0 0.0
    %877 = vmatpush2.xpose.msra.mxu0 0.0
    %878 = vmatprep.subr.mxu0 0.0
    %879 = vmatpush2.xpose.msra.mxu0 0.0
    %880 = vmatprep.subr.mxu0 0.0
    %881 = vmatpush2.xpose.msra.mxu0 0.0
    %882 = vmatprep.subr.mxu0 0.0
    %883 = vmatpush2.xpose.msra.mxu0 0.0
    %884 = vmatprep.mubr.f32.mxu0 0.0
    %885 = vmatmul.mubr.f32.gmra.mxu0 %v816
    %v886 = vpop.f32.mrf.mxu0
    %v887 = vadd.f32 0.0, %v886
    %v888 = vpop.f32.mrf.mxu0
    %889 = vdwg.mxu0
    %890 = vrot.lane.b32.xlu0 %v150, 112
    %v891 = vpop.permute.xlu0 %890
    %892 = vrot.lane.b32.xlu0 %v150, 80
    %v893 = vpop.permute.xlu0 %892
    %v894 = vsel %vm156, %v891, 0
    %v896 = vsel %vm156, %v893, 0
    %898 = vmatprep.subr.mxu0 0.0
    %899 = vmatpush1.xpose.msra.mxu0 0.0
    %900 = vmatprep.subr.mxu0 0.0
    %901 = vmatpush1.xpose.msra.mxu0 0.0
    %902 = vmatprep.subr.mxu0 0.0
    %903 = vmatpush1.xpose.msra.mxu0 0.0
    %904 = vmatprep.subr.mxu0 0.0
    %905 = vmatpush1.xpose.msra.mxu0 0.0
    %906 = vmatprep.subr.mxu0 0.0
    %907 = vmatpush1.xpose.msra.mxu0 0.0
    %908 = vmatprep.subr.mxu0 0.0
    %909 = vmatpush1.xpose.msra.mxu0 0.0
    %910 = vmatprep.subr.mxu0 0.0
    %911 = vmatpush1.xpose.msra.mxu0 0.0
    %912 = vmatprep.subr.mxu0 0.0
    %913 = vmatpush1.xpose.msra.mxu0 0.0
    %914 = vmatprep.subr.mxu0 0.0
    %915 = vmatpush1.xpose.msra.mxu0 0.0
    %916 = vmatprep.subr.mxu0 0.0
    %917 = vmatpush1.xpose.msra.mxu0 0.0
    %918 = vmatprep.subr.mxu0 0.0
    %919 = vmatpush1.xpose.msra.mxu0 0.0
    %920 = vmatprep.subr.mxu0 0.0
    %921 = vmatpush1.xpose.msra.mxu0 0.0
    %922 = vmatprep.subr.mxu0 0.0
    %923 = vmatpush1.xpose.msra.mxu0 0.0
    %924 = vmatprep.subr.mxu0 0.0
    %925 = vmatpush1.xpose.msra.mxu0 0.0
    %926 = vmatprep.subr.mxu0 0.0
    %927 = vmatpush1.xpose.msra.mxu0 0.0
    %928 = vmatprep.subr.mxu0 0.0
    %929 = vmatpush1.xpose.msra.mxu0 %v896
    %930 = vmatprep.subr.mxu0 0.0
    %931 = vmatpush2.xpose.msra.mxu0 0.0
    %932 = vmatprep.subr.mxu0 0.0
    %933 = vmatpush2.xpose.msra.mxu0 0.0
    %934 = vmatprep.subr.mxu0 0.0
    %935 = vmatpush2.xpose.msra.mxu0 0.0
    %936 = vmatprep.subr.mxu0 0.0
    %937 = vmatpush2.xpose.msra.mxu0 0.0
    %938 = vmatprep.subr.mxu0 0.0
    %939 = vmatpush2.xpose.msra.mxu0 0.0
    %940 = vmatprep.subr.mxu0 0.0
    %941 = vmatpush2.xpose.msra.mxu0 0.0
    %942 = vmatprep.subr.mxu0 0.0
    %943 = vmatpush2.xpose.msra.mxu0 0.0
    %944 = vmatprep.subr.mxu0 0.0
    %945 = vmatpush2.xpose.msra.mxu0 0.0
    %946 = vmatprep.subr.mxu0 0.0
    %947 = vmatpush2.xpose.msra.mxu0 0.0
    %948 = vmatprep.subr.mxu0 0.0
    %949 = vmatpush2.xpose.msra.mxu0 0.0
    %950 = vmatprep.subr.mxu0 0.0
    %951 = vmatpush2.xpose.msra.mxu0 0.0
    %952 = vmatprep.subr.mxu0 0.0
    %953 = vmatpush2.xpose.msra.mxu0 0.0
    %954 = vmatprep.subr.mxu0 0.0
    %955 = vmatpush2.xpose.msra.mxu0 0.0
    %956 = vmatprep.subr.mxu0 0.0
    %957 = vmatpush2.xpose.msra.mxu0 0.0
    %958 = vmatprep.subr.mxu0 0.0
    %959 = vmatpush2.xpose.msra.mxu0 0.0
    %960 = vmatprep.subr.mxu0 0.0
    %961 = vmatpush2.xpose.msra.mxu0 0.0
    %962 = vmatprep.mubr.f32.mxu0 0.0
    %963 = vmatmul.mubr.f32.gmra.mxu0 %v894
    %v964 = vpop.f32.mrf.mxu0
    %v965 = vadd.f32 0.0, %v964
    %v966 = vpop.f32.mrf.mxu0
    %967 = vdwg.mxu0
    %v968 = vsel %vm156, %v887, -inf
    %969 = vmax.xlane.f32.xlu0 %v968
    %v970 = vpop.xlane.xlu0 %969
    %v971 = vsel %vm156, %v965, -inf
    %972 = vmax.xlane.f32.xlu0 %v971
    %v973 = vpop.xlane.xlu0 %972
    %v974 = vsub.f32 %v887, %v970
    %v975 = vsub.f32 %v965, %v973
    %v976 = vmul.f32 %v974, 1.442695
    %v977 = vpow.pop %v976
    %v978 = vmul.f32 %v975, 1.442695
    %v979 = vpow.pop %v978
    %v980 = vsel %vm156, %v977, 0.0
    %981 = vadd.xlane.f32.xlu0 %v980
    %v982 = vpop.xlane.xlu0 %981
    %v983 = vsel %vm156, %v979, 0.0
    %984 = vadd.xlane.f32.xlu0 %v983
    %v985 = vpop.xlane.xlu0 %984
    %v986 = vrcp.pop %v982
    %v987 = vrcp.pop %v985
    %v988 = vmul.f32 %v977, %v986
    %v989 = vmul.f32 %v979, %v987
    %990 = vrot.lane.b32.xlu0 %v145, 48
    %v991 = vpop.permute.xlu0 %990
    %v994 = vsel %vm156, %v988, 0
    %996 = vmatprep.subr.mxu0 0.0
    %997 = vmatpush1.msra.mxu0 0.0
    %998 = vmatprep.subr.mxu0 0.0
    %999 = vmatpush1.msra.mxu0 0.0
    %1000 = vmatprep.subr.mxu0 0.0
    %1001 = vmatpush1.msra.mxu0 0.0
    %1002 = vmatprep.subr.mxu0 0.0
    %1003 = vmatpush1.msra.mxu0 0.0
    %1004 = vmatprep.subr.mxu0 0.0
    %1005 = vmatpush1.msra.mxu0 0.0
    %1006 = vmatprep.subr.mxu0 0.0
    %1007 = vmatpush1.msra.mxu0 0.0
    %1008 = vmatprep.subr.mxu0 0.0
    %1009 = vmatpush1.msra.mxu0 0.0
    %1010 = vmatprep.subr.mxu0 0.0
    %1011 = vmatpush1.msra.mxu0 0.0
    %1012 = vmatprep.subr.mxu0 0.0
    %1013 = vmatpush1.msra.mxu0 0.0
    %1014 = vmatprep.subr.mxu0 0.0
    %1015 = vmatpush1.msra.mxu0 0.0
    %1016 = vmatprep.subr.mxu0 0.0
    %1017 = vmatpush1.msra.mxu0 0.0
    %1018 = vmatprep.subr.mxu0 0.0
    %1019 = vmatpush1.msra.mxu0 0.0
    %1020 = vmatprep.subr.mxu0 0.0
    %1021 = vmatpush1.msra.mxu0 0.0
    %1022 = vmatprep.subr.mxu0 0.0
    %1023 = vmatpush1.msra.mxu0 0.0
    %1024 = vmatprep.subr.mxu0 0.0
    %1025 = vmatpush1.msra.mxu0 0.0
    %1026 = vmatprep.subr.mxu0 0.0
    %1027 = vmatpush1.msra.mxu0 %v991
    %1028 = vmatprep.subr.mxu0 0.0
    %1029 = vmatpush2.msra.mxu0 0.0
    %1030 = vmatprep.subr.mxu0 0.0
    %1031 = vmatpush2.msra.mxu0 0.0
    %1032 = vmatprep.subr.mxu0 0.0
    %1033 = vmatpush2.msra.mxu0 0.0
    %1034 = vmatprep.subr.mxu0 0.0
    %1035 = vmatpush2.msra.mxu0 0.0
    %1036 = vmatprep.subr.mxu0 0.0
    %1037 = vmatpush2.msra.mxu0 0.0
    %1038 = vmatprep.subr.mxu0 0.0
    %1039 = vmatpush2.msra.mxu0 0.0
    %1040 = vmatprep.subr.mxu0 0.0
    %1041 = vmatpush2.msra.mxu0 0.0
    %1042 = vmatprep.subr.mxu0 0.0
    %1043 = vmatpush2.msra.mxu0 0.0
    %1044 = vmatprep.subr.mxu0 0.0
    %1045 = vmatpush2.msra.mxu0 0.0
    %1046 = vmatprep.subr.mxu0 0.0
    %1047 = vmatpush2.msra.mxu0 0.0
    %1048 = vmatprep.subr.mxu0 0.0
    %1049 = vmatpush2.msra.mxu0 0.0
    %1050 = vmatprep.subr.mxu0 0.0
    %1051 = vmatpush2.msra.mxu0 0.0
    %1052 = vmatprep.subr.mxu0 0.0
    %1053 = vmatpush2.msra.mxu0 0.0
    %1054 = vmatprep.subr.mxu0 0.0
    %1055 = vmatpush2.msra.mxu0 0.0
    %1056 = vmatprep.subr.mxu0 0.0
    %1057 = vmatpush2.msra.mxu0 0.0
    %1058 = vmatprep.subr.mxu0 0.0
    %1059 = vmatpush2.msra.mxu0 0.0
    %1060 = vmatprep.mubr.f32.mxu0 0.0
    %1061 = vmatmul.mubr.f32.gmra.mxu0 %v994
    %v1062 = vpop.f32.mrf.mxu0
    %v1063 = vadd.f32 0.0, %v1062
    %v1064 = vpop.f32.mrf.mxu0
    %1065 = vdwg.mxu0
    %1066 = vrot.lane.b32.xlu0 %v150, 48
    %v1067 = vpop.permute.xlu0 %1066
    %v1070 = vsel %vm156, %v989, 0
    %1072 = vmatprep.subr.mxu0 0.0
    %1073 = vmatpush1.msra.mxu0 0.0
    %1074 = vmatprep.subr.mxu0 0.0
    %1075 = vmatpush1.msra.mxu0 0.0
    %1076 = vmatprep.subr.mxu0 0.0
    %1077 = vmatpush1.msra.mxu0 0.0
    %1078 = vmatprep.subr.mxu0 0.0
    %1079 = vmatpush1.msra.mxu0 0.0
    %1080 = vmatprep.subr.mxu0 0.0
    %1081 = vmatpush1.msra.mxu0 0.0
    %1082 = vmatprep.subr.mxu0 0.0
    %1083 = vmatpush1.msra.mxu0 0.0
    %1084 = vmatprep.subr.mxu0 0.0
    %1085 = vmatpush1.msra.mxu0 0.0
    %1086 = vmatprep.subr.mxu0 0.0
    %1087 = vmatpush1.msra.mxu0 0.0
    %1088 = vmatprep.subr.mxu0 0.0
    %1089 = vmatpush1.msra.mxu0 0.0
    %1090 = vmatprep.subr.mxu0 0.0
    %1091 = vmatpush1.msra.mxu0 0.0
    %1092 = vmatprep.subr.mxu0 0.0
    %1093 = vmatpush1.msra.mxu0 0.0
    %1094 = vmatprep.subr.mxu0 0.0
    %1095 = vmatpush1.msra.mxu0 0.0
    %1096 = vmatprep.subr.mxu0 0.0
    %1097 = vmatpush1.msra.mxu0 0.0
    %1098 = vmatprep.subr.mxu0 0.0
    %1099 = vmatpush1.msra.mxu0 0.0
    %1100 = vmatprep.subr.mxu0 0.0
    %1101 = vmatpush1.msra.mxu0 0.0
    %1102 = vmatprep.subr.mxu0 0.0
    %1103 = vmatpush1.msra.mxu0 %v1067
    %1104 = vmatprep.subr.mxu0 0.0
    %1105 = vmatpush2.msra.mxu0 0.0
    %1106 = vmatprep.subr.mxu0 0.0
    %1107 = vmatpush2.msra.mxu0 0.0
    %1108 = vmatprep.subr.mxu0 0.0
    %1109 = vmatpush2.msra.mxu0 0.0
    %1110 = vmatprep.subr.mxu0 0.0
    %1111 = vmatpush2.msra.mxu0 0.0
    %1112 = vmatprep.subr.mxu0 0.0
    %1113 = vmatpush2.msra.mxu0 0.0
    %1114 = vmatprep.subr.mxu0 0.0
    %1115 = vmatpush2.msra.mxu0 0.0
    %1116 = vmatprep.subr.mxu0 0.0
    %1117 = vmatpush2.msra.mxu0 0.0
    %1118 = vmatprep.subr.mxu0 0.0
    %1119 = vmatpush2.msra.mxu0 0.0
    %1120 = vmatprep.subr.mxu0 0.0
    %1121 = vmatpush2.msra.mxu0 0.0
    %1122 = vmatprep.subr.mxu0 0.0
    %1123 = vmatpush2.msra.mxu0 0.0
    %1124 = vmatprep.subr.mxu0 0.0
    %1125 = vmatpush2.msra.mxu0 0.0
    %1126 = vmatprep.subr.mxu0 0.0
    %1127 = vmatpush2.msra.mxu0 0.0
    %1128 = vmatprep.subr.mxu0 0.0
    %1129 = vmatpush2.msra.mxu0 0.0
    %1130 = vmatprep.subr.mxu0 0.0
    %1131 = vmatpush2.msra.mxu0 0.0
    %1132 = vmatprep.subr.mxu0 0.0
    %1133 = vmatpush2.msra.mxu0 0.0
    %1134 = vmatprep.subr.mxu0 0.0
    %1135 = vmatpush2.msra.mxu0 0.0
    %1136 = vmatprep.mubr.f32.mxu0 0.0
    %1137 = vmatmul.mubr.f32.gmra.mxu0 %v1070
    %v1138 = vpop.f32.mrf.mxu0
    %v1139 = vadd.f32 0.0, %v1138
    %v1140 = vpop.f32.mrf.mxu0
    %1141 = vdwg.mxu0
    %1142 = vrot.lane.b32.xlu0 %v145, 104
    %v1143 = vpop.permute.xlu0 %1142
    %1144 = vrot.lane.b32.xlu0 %v145, 72
    %v1145 = vpop.permute.xlu0 %1144
    %v1146 = vsel %vm156, %v1143, 0
    %v1148 = vsel %vm156, %v1145, 0
    %1150 = vmatprep.subr.mxu0 0.0
    %1151 = vmatpush1.xpose.msra.mxu0 0.0
    %1152 = vmatprep.subr.mxu0 0.0
    %1153 = vmatpush1.xpose.msra.mxu0 0.0
    %1154 = vmatprep.subr.mxu0 0.0
    %1155 = vmatpush1.xpose.msra.mxu0 0.0
    %1156 = vmatprep.subr.mxu0 0.0
    %1157 = vmatpush1.xpose.msra.mxu0 0.0
    %1158 = vmatprep.subr.mxu0 0.0
    %1159 = vmatpush1.xpose.msra.mxu0 0.0
    %1160 = vmatprep.subr.mxu0 0.0
    %1161 = vmatpush1.xpose.msra.mxu0 0.0
    %1162 = vmatprep.subr.mxu0 0.0
    %1163 = vmatpush1.xpose.msra.mxu0 0.0
    %1164 = vmatprep.subr.mxu0 0.0
    %1165 = vmatpush1.xpose.msra.mxu0 0.0
    %1166 = vmatprep.subr.mxu0 0.0
    %1167 = vmatpush1.xpose.msra.mxu0 0.0
    %1168 = vmatprep.subr.mxu0 0.0
    %1169 = vmatpush1.xpose.msra.mxu0 0.0
    %1170 = vmatprep.subr.mxu0 0.0
    %1171 = vmatpush1.xpose.msra.mxu0 0.0
    %1172 = vmatprep.subr.mxu0 0.0
    %1173 = vmatpush1.xpose.msra.mxu0 0.0
    %1174 = vmatprep.subr.mxu0 0.0
    %1175 = vmatpush1.xpose.msra.mxu0 0.0
    %1176 = vmatprep.subr.mxu0 0.0
    %1177 = vmatpush1.xpose.msra.mxu0 0.0
    %1178 = vmatprep.subr.mxu0 0.0
    %1179 = vmatpush1.xpose.msra.mxu0 0.0
    %1180 = vmatprep.subr.mxu0 0.0
    %1181 = vmatpush1.xpose.msra.mxu0 %v1148
    %1182 = vmatprep.subr.mxu0 0.0
    %1183 = vmatpush2.xpose.msra.mxu0 0.0
    %1184 = vmatprep.subr.mxu0 0.0
    %1185 = vmatpush2.xpose.msra.mxu0 0.0
    %1186 = vmatprep.subr.mxu0 0.0
    %1187 = vmatpush2.xpose.msra.mxu0 0.0
    %1188 = vmatprep.subr.mxu0 0.0
    %1189 = vmatpush2.xpose.msra.mxu0 0.0
    %1190 = vmatprep.subr.mxu0 0.0
    %1191 = vmatpush2.xpose.msra.mxu0 0.0
    %1192 = vmatprep.subr.mxu0 0.0
    %1193 = vmatpush2.xpose.msra.mxu0 0.0
    %1194 = vmatprep.subr.mxu0 0.0
    %1195 = vmatpush2.xpose.msra.mxu0 0.0
    %1196 = vmatprep.subr.mxu0 0.0
    %1197 = vmatpush2.xpose.msra.mxu0 0.0
    %1198 = vmatprep.subr.mxu0 0.0
    %1199 = vmatpush2.xpose.msra.mxu0 0.0
    %1200 = vmatprep.subr.mxu0 0.0
    %1201 = vmatpush2.xpose.msra.mxu0 0.0
    %1202 = vmatprep.subr.mxu0 0.0
    %1203 = vmatpush2.xpose.msra.mxu0 0.0
    %1204 = vmatprep.subr.mxu0 0.0
    %1205 = vmatpush2.xpose.msra.mxu0 0.0
    %1206 = vmatprep.subr.mxu0 0.0
    %1207 = vmatpush2.xpose.msra.mxu0 0.0
    %1208 = vmatprep.subr.mxu0 0.0
    %1209 = vmatpush2.xpose.msra.mxu0 0.0
    %1210 = vmatprep.subr.mxu0 0.0
    %1211 = vmatpush2.xpose.msra.mxu0 0.0
    %1212 = vmatprep.subr.mxu0 0.0
    %1213 = vmatpush2.xpose.msra.mxu0 0.0
    %1214 = vmatprep.mubr.f32.mxu0 0.0
    %1215 = vmatmul.mubr.f32.gmra.mxu0 %v1146
    %v1216 = vpop.f32.mrf.mxu0
    %v1217 = vadd.f32 0.0, %v1216
    %v1218 = vpop.f32.mrf.mxu0
    %1219 = vdwg.mxu0
    %1220 = vrot.lane.b32.xlu0 %v150, 104
    %v1221 = vpop.permute.xlu0 %1220
    %1222 = vrot.lane.b32.xlu0 %v150, 72
    %v1223 = vpop.permute.xlu0 %1222
    %v1224 = vsel %vm156, %v1221, 0
    %v1226 = vsel %vm156, %v1223, 0
    %1228 = vmatprep.subr.mxu0 0.0
    %1229 = vmatpush1.xpose.msra.mxu0 0.0
    %1230 = vmatprep.subr.mxu0 0.0
    %1231 = vmatpush1.xpose.msra.mxu0 0.0
    %1232 = vmatprep.subr.mxu0 0.0
    %1233 = vmatpush1.xpose.msra.mxu0 0.0
    %1234 = vmatprep.subr.mxu0 0.0
    %1235 = vmatpush1.xpose.msra.mxu0 0.0
    %1236 = vmatprep.subr.mxu0 0.0
    %1237 = vmatpush1.xpose.msra.mxu0 0.0
    %1238 = vmatprep.subr.mxu0 0.0
    %1239 = vmatpush1.xpose.msra.mxu0 0.0
    %1240 = vmatprep.subr.mxu0 0.0
    %1241 = vmatpush1.xpose.msra.mxu0 0.0
    %1242 = vmatprep.subr.mxu0 0.0
    %1243 = vmatpush1.xpose.msra.mxu0 0.0
    %1244 = vmatprep.subr.mxu0 0.0
    %1245 = vmatpush1.xpose.msra.mxu0 0.0
    %1246 = vmatprep.subr.mxu0 0.0
    %1247 = vmatpush1.xpose.msra.mxu0 0.0
    %1248 = vmatprep.subr.mxu0 0.0
    %1249 = vmatpush1.xpose.msra.mxu0 0.0
    %1250 = vmatprep.subr.mxu0 0.0
    %1251 = vmatpush1.xpose.msra.mxu0 0.0
    %1252 = vmatprep.subr.mxu0 0.0
    %1253 = vmatpush1.xpose.msra.mxu0 0.0
    %1254 = vmatprep.subr.mxu0 0.0
    %1255 = vmatpush1.xpose.msra.mxu0 0.0
    %1256 = vmatprep.subr.mxu0 0.0
    %1257 = vmatpush1.xpose.msra.mxu0 0.0
    %1258 = vmatprep.subr.mxu0 0.0
    %1259 = vmatpush1.xpose.msra.mxu0 %v1226
    %1260 = vmatprep.subr.mxu0 0.0
    %1261 = vmatpush2.xpose.msra.mxu0 0.0
    %1262 = vmatprep.subr.mxu0 0.0
    %1263 = vmatpush2.xpose.msra.mxu0 0.0
    %1264 = vmatprep.subr.mxu0 0.0
    %1265 = vmatpush2.xpose.msra.mxu0 0.0
    %1266 = vmatprep.subr.mxu0 0.0
    %1267 = vmatpush2.xpose.msra.mxu0 0.0
    %1268 = vmatprep.subr.mxu0 0.0
    %1269 = vmatpush2.xpose.msra.mxu0 0.0
    %1270 = vmatprep.subr.mxu0 0.0
    %1271 = vmatpush2.xpose.msra.mxu0 0.0
    %1272 = vmatprep.subr.mxu0 0.0
    %1273 = vmatpush2.xpose.msra.mxu0 0.0
    %1274 = vmatprep.subr.mxu0 0.0
    %1275 = vmatpush2.xpose.msra.mxu0 0.0
    %1276 = vmatprep.subr.mxu0 0.0
    %1277 = vmatpush2.xpose.msra.mxu0 0.0
    %1278 = vmatprep.subr.mxu0 0.0
    %1279 = vmatpush2.xpose.msra.mxu0 0.0
    %1280 = vmatprep.subr.mxu0 0.0
    %1281 = vmatpush2.xpose.msra.mxu0 0.0
    %1282 = vmatprep.subr.mxu0 0.0
    %1283 = vmatpush2.xpose.msra.mxu0 0.0
    %1284 = vmatprep.subr.mxu0 0.0
    %1285 = vmatpush2.xpose.msra.mxu0 0.0
    %1286 = vmatprep.subr.mxu0 0.0
    %1287 = vmatpush2.xpose.msra.mxu0 0.0
    %1288 = vmatprep.subr.mxu0 0.0
    %1289 = vmatpush2.xpose.msra.mxu0 0.0
    %1290 = vmatprep.subr.mxu0 0.0
    %1291 = vmatpush2.xpose.msra.mxu0 0.0
    %1292 = vmatprep.mubr.f32.mxu0 0.0
    %1293 = vmatmul.mubr.f32.gmra.mxu0 %v1224
    %v1294 = vpop.f32.mrf.mxu0
    %v1295 = vadd.f32 0.0, %v1294
    %v1296 = vpop.f32.mrf.mxu0
    %1297 = vdwg.mxu0
    %v1298 = vsel %vm156, %v1217, -inf
    %1299 = vmax.xlane.f32.xlu0 %v1298
    %v1300 = vpop.xlane.xlu0 %1299
    %v1301 = vsel %vm156, %v1295, -inf
    %1302 = vmax.xlane.f32.xlu0 %v1301
    %v1303 = vpop.xlane.xlu0 %1302
    %v1304 = vsub.f32 %v1217, %v1300
    %v1305 = vsub.f32 %v1295, %v1303
    %v1306 = vmul.f32 %v1304, 1.442695
    %v1307 = vpow.pop %v1306
    %v1308 = vmul.f32 %v1305, 1.442695
    %v1309 = vpow.pop %v1308
    %v1310 = vsel %vm156, %v1307, 0.0
    %1311 = vadd.xlane.f32.xlu0 %v1310
    %v1312 = vpop.xlane.xlu0 %1311
    %v1313 = vsel %vm156, %v1309, 0.0
    %1314 = vadd.xlane.f32.xlu0 %v1313
    %v1315 = vpop.xlane.xlu0 %1314
    %v1316 = vrcp.pop %v1312
    %v1317 = vrcp.pop %v1315
    %v1318 = vmul.f32 %v1307, %v1316
    %v1319 = vmul.f32 %v1309, %v1317
    %1320 = vrot.lane.b32.xlu0 %v145, 40
    %v1321 = vpop.permute.xlu0 %1320
    %v1324 = vsel %vm156, %v1318, 0
    %1326 = vmatprep.subr.mxu0 0.0
    %1327 = vmatpush1.msra.mxu0 0.0
    %1328 = vmatprep.subr.mxu0 0.0
    %1329 = vmatpush1.msra.mxu0 0.0
    %1330 = vmatprep.subr.mxu0 0.0
    %1331 = vmatpush1.msra.mxu0 0.0
    %1332 = vmatprep.subr.mxu0 0.0
    %1333 = vmatpush1.msra.mxu0 0.0
    %1334 = vmatprep.subr.mxu0 0.0
    %1335 = vmatpush1.msra.mxu0 0.0
    %1336 = vmatprep.subr.mxu0 0.0
    %1337 = vmatpush1.msra.mxu0 0.0
    %1338 = vmatprep.subr.mxu0 0.0
    %1339 = vmatpush1.msra.mxu0 0.0
    %1340 = vmatprep.subr.mxu0 0.0
    %1341 = vmatpush1.msra.mxu0 0.0
    %1342 = vmatprep.subr.mxu0 0.0
    %1343 = vmatpush1.msra.mxu0 0.0
    %1344 = vmatprep.subr.mxu0 0.0
    %1345 = vmatpush1.msra.mxu0 0.0
    %1346 = vmatprep.subr.mxu0 0.0
    %1347 = vmatpush1.msra.mxu0 0.0
    %1348 = vmatprep.subr.mxu0 0.0
    %1349 = vmatpush1.msra.mxu0 0.0
    %1350 = vmatprep.subr.mxu0 0.0
    %1351 = vmatpush1.msra.mxu0 0.0
    %1352 = vmatprep.subr.mxu0 0.0
    %1353 = vmatpush1.msra.mxu0 0.0
    %1354 = vmatprep.subr.mxu0 0.0
    %1355 = vmatpush1.msra.mxu0 0.0
    %1356 = vmatprep.subr.mxu0 0.0
    %1357 = vmatpush1.msra.mxu0 %v1321
    %1358 = vmatprep.subr.mxu0 0.0
    %1359 = vmatpush2.msra.mxu0 0.0
    %1360 = vmatprep.subr.mxu0 0.0
    %1361 = vmatpush2.msra.mxu0 0.0
    %1362 = vmatprep.subr.mxu0 0.0
    %1363 = vmatpush2.msra.mxu0 0.0
    %1364 = vmatprep.subr.mxu0 0.0
    %1365 = vmatpush2.msra.mxu0 0.0
    %1366 = vmatprep.subr.mxu0 0.0
    %1367 = vmatpush2.msra.mxu0 0.0
    %1368 = vmatprep.subr.mxu0 0.0
    %1369 = vmatpush2.msra.mxu0 0.0
    %1370 = vmatprep.subr.mxu0 0.0
    %1371 = vmatpush2.msra.mxu0 0.0
    %1372 = vmatprep.subr.mxu0 0.0
    %1373 = vmatpush2.msra.mxu0 0.0
    %1374 = vmatprep.subr.mxu0 0.0
    %1375 = vmatpush2.msra.mxu0 0.0
    %1376 = vmatprep.subr.mxu0 0.0
    %1377 = vmatpush2.msra.mxu0 0.0
    %1378 = vmatprep.subr.mxu0 0.0
    %1379 = vmatpush2.msra.mxu0 0.0
    %1380 = vmatprep.subr.mxu0 0.0
    %1381 = vmatpush2.msra.mxu0 0.0
    %1382 = vmatprep.subr.mxu0 0.0
    %1383 = vmatpush2.msra.mxu0 0.0
    %1384 = vmatprep.subr.mxu0 0.0
    %1385 = vmatpush2.msra.mxu0 0.0
    %1386 = vmatprep.subr.mxu0 0.0
    %1387 = vmatpush2.msra.mxu0 0.0
    %1388 = vmatprep.subr.mxu0 0.0
    %1389 = vmatpush2.msra.mxu0 0.0
    %1390 = vmatprep.mubr.f32.mxu0 0.0
    %1391 = vmatmul.mubr.f32.gmra.mxu0 %v1324
    %v1392 = vpop.f32.mrf.mxu0
    %v1393 = vadd.f32 0.0, %v1392
    %v1394 = vpop.f32.mrf.mxu0
    %1395 = vdwg.mxu0
    %1396 = vrot.lane.b32.xlu0 %v150, 40
    %v1397 = vpop.permute.xlu0 %1396
    %v1400 = vsel %vm156, %v1319, 0
    %1402 = vmatprep.subr.mxu0 0.0
    %1403 = vmatpush1.msra.mxu0 0.0
    %1404 = vmatprep.subr.mxu0 0.0
    %1405 = vmatpush1.msra.mxu0 0.0
    %1406 = vmatprep.subr.mxu0 0.0
    %1407 = vmatpush1.msra.mxu0 0.0
    %1408 = vmatprep.subr.mxu0 0.0
    %1409 = vmatpush1.msra.mxu0 0.0
    %1410 = vmatprep.subr.mxu0 0.0
    %1411 = vmatpush1.msra.mxu0 0.0
    %1412 = vmatprep.subr.mxu0 0.0
    %1413 = vmatpush1.msra.mxu0 0.0
    %1414 = vmatprep.subr.mxu0 0.0
    %1415 = vmatpush1.msra.mxu0 0.0
    %1416 = vmatprep.subr.mxu0 0.0
    %1417 = vmatpush1.msra.mxu0 0.0
    %1418 = vmatprep.subr.mxu0 0.0
    %1419 = vmatpush1.msra.mxu0 0.0
    %1420 = vmatprep.subr.mxu0 0.0
    %1421 = vmatpush1.msra.mxu0 0.0
    %1422 = vmatprep.subr.mxu0 0.0
    %1423 = vmatpush1.msra.mxu0 0.0
    %1424 = vmatprep.subr.mxu0 0.0
    %1425 = vmatpush1.msra.mxu0 0.0
    %1426 = vmatprep.subr.mxu0 0.0
    %1427 = vmatpush1.msra.mxu0 0.0
    %1428 = vmatprep.subr.mxu0 0.0
    %1429 = vmatpush1.msra.mxu0 0.0
    %1430 = vmatprep.subr.mxu0 0.0
    %1431 = vmatpush1.msra.mxu0 0.0
    %1432 = vmatprep.subr.mxu0 0.0
    %1433 = vmatpush1.msra.mxu0 %v1397
    %1434 = vmatprep.subr.mxu0 0.0
    %1435 = vmatpush2.msra.mxu0 0.0
    %1436 = vmatprep.subr.mxu0 0.0
    %1437 = vmatpush2.msra.mxu0 0.0
    %1438 = vmatprep.subr.mxu0 0.0
    %1439 = vmatpush2.msra.mxu0 0.0
    %1440 = vmatprep.subr.mxu0 0.0
    %1441 = vmatpush2.msra.mxu0 0.0
    %1442 = vmatprep.subr.mxu0 0.0
    %1443 = vmatpush2.msra.mxu0 0.0
    %1444 = vmatprep.subr.mxu0 0.0
    %1445 = vmatpush2.msra.mxu0 0.0
    %1446 = vmatprep.subr.mxu0 0.0
    %1447 = vmatpush2.msra.mxu0 0.0
    %1448 = vmatprep.subr.mxu0 0.0
    %1449 = vmatpush2.msra.mxu0 0.0
    %1450 = vmatprep.subr.mxu0 0.0
    %1451 = vmatpush2.msra.mxu0 0.0
    %1452 = vmatprep.subr.mxu0 0.0
    %1453 = vmatpush2.msra.mxu0 0.0
    %1454 = vmatprep.subr.mxu0 0.0
    %1455 = vmatpush2.msra.mxu0 0.0
    %1456 = vmatprep.subr.mxu0 0.0
    %1457 = vmatpush2.msra.mxu0 0.0
    %1458 = vmatprep.subr.mxu0 0.0
    %1459 = vmatpush2.msra.mxu0 0.0
    %1460 = vmatprep.subr.mxu0 0.0
    %1461 = vmatpush2.msra.mxu0 0.0
    %1462 = vmatprep.subr.mxu0 0.0
    %1463 = vmatpush2.msra.mxu0 0.0
    %1464 = vmatprep.subr.mxu0 0.0
    %1465 = vmatpush2.msra.mxu0 0.0
    %1466 = vmatprep.mubr.f32.mxu0 0.0
    %1467 = vmatmul.mubr.f32.gmra.mxu0 %v1400
    %v1468 = vpop.f32.mrf.mxu0
    %v1469 = vadd.f32 0.0, %v1468
    %v1470 = vpop.f32.mrf.mxu0
    %1471 = vdwg.mxu0
    %1474 = vrot.lane.b32.xlu0 %v733, 8
    %v1475 = vpop.permute.xlu0 %1474
    %1476 = vrot.lane.b32.xlu0 %v809, 8
    %v1477 = vpop.permute.xlu0 %1476
    %1482 = vrot.lane.b32.xlu0 %v1063, 16
    %v1483 = vpop.permute.xlu0 %1482
    %1484 = vrot.lane.b32.xlu0 %v1139, 16
    %v1485 = vpop.permute.xlu0 %1484
    %1490 = vrot.lane.b32.xlu0 %v1393, 24
    %v1491 = vpop.permute.xlu0 %1490
    %1492 = vrot.lane.b32.xlu0 %v1469, 24
    %v1493 = vpop.permute.xlu0 %1492
    %v1496 = vsel %vm156, %v403, %v1475
    %v1497 = vsel %vm156, %v479, %v1477
    %vm1498 = vcmask 130048
    %v1499 = vsel %vm1498, %v1496, %v1483
    %v1500 = vsel %vm1498, %v1497, %v1485
    %vm1501 = vcmask 195584
    %v1502 = vsel %vm1501, %v1499, %v1491
    %v1503 = vsel %vm1501, %v1500, %v1493
    %v1504 = vld [vmem:[%s4] sm:$0xff]
    %v1505 = vld [vmem:[%s4 + $0x8] sm:$0xff]
    %v1506 = vld [vmem:[%s4 + $0x10] sm:$0xff]
    %v1507 = vld [vmem:[%s4 + $0x18] sm:$0xff]
    %v1508 = vld [vmem:[%s5] sm:$0x1]
    %v1510 = vlaneseq
    %v1511 = vshrl.u32 %v1510, 7
    %v1512 = vsub.s32 0, %v1511
    %v1513 = vrot.slane %v1508, %v1512
    %v1516 = vsel %vm71, %v1502, 0
    %v1519 = vsel %vm71, %v1503, 0
    %1521 = vmatprep.subr.mxu0 0.0
    %1522 = vmatpush1.msra.mxu0 0.0
    %1523 = vmatprep.subr.mxu0 0.0
    %1524 = vmatpush1.msra.mxu0 0.0
    %1525 = vmatprep.subr.mxu0 0.0
    %1526 = vmatpush1.msra.mxu0 0.0
    %1527 = vmatprep.subr.mxu0 0.0
    %1528 = vmatpush1.msra.mxu0 0.0
    %1529 = vmatprep.subr.mxu0 0.0
    %1530 = vmatpush1.msra.mxu0 0.0
    %1531 = vmatprep.subr.mxu0 0.0
    %1532 = vmatpush1.msra.mxu0 0.0
    %1533 = vmatprep.subr.mxu0 0.0
    %1534 = vmatpush1.msra.mxu0 0.0
    %1535 = vmatprep.subr.mxu0 0.0
    %1536 = vmatpush1.msra.mxu0 0.0
    %1537 = vmatprep.subr.mxu0 0.0
    %1538 = vmatpush1.msra.mxu0 0.0
    %1539 = vmatprep.subr.mxu0 0.0
    %1540 = vmatpush1.msra.mxu0 0.0
    %1541 = vmatprep.subr.mxu0 0.0
    %1542 = vmatpush1.msra.mxu0 0.0
    %1543 = vmatprep.subr.mxu0 0.0
    %1544 = vmatpush1.msra.mxu0 0.0
    %1545 = vmatprep.subr.mxu0 0.0
    %1546 = vmatpush1.msra.mxu0 %v1507
    %1547 = vmatprep.subr.mxu0 0.0
    %1548 = vmatpush1.msra.mxu0 %v1506
    %1549 = vmatprep.subr.mxu0 0.0
    %1550 = vmatpush1.msra.mxu0 %v1505
    %1551 = vmatprep.subr.mxu0 0.0
    %1552 = vmatpush1.msra.mxu0 %v1504
    %1553 = vmatprep.subr.mxu0 0.0
    %1554 = vmatpush2.msra.mxu0 0.0
    %1555 = vmatprep.subr.mxu0 0.0
    %1556 = vmatpush2.msra.mxu0 0.0
    %1557 = vmatprep.subr.mxu0 0.0
    %1558 = vmatpush2.msra.mxu0 0.0
    %1559 = vmatprep.subr.mxu0 0.0
    %1560 = vmatpush2.msra.mxu0 0.0
    %1561 = vmatprep.subr.mxu0 0.0
    %1562 = vmatpush2.msra.mxu0 0.0
    %1563 = vmatprep.subr.mxu0 0.0
    %1564 = vmatpush2.msra.mxu0 0.0
    %1565 = vmatprep.subr.mxu0 0.0
    %1566 = vmatpush2.msra.mxu0 0.0
    %1567 = vmatprep.subr.mxu0 0.0
    %1568 = vmatpush2.msra.mxu0 0.0
    %1569 = vmatprep.subr.mxu0 0.0
    %1570 = vmatpush2.msra.mxu0 0.0
    %1571 = vmatprep.subr.mxu0 0.0
    %1572 = vmatpush2.msra.mxu0 0.0
    %1573 = vmatprep.subr.mxu0 0.0
    %1574 = vmatpush2.msra.mxu0 0.0
    %1575 = vmatprep.subr.mxu0 0.0
    %1576 = vmatpush2.msra.mxu0 0.0
    %1577 = vmatprep.subr.mxu0 0.0
    %1578 = vmatpush2.msra.mxu0 0.0
    %1579 = vmatprep.subr.mxu0 0.0
    %1580 = vmatpush2.msra.mxu0 0.0
    %1581 = vmatprep.subr.mxu0 0.0
    %1582 = vmatpush2.msra.mxu0 0.0
    %1583 = vmatprep.subr.mxu0 0.0
    %1584 = vmatpush2.msra.mxu0 0.0
    %1585 = vmatprep.mubr.f32.mxu0 0.0
    %1586 = vmatmul.mubr.f32.gmra.mxu0 %v1516
    %v1587 = vpop.f32.mrf.mxu0
    %v1588 = vadd.f32 %v1513, %v1587
    %v1589 = vpop.f32.mrf.mxu0
    %1590 = vmatprep.mubr.f32.mxu0 0.0
    %1591 = vmatmul.mubr.f32.gmra.mxu0 %v1519
    %v1592 = vpop.f32.mrf.mxu0
    %v1593 = vadd.f32 %v1513, %v1592
    %v1594 = vpop.f32.mrf.mxu0
    %1595 = vdwg.mxu0
    %v1596 = vadd.f32 %v58, %v1588
    %v1597 = vadd.f32 %v59, %v1593
    %v1598 = vsel %vm71, %v1596, 0.0
    %1599 = vadd.xlane.f32.xlu0 %v1598
    %v1600 = vpop.xlane.xlu0 %1599
    %v1601 = vsel %vm71, %v1597, 0.0
    %1602 = vadd.xlane.f32.xlu0 %v1601
    %v1603 = vpop.xlane.xlu0 %1602
    %v1604 = vrcp.pop 32.0
    %v1605 = vmul.f32 %v1600, %v1604
    %v1606 = vmul.f32 %v1603, %v1604
    %v1607 = vsub.f32 %v1596, %v1605
    %v1608 = vsub.f32 %v1597, %v1606
    %v1609 = vmul.f32 %v1607, %v1607
    %v1610 = vmul.f32 %v1608, %v1608
    %v1611 = vsel %vm71, %v1609, 0.0
    %1612 = vadd.xlane.f32.xlu0 %v1611
    %v1613 = vpop.xlane.xlu0 %1612
    %v1614 = vsel %vm71, %v1610, 0.0
    %1615 = vadd.xlane.f32.xlu0 %v1614
    %v1616 = vpop.xlane.xlu0 %1615
    %v1617 = vmul.f32 %v1613, %v1604
    %v1618 = vmul.f32 %v1616, %v1604
    %v1619 = vadd.f32 %v1617, 1e-05
    %v1620 = vadd.f32 %v1618, 1e-05
    %v1621 = vrsqrt.pop %v1619
    %v1622 = vrsqrt.pop %v1620
    %v1623 = vmul.f32 %v1607, %v1621
    %v1624 = vmul.f32 %v1608, %v1622
    %v1625 = vld [vmem:[%s6] sm:$0x1]
    %v1627 = vlaneseq
    %v1628 = vshrl.u32 %v1627, 7
    %v1629 = vsub.s32 0, %v1628
    %v1630 = vrot.slane %v1625, %v1629
    %v1632 = vmul.f32 %v1623, %v1630
    %v1633 = vmul.f32 %v1624, %v1630
    %v1634 = vld [vmem:[%s7] sm:$0x1]
    %v1636 = vlaneseq
    %v1637 = vshrl.u32 %v1636, 7
    %v1638 = vsub.s32 0, %v1637
    %v1639 = vrot.slane %v1634, %v1638
    %v1641 = vadd.f32 %v1632, %v1639
    %v1642 = vadd.f32 %v1633, %v1639
    %v1643 = vld [vmem:[%s8] sm:$0xff]
    %v1644 = vld [vmem:[%s8 + $0x8] sm:$0xff]
    %v1645 = vld [vmem:[%s8 + $0x10] sm:$0xff]
    %v1646 = vld [vmem:[%s8 + $0x18] sm:$0xff]
    %v1647 = vld [vmem:[%s9] sm:$0x1]
    %v1649 = vlaneseq
    %v1650 = vshrl.u32 %v1649, 7
    %v1651 = vsub.s32 0, %v1650
    %v1652 = vrot.slane %v1647, %v1651
    %v1655 = vsel %vm71, %v1641, 0
    %v1658 = vsel %vm71, %v1642, 0
    %1660 = vmatprep.subr.mxu0 0.0
    %1661 = vmatpush1.msra.mxu0 0.0
    %1662 = vmatprep.subr.mxu0 0.0
    %1663 = vmatpush1.msra.mxu0 0.0
    %1664 = vmatprep.subr.mxu0 0.0
    %1665 = vmatpush1.msra.mxu0 0.0
    %1666 = vmatprep.subr.mxu0 0.0
    %1667 = vmatpush1.msra.mxu0 0.0
    %1668 = vmatprep.subr.mxu0 0.0
    %1669 = vmatpush1.msra.mxu0 0.0
    %1670 = vmatprep.subr.mxu0 0.0
    %1671 = vmatpush1.msra.mxu0 0.0
    %1672 = vmatprep.subr.mxu0 0.0
    %1673 = vmatpush1.msra.mxu0 0.0
    %1674 = vmatprep.subr.mxu0 0.0
    %1675 = vmatpush1.msra.mxu0 0.0
    %1676 = vmatprep.subr.mxu0 0.0
    %1677 = vmatpush1.msra.mxu0 0.0
    %1678 = vmatprep.subr.mxu0 0.0
    %1679 = vmatpush1.msra.mxu0 0.0
    %1680 = vmatprep.subr.mxu0 0.0
    %1681 = vmatpush1.msra.mxu0 0.0
    %1682 = vmatprep.subr.mxu0 0.0
    %1683 = vmatpush1.msra.mxu0 0.0
    %1684 = vmatprep.subr.mxu0 0.0
    %1685 = vmatpush1.msra.mxu0 %v1646
    %1686 = vmatprep.subr.mxu0 0.0
    %1687 = vmatpush1.msra.mxu0 %v1645
    %1688 = vmatprep.subr.mxu0 0.0
    %1689 = vmatpush1.msra.mxu0 %v1644
    %1690 = vmatprep.subr.mxu0 0.0
    %1691 = vmatpush1.msra.mxu0 %v1643
    %1692 = vmatprep.subr.mxu0 0.0
    %1693 = vmatpush2.msra.mxu0 0.0
    %1694 = vmatprep.subr.mxu0 0.0
    %1695 = vmatpush2.msra.mxu0 0.0
    %1696 = vmatprep.subr.mxu0 0.0
    %1697 = vmatpush2.msra.mxu0 0.0
    %1698 = vmatprep.subr.mxu0 0.0
    %1699 = vmatpush2.msra.mxu0 0.0
    %1700 = vmatprep.subr.mxu0 0.0
    %1701 = vmatpush2.msra.mxu0 0.0
    %1702 = vmatprep.subr.mxu0 0.0
    %1703 = vmatpush2.msra.mxu0 0.0
    %1704 = vmatprep.subr.mxu0 0.0
    %1705 = vmatpush2.msra.mxu0 0.0
    %1706 = vmatprep.subr.mxu0 0.0
    %1707 = vmatpush2.msra.mxu0 0.0
    %1708 = vmatprep.subr.mxu0 0.0
    %1709 = vmatpush2.msra.mxu0 0.0
    %1710 = vmatprep.subr.mxu0 0.0
    %1711 = vmatpush2.msra.mxu0 0.0
    %1712 = vmatprep.subr.mxu0 0.0
    %1713 = vmatpush2.msra.mxu0 0.0
    %1714 = vmatprep.subr.mxu0 0.0
    %1715 = vmatpush2.msra.mxu0 0.0
    %1716 = vmatprep.subr.mxu0 0.0
    %1717 = vmatpush2.msra.mxu0 0.0
    %1718 = vmatprep.subr.mxu0 0.0
    %1719 = vmatpush2.msra.mxu0 0.0
    %1720 = vmatprep.subr.mxu0 0.0
    %1721 = vmatpush2.msra.mxu0 0.0
    %1722 = vmatprep.subr.mxu0 0.0
    %1723 = vmatpush2.msra.mxu0 0.0
    %1724 = vmatprep.mubr.f32.mxu0 0.0
    %1725 = vmatmul.mubr.f32.gmra.mxu0 %v1655
    %v1726 = vpop.f32.mrf.mxu0
    %v1727 = vadd.f32 %v1652, %v1726
    %v1728 = vpop.f32.mrf.mxu0
    %1729 = vmatprep.mubr.f32.mxu0 0.0
    %1730 = vmatmul.mubr.f32.gmra.mxu0 %v1658
    %v1731 = vpop.f32.mrf.mxu0
    %v1732 = vadd.f32 %v1652, %v1731
    %v1733 = vpop.f32.mrf.mxu0
    %1734 = vdwg.mxu0
    %v1735 = vmax.f32 %v1727, 0.0
    %v1736 = vmax.f32 %v1732, 0.0
    %v1737 = vld [vmem:[%s10] sm:$0xff]
    %v1738 = vld [vmem:[%s10 + $0x8] sm:$0xff]
    %v1739 = vld [vmem:[%s10 + $0x10] sm:$0xff]
    %v1740 = vld [vmem:[%s10 + $0x18] sm:$0xff]
    %v1741 = vld [vmem:[%s10 + $0x20] sm:$0xff]
    %v1742 = vld [vmem:[%s10 + $0x28] sm:$0xff]
    %v1743 = vld [vmem:[%s10 + $0x30] sm:$0xff]
    %v1744 = vld [vmem:[%s10 + $0x38] sm:$0xff]
    %v1745 = vld [vmem:[%s11] sm:$0x1]
    %v1747 = vlaneseq
    %v1748 = vshrl.u32 %v1747, 7
    %v1749 = vsub.s32 0, %v1748
    %v1750 = vrot.slane %v1745, %v1749
    %vm1752 = vcmask 523264
    %v1754 = vsel %vm1752, %v1735, 0
    %v1757 = vsel %vm1752, %v1736, 0
    %1759 = vmatprep.subr.mxu0 0.0
    %1760 = vmatpush1.msra.mxu0 0.0
    %1761 = vmatprep.subr.mxu0 0.0
    %1762 = vmatpush1.msra.mxu0 0.0
    %1763 = vmatprep.subr.mxu0 0.0
    %1764 = vmatpush1.msra.mxu0 0.0
    %1765 = vmatprep.subr.mxu0 0.0
    %1766 = vmatpush1.msra.mxu0 0.0
    %1767 = vmatprep.subr.mxu0 0.0
    %1768 = vmatpush1.msra.mxu0 0.0
    %1769 = vmatprep.subr.mxu0 0.0
    %1770 = vmatpush1.msra.mxu0 0.0
    %1771 = vmatprep.subr.mxu0 0.0
    %1772 = vmatpush1.msra.mxu0 0.0
    %1773 = vmatprep.subr.mxu0 0.0
    %1774 = vmatpush1.msra.mxu0 0.0
    %1775 = vmatprep.subr.mxu0 0.0
    %1776 = vmatpush1.msra.mxu0 %v1744
    %1777 = vmatprep.subr.mxu0 0.0
    %1778 = vmatpush1.msra.mxu0 %v1743
    %1779 = vmatprep.subr.mxu0 0.0
    %1780 = vmatpush1.msra.mxu0 %v1742
    %1781 = vmatprep.subr.mxu0 0.0
    %1782 = vmatpush1.msra.mxu0 %v1741
    %1783 = vmatprep.subr.mxu0 0.0
    %1784 = vmatpush1.msra.mxu0 %v1740
    %1785 = vmatprep.subr.mxu0 0.0
    %1786 = vmatpush1.msra.mxu0 %v1739
    %1787 = vmatprep.subr.mxu0 0.0
    %1788 = vmatpush1.msra.mxu0 %v1738
    %1789 = vmatprep.subr.mxu0 0.0
    %1790 = vmatpush1.msra.mxu0 %v1737
    %1791 = vmatprep.subr.mxu0 0.0
    %1792 = vmatpush2.msra.mxu0 0.0
    %1793 = vmatprep.subr.mxu0 0.0
    %1794 = vmatpush2.msra.mxu0 0.0
    %1795 = vmatprep.subr.mxu0 0.0
    %1796 = vmatpush2.msra.mxu0 0.0
    %1797 = vmatprep.subr.mxu0 0.0
    %1798 = vmatpush2.msra.mxu0 0.0
    %1799 = vmatprep.subr.mxu0 0.0
    %1800 = vmatpush2.msra.mxu0 0.0
    %1801 = vmatprep.subr.mxu0 0.0
    %1802 = vmatpush2.msra.mxu0 0.0
    %1803 = vmatprep.subr.mxu0 0.0
    %1804 = vmatpush2.msra.mxu0 0.0
    %1805 = vmatprep.subr.mxu0 0.0
    %1806 = vmatpush2.msra.mxu0 0.0
    %1807 = vmatprep.subr.mxu0 0.0
    %1808 = vmatpush2.msra.mxu0 0.0
    %1809 = vmatprep.subr.mxu0 0.0
    %1810 = vmatpush2.msra.mxu0 0.0
    %1811 = vmatprep.subr.mxu0 0.0
    %1812 = vmatpush2.msra.mxu0 0.0
    %1813 = vmatprep.subr.mxu0 0.0
    %1814 = vmatpush2.msra.mxu0 0.0
    %1815 = vmatprep.subr.mxu0 0.0
    %1816 = vmatpush2.msra.mxu0 0.0
    %1817 = vmatprep.subr.mxu0 0.0
    %1818 = vmatpush2.msra.mxu0 0.0
    %1819 = vmatprep.subr.mxu0 0.0
    %1820 = vmatpush2.msra.mxu0 0.0
    %1821 = vmatprep.subr.mxu0 0.0
    %1822 = vmatpush2.msra.mxu0 0.0
    %1823 = vmatprep.mubr.f32.mxu0 0.0
    %1824 = vmatmul.mubr.f32.gmra.mxu0 %v1754
    %v1825 = vpop.f32.mrf.mxu0
    %v1826 = vadd.f32 %v1750, %v1825
    %v1827 = vpop.f32.mrf.mxu0
    %1828 = vmatprep.mubr.f32.mxu0 0.0
    %1829 = vmatmul.mubr.f32.gmra.mxu0 %v1757
    %v1830 = vpop.f32.mrf.mxu0
    %v1831 = vadd.f32 %v1750, %v1830
    %v1832 = vpop.f32.mrf.mxu0
    %1833 = vdwg.mxu0
    %v1834 = vadd.f32 %v1641, %v1826
    %v1835 = vadd.f32 %v1642, %v1831
    %v1836 = vsel %vm71, %v1834, 0.0
    %1837 = vadd.xlane.f32.xlu0 %v1836
    %v1838 = vpop.xlane.xlu0 %1837
    %v1839 = vsel %vm71, %v1835, 0.0
    %1840 = vadd.xlane.f32.xlu0 %v1839
    %v1841 = vpop.xlane.xlu0 %1840
    %v1842 = vmul.f32 %v1838, %v1604
    %v1843 = vmul.f32 %v1841, %v1604
    %v1844 = vsub.f32 %v1834, %v1842
    %v1845 = vsub.f32 %v1835, %v1843
    %v1846 = vmul.f32 %v1844, %v1844
    %v1847 = vmul.f32 %v1845, %v1845
    %v1848 = vsel %vm71, %v1846, 0.0
    %1849 = vadd.xlane.f32.xlu0 %v1848
    %v1850 = vpop.xlane.xlu0 %1849
    %v1851 = vsel %vm71, %v1847, 0.0
    %1852 = vadd.xlane.f32.xlu0 %v1851
    %v1853 = vpop.xlane.xlu0 %1852
    %v1854 = vmul.f32 %v1850, %v1604
    %v1855 = vmul.f32 %v1853, %v1604
    %v1856 = vadd.f32 %v1854, 1e-05
    %v1857 = vadd.f32 %v1855, 1e-05
    %v1858 = vrsqrt.pop %v1856
    %v1859 = vrsqrt.pop %v1857
    %v1860 = vmul.f32 %v1844, %v1858
    %v1861 = vmul.f32 %v1845, %v1859
    %v1862 = vld [vmem:[%s12] sm:$0x1]
    %v1864 = vlaneseq
    %v1865 = vshrl.u32 %v1864, 7
    %v1866 = vsub.s32 0, %v1865
    %v1867 = vrot.slane %v1862, %v1866
    %v1869 = vmul.f32 %v1860, %v1867
    %v1870 = vmul.f32 %v1861, %v1867
    %v1871 = vld [vmem:[%s13] sm:$0x1]
    %v1873 = vlaneseq
    %v1874 = vshrl.u32 %v1873, 7
    %v1875 = vsub.s32 0, %v1874
    %v1876 = vrot.slane %v1871, %v1875
    %v1878 = vadd.f32 %v1869, %v1876
    %v1879 = vadd.f32 %v1870, %v1876
  $region62: #{albert_encoder_forward.1} parent=0 // loop_footer
    %s57 = sadd.s32 1, %s53
  $region63: #{albert_encoder_forward.1} parent=0 // loop_footer_branch
    %52 = sbr.rel target = $region59
  $region64: #{albert_encoder_forward.1} parent=0 // loop_exit
    _
  %v1882 = vrot.slane %v59, 7
  %vm1883 = vcmask 1041409
  %v1884 = vsel %vm1883, %v1882, %v58
  %vm1886 = vcmask 254976
  %1887 = vst.msk [vmem:[%s14] sm:$0x3] %vm1886, %v1884
  // Predicated region
  $region65: #{albert_encoder_forward.1} parent=0 // pred_check
    _
  $region66: #{albert_encoder_forward.1} parent=0 // pred_check_branch
    %1889 = sbr.rel (0) target = $region68
  $region67: #{albert_encoder_forward.1} parent=0 // pred_region
    _
  $region68: #{albert_encoder_forward.1} parent=0 // pred_fallthru
    _
  // Predicated region
  $region69: #{albert_encoder_forward.1} parent=0 // pred_check
    _
  $region70: #{albert_encoder_forward.1} parent=0 // pred_check_branch
    %1891 = sbr.rel (0) target = $region72
  $region71: #{albert_encoder_forward.1} parent=0 // pred_region
    _
  $region72: #{albert_encoder_forward.1} parent=0 // pred_fallthru
    _

// kernel: albert_encoder_forward.1
$region0: #{albert_encoder_forward.1}
  #allocation0 [shape = 'u32[]', space=smem, size = 0x4, offset = 0x4, fixed_abs, tag = 'smem constant byte address 0x4 - core index']
  #allocation1 [shape = 'u32[144,128]{1,0:T(1,128)}', space=vmem, size = 0x12000, scoped, tag = 'internal scratch']
  %s0 = inlined_call_operand.vmem [shape: f32[2,8,32], index: 0, kind: input, shape index: {}]
  %s1 = inlined_call_operand.vmem [shape: f32[8,32], index: 1, kind: input, shape index: {}]
  %s2 = inlined_call_operand.vmem [shape: f32[32,96], index: 2, kind: input, shape index: {}]
  %s3 = inlined_call_operand.vmem [shape: f32[1,96], index: 3, kind: input, shape index: {}]
  %s4 = inlined_call_operand.vmem [shape: f32[32,32], index: 4, kind: input, shape index: {}]
  %s5 = inlined_call_operand.vmem [shape: f32[1,32], index: 5, kind: input, shape index: {}]
  %s6 = inlined_call_operand.vmem [shape: f32[1,32], index: 6, kind: input, shape index: {}]
  %s7 = inlined_call_operand.vmem [shape: f32[1,32], index: 7, kind: input, shape index: {}]
  %s8 = inlined_call_operand.vmem [shape: f32[32,64], index: 8, kind: input, shape index: {}]
  %s9 = inlined_call_operand.vmem [shape: f32[1,64], index: 9, kind: input, shape index: {}]
  %s10 = inlined_call_operand.vmem [shape: f32[64,32], index: 10, kind: input, shape index: {}]
  %s11 = inlined_call_operand.vmem [shape: f32[1,32], index: 11, kind: input, shape index: {}]
  %s12 = inlined_call_operand.vmem [shape: f32[1,32], index: 12, kind: input, shape index: {}]
  %s13 = inlined_call_operand.vmem [shape: f32[1,32], index: 13, kind: input, shape index: {}]
  %s14 = inlined_call_operand.vmem [shape: f32[1,2,32], index: 14, kind: output, shape index: {}]
  %s15 = sld [smem:[#allocation0]]
  $region73: #{albert_encoder_forward.1} parent=0
    _
  %s17 = ssub.s32 1, %s15
  %s18 = scalar_select 0, %s17, %s15
  // Predicated region
  $region2: #{albert_encoder_forward.1} parent=0 // pred_check
    _
  $region3: #{albert_encoder_forward.1} parent=0 // pred_check_branch
    %20 = sbr.rel (0) target = $region5
  $region4: #{albert_encoder_forward.1} parent=0 // pred_region
    _
  $region5: #{albert_encoder_forward.1} parent=0 // pred_fallthru
    _
  // Predicated region
  $region6: #{albert_encoder_forward.1} parent=0 // pred_check
    _
  $region7: #{albert_encoder_forward.1} parent=0 // pred_check_branch
    %22 = sbr.rel (0) target = $region9
  $region8: #{albert_encoder_forward.1} parent=0 // pred_region
    _
  $region9: #{albert_encoder_forward.1} parent=0 // pred_fallthru
    _
  // Predicated region
  $region10: #{albert_encoder_forward.1} parent=0 // pred_check
    _
  $region11: #{albert_encoder_forward.1} parent=0 // pred_check_branch
    %24 = sbr.rel (0) target = $region13
  $region12: #{albert_encoder_forward.1} parent=0 // pred_region
    _
  $region13: #{albert_encoder_forward.1} parent=0 // pred_fallthru
    _
  // Predicated region
  $region14: #{albert_encoder_forward.1} parent=0 // pred_check
    _
  $region15: #{albert_encoder_forward.1} parent=0 // pred_check_branch
    %26 = sbr.rel (0) target = $region17
  $region16: #{albert_encoder_forward.1} parent=0 // pred_region
    _
  $region17: #{albert_encoder_forward.1} parent=0 // pred_fallthru
    _
  // Predicated region
  $region18: #{albert_encoder_forward.1} parent=0 // pred_check
    _
  $region19: #{albert_encoder_forward.1} parent=0 // pred_check_branch
    %28 = sbr.rel (0) target = $region21
  $region20: #{albert_encoder_forward.1} parent=0 // pred_region
    _
  $region21: #{albert_encoder_forward.1} parent=0 // pred_fallthru
    _
  // Predicated region
  $region22: #{albert_encoder_forward.1} parent=0 // pred_check
    _
  $region23: #{albert_encoder_forward.1} parent=0 // pred_check_branch
    %30 = sbr.rel (0) target = $region25
  $region24: #{albert_encoder_forward.1} parent=0 // pred_region
    _
  $region25: #{albert_encoder_forward.1} parent=0 // pred_fallthru
    _
  // Predicated region
  $region26: #{albert_encoder_forward.1} parent=0 // pred_check
    _
  $region27: #{albert_encoder_forward.1} parent=0 // pred_check_branch
    %32 = sbr.rel (0) target = $region29
  $region28: #{albert_encoder_forward.1} parent=0 // pred_region
    _
  $region29: #{albert_encoder_forward.1} parent=0 // pred_fallthru
    _
  // Predicated region
  $region30: #{albert_encoder_forward.1} parent=0 // pred_check
    _
  $region31: #{albert_encoder_forward.1} parent=0 // pred_check_branch
    %34 = sbr.rel (0) target = $region33
  $region32: #{albert_encoder_forward.1} parent=0 // pred_region
    _
  $region33: #{albert_encoder_forward.1} parent=0 // pred_fallthru
    _
  // Predicated region
  $region34: #{albert_encoder_forward.1} parent=0 // pred_check
    _
  $region35: #{albert_encoder_forward.1} parent=0 // pred_check_branch
    %36 = sbr.rel (0) target = $region37
  $region36: #{albert_encoder_forward.1} parent=0 // pred_region
    _
  $region37: #{albert_encoder_forward.1} parent=0 // pred_fallthru
    _
  // Predicated region
  $region38: #{albert_encoder_forward.1} parent=0 // pred_check
    _
  $region39: #{albert_encoder_forward.1} parent=0 // pred_check_branch
    %38 = sbr.rel (0) target = $region41
  $region40: #{albert_encoder_forward.1} parent=0 // pred_region
    _
  $region41: #{albert_encoder_forward.1} parent=0 // pred_fallthru
    _
  // Predicated region
  $region42: #{albert_encoder_forward.1} parent=0 // pred_check
    _
  $region43: #{albert_encoder_forward.1} parent=0 // pred_check_branch
    %40 = sbr.rel (0) target = $region45
  $region44: #{albert_encoder_forward.1} parent=0 // pred_region
    _
  $region45: #{albert_encoder_forward.1} parent=0 // pred_fallthru
    _
  // Predicated region
  $region46: #{albert_encoder_forward.1} parent=0 // pred_check
    _
  $region47: #{albert_encoder_forward.1} parent=0 // pred_check_branch
    %42 = sbr.rel (0) target = $region49
  $region48: #{albert_encoder_forward.1} parent=0 // pred_region
    _
  $region49: #{albert_encoder_forward.1} parent=0 // pred_fallthru
    _
  // Predicated region
  $region50: #{albert_encoder_forward.1} parent=0 // pred_check
    _
  $region51: #{albert_encoder_forward.1} parent=0 // pred_check_branch
    %44 = sbr.rel (0) target = $region53
  $region52: #{albert_encoder_forward.1} parent=0 // pred_region
    _
  $region53: #{albert_encoder_forward.1} parent=0 // pred_fallthru
    _
  // Predicated region
  $region54: #{albert_encoder_forward.1} parent=0 // pred_check
    _
  $region55: #{albert_encoder_forward.1} parent=0 // pred_check_branch
    %46 = sbr.rel (0) target = $region57
  $region56: #{albert_encoder_forward.1} parent=0 // pred_region
    _
  $region57: #{albert_encoder_forward.1} parent=0 // pred_fallthru
    _
  %v47 = vld [vmem:[%s0] sm:$0xff]
  %v48 = vld [vmem:[%s0 + $0x8] sm:$0xff]
  %v49 = vld [vmem:[%s1] sm:$0xff]
  %v50 = vadd.f32 %v47, %v49
  %v51 = vadd.f32 %v48, %v49
  loop: start=0, step=1, limit=2
  $region58: #{albert_encoder_forward.1} parent=0 // loop_pre_header
    _
  $region59: #{albert_encoder_forward.1} parent=0 // loop_header
    %s53 = sphi 0, %s57
    %p54 = scmp.ge.s32.totalorder %s53, 2
    %v58 = vphi %v50, %v1878
    %v59 = vphi %v51, %v1879
  $region60: #{albert_encoder_forward.1} parent=0 // loop_header_branch
    %56 = sbr.rel (%p54) target = $region64
  $region61: #{albert_encoder_forward.1} parent=0 // loop_body
    %v60 = vld [vmem:[%s2] sm:$0xff]
    %v61 = vld [vmem:[%s2 + $0x8] sm:$0xff]
    %v62 = vld [vmem:[%s2 + $0x10] sm:$0xff]
    %v63 = vld [vmem:[%s2 + $0x18] sm:$0xff]
    %v64 = vld [vmem:[%s3] sm:$0x1]
    %v66 = vlaneseq
    %v67 = vshrl.u32 %v66, 7
    %v68 = vsub.s32 0, %v67
    %v69 = vrot.slane %v64, %v68
    %vm71 = vcmask 261120
    %v73 = vsel %vm71, %v58, 0
    %v76 = vsel %vm71, %v59, 0
    %78 = vmatprep.subr.mxu0 0.0
    %79 = vmatpush1.msra.mxu0 0.0
    %80 = vmatprep.subr.mxu0 0.0
    %81 = vmatpush1.msra.mxu0 0.0
    %82 = vmatprep.subr.mxu0 0.0
    %83 = vmatpush1.msra.mxu0 0.0
    %84 = vmatprep.subr.mxu0 0.0
    %85 = vmatpush1.msra.mxu0 0.0
    %86 = vmatprep.subr.mxu0 0.0
    %87 = vmatpush1.msra.mxu0 0.0
    %88 = vmatprep.subr.mxu0 0.0
    %89 = vmatpush1.msra.mxu0 0.0
    %90 = vmatprep.subr.mxu0 0.0
    %91 = vmatpush1.msra.mxu0 0.0
    %92 = vmatprep.subr.mxu0 0.0
    %93 = vmatpush1.msra.mxu0 0.0
    %94 = vmatprep.subr.mxu0 0.0
    %95 = vmatpush1.msra.mxu0 0.0
    %96 = vmatprep.subr.mxu0 0.0
    %97 = vmatpush1.msra.mxu0 0.0
    %98 = vmatprep.subr.mxu0 0.0
    %99 = vmatpush1.msra.mxu0 0.0
    %100 = vmatprep.subr.mxu0 0.0
    %101 = vmatpush1.msra.mxu0 0.0
    %102 = vmatprep.subr.mxu0 0.0
    %103 = vmatpush1.msra.mxu0 %v63
    %104 = vmatprep.subr.mxu0 0.0
    %105 = vmatpush1.msra.mxu0 %v62
    %106 = vmatprep.subr.mxu0 0.0
    %107 = vmatpush1.msra.mxu0 %v61
    %108 = vmatprep.subr.mxu0 0.0
    %109 = vmatpush1.msra.mxu0 %v60
    %110 = vmatprep.subr.mxu0 0.0
    %111 = vmatpush2.msra.mxu0 0.0
    %112 = vmatprep.subr.mxu0 0.0
    %113 = vmatpush2.msra.mxu0 0.0
    %114 = vmatprep.subr.mxu0 0.0
    %115 = vmatpush2.msra.mxu0 0.0
    %116 = vmatprep.subr.mxu0 0.0
    %117 = vmatpush2.msra.mxu0 0.0
    %118 = vmatprep.subr.mxu0 0.0
    %119 = vmatpush2.msra.mxu0 0.0
    %120 = vmatprep.subr.mxu0 0.0
    %121 = vmatpush2.msra.mxu0 0.0
    %122 = vmatprep.subr.mxu0 0.0
    %123 = vmatpush2.msra.mxu0 0.0
    %124 = vmatprep.subr.mxu0 0.0
    %125 = vmatpush2.msra.mxu0 0.0
    %126 = vmatprep.subr.mxu0 0.0
    %127 = vmatpush2.msra.mxu0 0.0
    %128 = vmatprep.subr.mxu0 0.0
    %129 = vmatpush2.msra.mxu0 0.0
    %130 = vmatprep.subr.mxu0 0.0
    %131 = vmatpush2.msra.mxu0 0.0
    %132 = vmatprep.subr.mxu0 0.0
    %133 = vmatpush2.msra.mxu0 0.0
    %134 = vmatprep.subr.mxu0 0.0
    %135 = vmatpush2.msra.mxu0 0.0
    %136 = vmatprep.subr.mxu0 0.0
    %137 = vmatpush2.msra.mxu0 0.0
    %138 = vmatprep.subr.mxu0 0.0
    %139 = vmatpush2.msra.mxu0 0.0
    %140 = vmatprep.subr.mxu0 0.0
    %141 = vmatpush2.msra.mxu0 0.0
    %142 = vmatprep.mubr.f32.mxu0 0.0
    %143 = vmatmul.mubr.f32.gmra.mxu0 %v73
    %v144 = vpop.f32.mrf.mxu0
    %v145 = vadd.f32 %v69, %v144
    %v146 = vpop.f32.mrf.mxu0
    %147 = vmatprep.mubr.f32.mxu0 0.0
    %148 = vmatmul.mubr.f32.gmra.mxu0 %v76
    %v149 = vpop.f32.mrf.mxu0
    %v150 = vadd.f32 %v69, %v149
    %v151 = vpop.f32.mrf.mxu0
    %152 = vdwg.mxu0
    %154 = vrot.lane.b32.xlu0 %v145, 96
    %v155 = vpop.permute.xlu0 %154
    %vm156 = vcmask 64512
    %v157 = vsel %vm156, %v145, 0
    %v159 = vsel %vm156, %v155, 0
    %161 = vmatprep.subr.mxu0 0.0
    %162 = vmatpush1.xpose.msra.mxu0 0.0
    %163 = vmatprep.subr.mxu0 0.0
    %164 = vmatpush1.xpose.msra.mxu0 0.0
    %165 = vmatprep.subr.mxu0 0.0
    %166 = vmatpush1.xpose.msra.mxu0 0.0
    %167 = vmatprep.subr.mxu0 0.0
    %168 = vmatpush1.xpose.msra.mxu0 0.0
    %169 = vmatprep.subr.mxu0 0.0
    %170 = vmatpush1.xpose.msra.mxu0 0.0
    %171 = vmatprep.subr.mxu0 0.0
    %172 = vmatpush1.xpose.msra.mxu0 0.0
    %173 = vmatprep.subr.mxu0 0.0
    %174 = vmatpush1.xpose.msra.mxu0 0.0
    %175 = vmatprep.subr.mxu0 0.0
    %176 = vmatpush1.xpose.msra.mxu0 0.0
    %177 = vmatprep.subr.mxu0 0.0
    %178 = vmatpush1.xpose.msra.mxu0 0.0
    %179 = vmatprep.subr.mxu0 0.0
    %180 = vmatpush1.xpose.msra.mxu0 0.0
    %181 = vmatprep.subr.mxu0 0.0
    %182 = vmatpush1.xpose.msra.mxu0 0.0
    %183 = vmatprep.subr.mxu0 0.0
    %184 = vmatpush1.xpose.msra.mxu0 0.0
    %185 = vmatprep.subr.mxu0 0.0
    %186 = vmatpush1.xpose.msra.mxu0 0.0
    %187 = vmatprep.subr.mxu0 0.0
    %188 = vmatpush1.xpose.msra.mxu0 0.0
    %189 = vmatprep.subr.mxu0 0.0
    %190 = vmatpush1.xpose.msra.mxu0 0.0
    %191 = vmatprep.subr.mxu0 0.0
    %192 = vmatpush1.xpose.msra.mxu0 %v159
    %193 = vmatprep.subr.mxu0 0.0
    %194 = vmatpush2.xpose.msra.mxu0 0.0
    %195 = vmatprep.subr.mxu0 0.0
    %196 = vmatpush2.xpose.msra.mxu0 0.0
    %197 = vmatprep.subr.mxu0 0.0
    %198 = vmatpush2.xpose.msra.mxu0 0.0
    %199 = vmatprep.subr.mxu0 0.0
    %200 = vmatpush2.xpose.msra.mxu0 0.0
    %201 = vmatprep.subr.mxu0 0.0
    %202 = vmatpush2.xpose.msra.mxu0 0.0
    %203 = vmatprep.subr.mxu0 0.0
    %204 = vmatpush2.xpose.msra.mxu0 0.0
    %205 = vmatprep.subr.mxu0 0.0
    %206 = vmatpush2.xpose.msra.mxu0 0.0
    %207 = vmatprep.subr.mxu0 0.0
    %208 = vmatpush2.xpose.msra.mxu0 0.0
    %209 = vmatprep.subr.mxu0 0.0
    %210 = vmatpush2.xpose.msra.mxu0 0.0
    %211 = vmatprep.subr.mxu0 0.0
    %212 = vmatpush2.xpose.msra.mxu0 0.0
    %213 = vmatprep.subr.mxu0 0.0
    %214 = vmatpush2.xpose.msra.mxu0 0.0
    %215 = vmatprep.subr.mxu0 0.0
    %216 = vmatpush2.xpose.msra.mxu0 0.0
    %217 = vmatprep.subr.mxu0 0.0
    %218 = vmatpush2.xpose.msra.mxu0 0.0
    %219 = vmatprep.subr.mxu0 0.0
    %220 = vmatpush2.xpose.msra.mxu0 0.0
    %221 = vmatprep.subr.mxu0 0.0
    %222 = vmatpush2.xpose.msra.mxu0 0.0
    %223 = vmatprep.subr.mxu0 0.0
    %224 = vmatpush2.xpose.msra.mxu0 0.0
    %225 = vmatprep.mubr.f32.mxu0 0.0
    %226 = vmatmul.mubr.f32.gmra.mxu0 %v157
    %v227 = vpop.f32.mrf.mxu0
    %v228 = vadd.f32 0.0, %v227
    %v229 = vpop.f32.mrf.mxu0
    %230 = vdwg.mxu0
    %232 = vrot.lane.b32.xlu0 %v150, 96
    %v233 = vpop.permute.xlu0 %232
    %v234 = vsel %vm156, %v150, 0
    %v236 = vsel %vm156, %v233, 0
    %238 = vmatprep.subr.mxu0 0.0
    %239 = vmatpush1.xpose.msra.mxu0 0.0
    %240 = vmatprep.subr.mxu0 0.0
    %241 = vmatpush1.xpose.msra.mxu0 0.0
    %242 = vmatprep.subr.mxu0 0.0
    %243 = vmatpush1.xpose.msra.mxu0 0.0
    %244 = vmatprep.subr.mxu0 0.0
    %245 = vmatpush1.xpose.msra.mxu0 0.0
    %246 = vmatprep.subr.mxu0 0.0
    %247 = vmatpush1.xpose.msra.mxu0 0.0
    %248 = vmatprep.subr.mxu0 0.0
    %249 = vmatpush1.xpose.msra.mxu0 0.0
    %250 = vmatprep.subr.mxu0 0.0
    %251 = vmatpush1.xpose.msra.mxu0 0.0
    %252 = vmatprep.subr.mxu0 0.0
    %253 = vmatpush1.xpose.msra.mxu0 0.0
    %254 = vmatprep.subr.mxu0 0.0
    %255 = vmatpush1.xpose.msra.mxu0 0.0
    %256 = vmatprep.subr.mxu0 0.0
    %257 = vmatpush1.xpose.msra.mxu0 0.0
    %258 = vmatprep.subr.mxu0 0.0
    %259 = vmatpush1.xpose.msra.mxu0 0.0
    %260 = vmatprep.subr.mxu0 0.0
    %261 = vmatpush1.xpose.msra.mxu0 0.0
    %262 = vmatprep.subr.mxu0 0.0
    %263 = vmatpush1.xpose.msra.mxu0 0.0
    %264 = vmatprep.subr.mxu0 0.0
    %265 = vmatpush1.xpose.msra.mxu0 0.0
    %266 = vmatprep.subr.mxu0 0.0
    %267 = vmatpush1.xpose.msra.mxu0 0.0
    %268 = vmatprep.subr.mxu0 0.0
    %269 = vmatpush1.xpose.msra.mxu0 %v236
    %270 = vmatprep.subr.mxu0 0.0
    %271 = vmatpush2.xpose.msra.mxu0 0.0
    %272 = vmatprep.subr.mxu0 0.0
    %273 = vmatpush2.xpose.msra.mxu0 0.0
    %274 = vmatprep.subr.mxu0 0.0
    %275 = vmatpush2.xpose.msra.mxu0 0.0
    %276 = vmatprep.subr.mxu0 0.0
    %277 = vmatpush2.xpose.msra.mxu0 0.0
    %278 = vmatprep.subr.mxu0 0.0
    %279 = vmatpush2.xpose.msra.mxu0 0.0
    %280 = vmatprep.subr.mxu0 0.0
    %281 = vmatpush2.xpose.msra.mxu0 0.0
    %282 = vmatprep.subr.mxu0 0.0
    %283 = vmatpush2.xpose.msra.mxu0 0.0
    %284 = vmatprep.subr.mxu0 0.0
    %285 = vmatpush2.xpose.msra.mxu0 0.0
    %286 = vmatprep.subr.mxu0 0.0
    %287 = vmatpush2.xpose.msra.mxu0 0.0
    %288 = vmatprep.subr.mxu0 0.0
    %289 = vmatpush2.xpose.msra.mxu0 0.0
    %290 = vmatprep.subr.mxu0 0.0
    %291 = vmatpush2.xpose.msra.mxu0 0.0
    %292 = vmatprep.subr.mxu0 0.0
    %293 = vmatpush2.xpose.msra.mxu0 0.0
    %294 = vmatprep.subr.mxu0 0.0
    %295 = vmatpush2.xpose.msra.mxu0 0.0
    %296 = vmatprep.subr.mxu0 0.0
    %297 = vmatpush2.xpose.msra.mxu0 0.0
    %298 = vmatprep.subr.mxu0 0.0
    %299 = vmatpush2.xpose.msra.mxu0 0.0
    %300 = vmatprep.subr.mxu0 0.0
    %301 = vmatpush2.xpose.msra.mxu0 0.0
    %302 = vmatprep.mubr.f32.mxu0 0.0
    %303 = vmatmul.mubr.f32.gmra.mxu0 %v234
    %v304 = vpop.f32.mrf.mxu0
    %v305 = vadd.f32 0.0, %v304
    %v306 = vpop.f32.mrf.mxu0
    %307 = vdwg.mxu0
    %v308 = vsel %vm156, %v228, -inf
    %309 = vmax.xlane.f32.xlu0 %v308
    %v310 = vpop.xlane.xlu0 %309
    %v311 = vsel %vm156, %v305, -inf
    %312 = vmax.xlane.f32.xlu0 %v311
    %v313 = vpop.xlane.xlu0 %312
    %v314 = vsub.f32 %v228, %v310
    %v315 = vsub.f32 %v305, %v313
    %v316 = vmul.f32 %v314, 1.442695
    %v317 = vpow.pop %v316
    %v318 = vmul.f32 %v315, 1.442695
    %v319 = vpow.pop %v318
    %v320 = vsel %vm156, %v317, 0.0
    %321 = vadd.xlane.f32.xlu0 %v320
    %v322 = vpop.xlane.xlu0 %321
    %v323 = vsel %vm156, %v319, 0.0
    %324 = vadd.xlane.f32.xlu0 %v323
    %v325 = vpop.xlane.xlu0 %324
    %v326 = vrcp.pop %v322
    %v327 = vrcp.pop %v325
    %v328 = vmul.f32 %v317, %v326
    %v329 = vmul.f32 %v319, %v327
    %330 = vrot.lane.b32.xlu0 %v145, 64
    %v331 = vpop.permute.xlu0 %330
    %v334 = vsel %vm156, %v328, 0
    %336 = vmatprep.subr.mxu0 0.0
    %337 = vmatpush1.msra.mxu0 0.0
    %338 = vmatprep.subr.mxu0 0.0
    %339 = vmatpush1.msra.mxu0 0.0
    %340 = vmatprep.subr.mxu0 0.0
    %341 = vmatpush1.msra.mxu0 0.0
    %342 = vmatprep.subr.mxu0 0.0
    %343 = vmatpush1.msra.mxu0 0.0
    %344 = vmatprep.subr.mxu0 0.0
    %345 = vmatpush1.msra.mxu0 0.0
    %346 = vmatprep.subr.mxu0 0.0
    %347 = vmatpush1.msra.mxu0 0.0
    %348 = vmatprep.subr.mxu0 0.0
    %349 = vmatpush1.msra.mxu0 0.0
    %350 = vmatprep.subr.mxu0 0.0
    %351 = vmatpush1.msra.mxu0 0.0
    %352 = vmatprep.subr.mxu0 0.0
    %353 = vmatpush1.msra.mxu0 0.0
    %354 = vmatprep.subr.mxu0 0.0
    %355 = vmatpush1.msra.mxu0 0.0
    %356 = vmatprep.subr.mxu0 0.0
    %357 = vmatpush1.msra.mxu0 0.0
    %358 = vmatprep.subr.mxu0 0.0
    %359 = vmatpush1.msra.mxu0 0.0
    %360 = vmatprep.subr.mxu0 0.0
    %361 = vmatpush1.msra.mxu0 0.0
    %362 = vmatprep.subr.mxu0 0.0
    %363 = vmatpush1.msra.mxu0 0.0
    %364 = vmatprep.subr.mxu0 0.0
    %365 = vmatpush1.msra.mxu0 0.0
    %366 = vmatprep.subr.mxu0 0.0
    %367 = vmatpush1.msra.mxu0 %v331
    %368 = vmatprep.subr.mxu0 0.0
    %369 = vmatpush2.msra.mxu0 0.0
    %370 = vmatprep.subr.mxu0 0.0
    %371 = vmatpush2.msra.mxu0 0.0
    %372 = vmatprep.subr.mxu0 0.0
    %373 = vmatpush2.msra.mxu0 0.0
    %374 = vmatprep.subr.mxu0 0.0
    %375 = vmatpush2.msra.mxu0 0.0
    %376 = vmatprep.subr.mxu0 0.0
    %377 = vmatpush2.msra.mxu0 0.0
    %378 = vmatprep.subr.mxu0 0.0
    %379 = vmatpush2.msra.mxu0 0.0
    %380 = vmatprep.subr.mxu0 0.0
    %381 = vmatpush2.msra.mxu0 0.0
    %382 = vmatprep.subr.mxu0 0.0
    %383 = vmatpush2.msra.mxu0 0.0
    %384 = vmatprep.subr.mxu0 0.0
    %385 = vmatpush2.msra.mxu0 0.0
    %386 = vmatprep.subr.mxu0 0.0
    %387 = vmatpush2.msra.mxu0 0.0
    %388 = vmatprep.subr.mxu0 0.0
    %389 = vmatpush2.msra.mxu0 0.0
    %390 = vmatprep.subr.mxu0 0.0
    %391 = vmatpush2.msra.mxu0 0.0
    %392 = vmatprep.subr.mxu0 0.0
    %393 = vmatpush2.msra.mxu0 0.0
    %394 = vmatprep.subr.mxu0 0.0
    %395 = vmatpush2.msra.mxu0 0.0
    %396 = vmatprep.subr.mxu0 0.0
    %397 = vmatpush2.msra.mxu0 0.0
    %398 = vmatprep.subr.mxu0 0.0
    %399 = vmatpush2.msra.mxu0 0.0
    %400 = vmatprep.mubr.f32.mxu0 0.0
    %401 = vmatmul.mubr.f32.gmra.mxu0 %v334
    %v402 = vpop.f32.mrf.mxu0
    %v403 = vadd.f32 0.0, %v402
    %v404 = vpop.f32.mrf.mxu0
    %405 = vdwg.mxu0
    %406 = vrot.lane.b32.xlu0 %v150, 64
    %v407 = vpop.permute.xlu0 %406
    %v410 = vsel %vm156, %v329, 0
    %412 = vmatprep.subr.mxu0 0.0
    %413 = vmatpush1.msra.mxu0 0.0
    %414 = vmatprep.subr.mxu0 0.0
    %415 = vmatpush1.msra.mxu0 0.0
    %416 = vmatprep.subr.mxu0 0.0
    %417 = vmatpush1.msra.mxu0 0.0
    %418 = vmatprep.subr.mxu0 0.0
    %419 = vmatpush1.msra.mxu0 0.0
    %420 = vmatprep.subr.mxu0 0.0
    %421 = vmatpush1.msra.mxu0 0.0
    %422 = vmatprep.subr.mxu0 0.0
    %423 = vmatpush1.msra.mxu0 0.0
    %424 = vmatprep.subr.mxu0 0.0
    %425 = vmatpush1.msra.mxu0 0.0
    %426 = vmatprep.subr.mxu0 0.0
    %427 = vmatpush1.msra.mxu0 0.0
    %428 = vmatprep.subr.mxu0 0.0
    %429 = vmatpush1.msra.mxu0 0.0
    %430 = vmatprep.subr.mxu0 0.0
    %431 = vmatpush1.msra.mxu0 0.0
    %432 = vmatprep.subr.mxu0 0.0
    %433 = vmatpush1.msra.mxu0 0.0
    %434 = vmatprep.subr.mxu0 0.0
    %435 = vmatpush1.msra.mxu0 0.0
    %436 = vmatprep.subr.mxu0 0.0
    %437 = vmatpush1.msra.mxu0 0.0
    %438 = vmatprep.subr.mxu0 0.0
    %439 = vmatpush1.msra.mxu0 0.0
    %440 = vmatprep.subr.mxu0 0.0
    %441 = vmatpush1.msra.mxu0 0.0
    %442 = vmatprep.subr.mxu0 0.0
    %443 = vmatpush1.msra.mxu0 %v407
    %444 = vmatprep.subr.mxu0 0.0
    %445 = vmatpush2.msra.mxu0 0.0
    %446 = vmatprep.subr.mxu0 0.0
    %447 = vmatpush2.msra.mxu0 0.0
    %448 = vmatprep.subr.mxu0 0.0
    %449 = vmatpush2.msra.mxu0 0.0
    %450 = vmatprep.subr.mxu0 0.0
    %451 = vmatpush2.msra.mxu0 0.0
    %452 = vmatprep.subr.mxu0 0.0
    %453 = vmatpush2.msra.mxu0 0.0
    %454 = vmatprep.subr.mxu0 0.0
    %455 = vmatpush2.msra.mxu0 0.0
    %456 = vmatprep.subr.mxu0 0.0
    %457 = vmatpush2.msra.mxu0 0.0
    %458 = vmatprep.subr.mxu0 0.0
    %459 = vmatpush2.msra.mxu0 0.0
    %460 = vmatprep.subr.mxu0 0.0
    %461 = vmatpush2.msra.mxu0 0.0
    %462 = vmatprep.subr.mxu0 0.0
    %463 = vmatpush2.msra.mxu0 0.0
    %464 = vmatprep.subr.mxu0 0.0
    %465 = vmatpush2.msra.mxu0 0.0
    %466 = vmatprep.subr.mxu0 0.0
    %467 = vmatpush2.msra.mxu0 0.0
    %468 = vmatprep.subr.mxu0 0.0
    %469 = vmatpush2.msra.mxu0 0.0
    %470 = vmatprep.subr.mxu0 0.0
    %471 = vmatpush2.msra.mxu0 0.0
    %472 = vmatprep.subr.mxu0 0.0
    %473 = vmatpush2.msra.mxu0 0.0
    %474 = vmatprep.subr.mxu0 0.0
    %475 = vmatpush2.msra.mxu0 0.0
    %476 = vmatprep.mubr.f32.mxu0 0.0
    %477 = vmatmul.mubr.f32.gmra.mxu0 %v410
    %v478 = vpop.f32.mrf.mxu0
    %v479 = vadd.f32 0.0, %v478
    %v480 = vpop.f32.mrf.mxu0
    %481 = vdwg.mxu0
    %482 = vrot.lane.b32.xlu0 %v145, 120
    %v483 = vpop.permute.xlu0 %482
    %484 = vrot.lane.b32.xlu0 %v145, 88
    %v485 = vpop.permute.xlu0 %484
    %v486 = vsel %vm156, %v483, 0
    %v488 = vsel %vm156, %v485, 0
    %490 = vmatprep.subr.mxu0 0.0
    %491 = vmatpush1.xpose.msra.mxu0 0.0
    %492 = vmatprep.subr.mxu0 0.0
    %493 = vmatpush1.xpose.msra.mxu0 0.0
    %494 = vmatprep.subr.mxu0 0.0
    %495 = vmatpush1.xpose.msra.mxu0 0.0
    %496 = vmatprep.subr.mxu0 0.0
    %497 = vmatpush1.xpose.msra.mxu0 0.0
    %498 = vmatprep.subr.mxu0 0.0
    %499 = vmatpush1.xpose.msra.mxu0 0.0
    %500 = vmatprep.subr.mxu0 0.0
    %501 = vmatpush1.xpose.msra.mxu0 0.0
    %502 = vmatprep.subr.mxu0 0.0
    %503 = vmatpush1.xpose.msra.mxu0 0.0
    %504 = vmatprep.subr.mxu0 0.0
    %505 = vmatpush1.xpose.msra.mxu0 0.0
    %506 = vmatprep.subr.mxu0 0.0
    %507 = vmatpush1.xpose.msra.mxu0 0.0
    %508 = vmatprep.subr.mxu0 0.0
    %509 = vmatpush1.xpose.msra.mxu0 0.0
    %510 = vmatprep.subr.mxu0 0.0
    %511 = vmatpush1.xpose.msra.mxu0 0.0
    %512 = vmatprep.subr.mxu0 0.0
    %513 = vmatpush1.xpose.msra.mxu0 0.0
    %514 = vmatprep.subr.mxu0 0.0
    %515 = vmatpush1.xpose.msra.mxu0 0.0
    %516 = vmatprep.subr.mxu0 0.0
    %517 = vmatpush1.xpose.msra.mxu0 0.0
    %518 = vmatprep.subr.mxu0 0.0
    %519 = vmatpush1.xpose.msra.mxu0 0.0
    %520 = vmatprep.subr.mxu0 0.0
    %521 = vmatpush1.xpose.msra.mxu0 %v488
    %522 = vmatprep.subr.mxu0 0.0
    %523 = vmatpush2.xpose.msra.mxu0 0.0
    %524 = vmatprep.subr.mxu0 0.0
    %525 = vmatpush2.xpose.msra.mxu0 0.0
    %526 = vmatprep.subr.mxu0 0.0
    %527 = vmatpush2.xpose.msra.mxu0 0.0
    %528 = vmatprep.subr.mxu0 0.0
    %529 = vmatpush2.xpose.msra.mxu0 0.0
    %530 = vmatprep.subr.mxu0 0.0
    %531 = vmatpush2.xpose.msra.mxu0 0.0
    %532 = vmatprep.subr.mxu0 0.0
    %533 = vmatpush2.xpose.msra.mxu0 0.0
    %534 = vmatprep.subr.mxu0 0.0
    %535 = vmatpush2.xpose.msra.mxu0 0.0
    %536 = vmatprep.subr.mxu0 0.0
    %537 = vmatpush2.xpose.msra.mxu0 0.0
    %538 = vmatprep.subr.mxu0 0.0
    %539 = vmatpush2.xpose.msra.mxu0 0.0
    %540 = vmatprep.subr.mxu0 0.0
    %541 = vmatpush2.xpose.msra.mxu0 0.0
    %542 = vmatprep.subr.mxu0 0.0
    %543 = vmatpush2.xpose.msra.mxu0 0.0
    %544 = vmatprep.subr.mxu0 0.0
    %545 = vmatpush2.xpose.msra.mxu0 0.0
    %546 = vmatprep.subr.mxu0 0.0
    %547 = vmatpush2.xpose.msra.mxu0 0.0
    %548 = vmatprep.subr.mxu0 0.0
    %549 = vmatpush2.xpose.msra.mxu0 0.0
    %550 = vmatprep.subr.mxu0 0.0
    %551 = vmatpush2.xpose.msra.mxu0 0.0
    %552 = vmatprep.subr.mxu0 0.0
    %553 = vmatpush2.xpose.msra.mxu0 0.0
    %554 = vmatprep.mubr.f32.mxu0 0.0
    %555 = vmatmul.mubr.f32.gmra.mxu0 %v486
    %v556 = vpop.f32.mrf.mxu0
    %v557 = vadd.f32 0.0, %v556
    %v558 = vpop.f32.mrf.mxu0
    %559 = vdwg.mxu0
    %560 = vrot.lane.b32.xlu0 %v150, 120
    %v561 = vpop.permute.xlu0 %560
    %562 = vrot.lane.b32.xlu0 %v150, 88
    %v563 = vpop.permute.xlu0 %562
    %v564 = vsel %vm156, %v561, 0
    %v566 = vsel %vm156, %v563, 0
    %568 = vmatprep.subr.mxu0 0.0
    %569 = vmatpush1.xpose.msra.mxu0 0.0
    %570 = vmatprep.subr.mxu0 0.0
    %571 = vmatpush1.xpose.msra.mxu0 0.0
    %572 = vmatprep.subr.mxu0 0.0
    %573 = vmatpush1.xpose.msra.mxu0 0.0
    %574 = vmatprep.subr.mxu0 0.0
    %575 = vmatpush1.xpose.msra.mxu0 0.0
    %576 = vmatprep.subr.mxu0 0.0
    %577 = vmatpush1.xpose.msra.mxu0 0.0
    %578 = vmatprep.subr.mxu0 0.0
    %579 = vmatpush1.xpose.msra.mxu0 0.0
    %580 = vmatprep.subr.mxu0 0.0
    %581 = vmatpush1.xpose.msra.mxu0 0.0
    %582 = vmatprep.subr.mxu0 0.0
    %583 = vmatpush1.xpose.msra.mxu0 0.0
    %584 = vmatprep.subr.mxu0 0.0
    %585 = vmatpush1.xpose.msra.mxu0 0.0
    %586 = vmatprep.subr.mxu0 0.0
    %587 = vmatpush1.xpose.msra.mxu0 0.0
    %588 = vmatprep.subr.mxu0 0.0
    %589 = vmatpush1.xpose.msra.mxu0 0.0
    %590 = vmatprep.subr.mxu0 0.0
    %591 = vmatpush1.xpose.msra.mxu0 0.0
    %592 = vmatprep.subr.mxu0 0.0
    %593 = vmatpush1.xpose.msra.mxu0 0.0
    %594 = vmatprep.subr.mxu0 0.0
    %595 = vmatpush1.xpose.msra.mxu0 0.0
    %596 = vmatprep.subr.mxu0 0.0
    %597 = vmatpush1.xpose.msra.mxu0 0.0
    %598 = vmatprep.subr.mxu0 0.0
    %599 = vmatpush1.xpose.msra.mxu0 %v566
    %600 = vmatprep.subr.mxu0 0.0
    %601 = vmatpush2.xpose.msra.mxu0 0.0
    %602 = vmatprep.subr.mxu0 0.0
    %603 = vmatpush2.xpose.msra.mxu0 0.0
    %604 = vmatprep.subr.mxu0 0.0
    %605 = vmatpush2.xpose.msra.mxu0 0.0
    %606 = vmatprep.subr.mxu0 0.0
    %607 = vmatpush2.xpose.msra.mxu0 0.0
    %608 = vmatprep.subr.mxu0 0.0
    %609 = vmatpush2.xpose.msra.mxu0 0.0
    %610 = vmatprep.subr.mxu0 0.0
    %611 = vmatpush2.xpose.msra.mxu0 0.0
    %612 = vmatprep.subr.mxu0 0.0
    %613 = vmatpush2.xpose.msra.mxu0 0.0
    %614 = vmatprep.subr.mxu0 0.0
    %615 = vmatpush2.xpose.msra.mxu0 0.0
    %616 = vmatprep.subr.mxu0 0.0
    %617 = vmatpush2.xpose.msra.mxu0 0.0
    %618 = vmatprep.subr.mxu0 0.0
    %619 = vmatpush2.xpose.msra.mxu0 0.0
    %620 = vmatprep.subr.mxu0 0.0
    %621 = vmatpush2.xpose.msra.mxu0 0.0
    %622 = vmatprep.subr.mxu0 0.0
    %623 = vmatpush2.xpose.msra.mxu0 0.0
    %624 = vmatprep.subr.mxu0 0.0
    %625 = vmatpush2.xpose.msra.mxu0 0.0
    %626 = vmatprep.subr.mxu0 0.0
    %627 = vmatpush2.xpose.msra.mxu0 0.0
    %628 = vmatprep.subr.mxu0 0.0
    %629 = vmatpush2.xpose.msra.mxu0 0.0
    %630 = vmatprep.subr.mxu0 0.0
    %631 = vmatpush2.xpose.msra.mxu0 0.0
    %632 = vmatprep.mubr.f32.mxu0 0.0
    %633 = vmatmul.mubr.f32.gmra.mxu0 %v564
    %v634 = vpop.f32.mrf.mxu0
    %v635 = vadd.f32 0.0, %v634
    %v636 = vpop.f32.mrf.mxu0
    %637 = vdwg.mxu0
    %v638 = vsel %vm156, %v557, -inf
    %639 = vmax.xlane.f32.xlu0 %v638
    %v640 = vpop.xlane.xlu0 %639
    %v641 = vsel %vm156, %v635, -inf
    %642 = vmax.xlane.f32.xlu0 %v641
    %v643 = vpop.xlane.xlu0 %642
    %v644 = vsub.f32 %v557, %v640
    %v645 = vsub.f32 %v635, %v643
    %v646 = vmul.f32 %v644, 1.442695
    %v647 = vpow.pop %v646
    %v648 = vmul.f32 %v645, 1.442695
    %v649 = vpow.pop %v648
    %v650 = vsel %vm156, %v647, 0.0
    %651 = vadd.xlane.f32.xlu0 %v650
    %v652 = vpop.xlane.xlu0 %651
    %v653 = vsel %vm156, %v649, 0.0
    %654 = vadd.xlane.f32.xlu0 %v653
    %v655 = vpop.xlane.xlu0 %654
    %v656 = vrcp.pop %v652
    %v657 = vrcp.pop %v655
    %v658 = vmul.f32 %v647, %v656
    %v659 = vmul.f32 %v649, %v657
    %660 = vrot.lane.b32.xlu0 %v145, 56
    %v661 = vpop.permute.xlu0 %660
    %v664 = vsel %vm156, %v658, 0
    %666 = vmatprep.subr.mxu0 0.0
    %667 = vmatpush1.msra.mxu0 0.0
    %668 = vmatprep.subr.mxu0 0.0
    %669 = vmatpush1.msra.mxu0 0.0
    %670 = vmatprep.subr.mxu0 0.0
    %671 = vmatpush1.msra.mxu0 0.0
    %672 = vmatprep.subr.mxu0 0.0
    %673 = vmatpush1.msra.mxu0 0.0
    %674 = vmatprep.subr.mxu0 0.0
    %675 = vmatpush1.msra.mxu0 0.0
    %676 = vmatprep.subr.mxu0 0.0
    %677 = vmatpush1.msra.mxu0 0.0
    %678 = vmatprep.subr.mxu0 0.0
    %679 = vmatpush1.msra.mxu0 0.0
    %680 = vmatprep.subr.mxu0 0.0
    %681 = vmatpush1.msra.mxu0 0.0
    %682 = vmatprep.subr.mxu0 0.0
    %683 = vmatpush1.msra.mxu0 0.0
    %684 = vmatprep.subr.mxu0 0.0
    %685 = vmatpush1.msra.mxu0 0.0
    %686 = vmatprep.subr.mxu0 0.0
    %687 = vmatpush1.msra.mxu0 0.0
    %688 = vmatprep.subr.mxu0 0.0
    %689 = vmatpush1.msra.mxu0 0.0
    %690 = vmatprep.subr.mxu0 0.0
    %691 = vmatpush1.msra.mxu0 0.0
    %692 = vmatprep.subr.mxu0 0.0
    %693 = vmatpush1.msra.mxu0 0.0
    %694 = vmatprep.subr.mxu0 0.0
    %695 = vmatpush1.msra.mxu0 0.0
    %696 = vmatprep.subr.mxu0 0.0
    %697 = vmatpush1.msra.mxu0 %v661
    %698 = vmatprep.subr.mxu0 0.0
    %699 = vmatpush2.msra.mxu0 0.0
    %700 = vmatprep.subr.mxu0 0.0
    %701 = vmatpush2.msra.mxu0 0.0
    %702 = vmatprep.subr.mxu0 0.0
    %703 = vmatpush2.msra.mxu0 0.0
    %704 = vmatprep.subr.mxu0 0.0
    %705 = vmatpush2.msra.mxu0 0.0
    %706 = vmatprep.subr.mxu0 0.0
    %707 = vmatpush2.msra.mxu0 0.0
    %708 = vmatprep.subr.mxu0 0.0
    %709 = vmatpush2.msra.mxu0 0.0
    %710 = vmatprep.subr.mxu0 0.0
    %711 = vmatpush2.msra.mxu0 0.0
    %712 = vmatprep.subr.mxu0 0.0
    %713 = vmatpush2.msra.mxu0 0.0
    %714 = vmatprep.subr.mxu0 0.0
    %715 = vmatpush2.msra.mxu0 0.0
    %716 = vmatprep.subr.mxu0 0.0
    %717 = vmatpush2.msra.mxu0 0.0
    %718 = vmatprep.subr.mxu0 0.0
    %719 = vmatpush2.msra.mxu0 0.0
    %720 = vmatprep.subr.mxu0 0.0
    %721 = vmatpush2.msra.mxu0 0.0
    %722 = vmatprep.subr.mxu0 0.0
    %723 = vmatpush2.msra.mxu0 0.0
    %724 = vmatprep.subr.mxu0 0.0
    %725 = vmatpush2.msra.mxu0 0.0
    %726 = vmatprep.subr.mxu0 0.0
    %727 = vmatpush2.msra.mxu0 0.0
    %728 = vmatprep.subr.mxu0 0.0
    %729 = vmatpush2.msra.mxu0 0.0
    %730 = vmatprep.mubr.f32.mxu0 0.0
    %731 = vmatmul.mubr.f32.gmra.mxu0 %v664
    %v732 = vpop.f32.mrf.mxu0
    %v733 = vadd.f32 0.0, %v732
    %v734 = vpop.f32.mrf.mxu0
    %735 = vdwg.mxu0
    %736 = vrot.lane.b32.xlu0 %v150, 56
    %v737 = vpop.permute.xlu0 %736
    %v740 = vsel %vm156, %v659, 0
    %742 = vmatprep.subr.mxu0 0.0
    %743 = vmatpush1.msra.mxu0 0.0
    %744 = vmatprep.subr.mxu0 0.0
    %745 = vmatpush1.msra.mxu0 0.0
    %746 = vmatprep.subr.mxu0 0.0
    %747 = vmatpush1.msra.mxu0 0.0
    %748 = vmatprep.subr.mxu0 0.0
    %749 = vmatpush1.msra.mxu0 0.0
    %750 = vmatprep.subr.mxu0 0.0
    %751 = vmatpush1.msra.mxu0 0.0
    %752 = vmatprep.subr.mxu0 0.0
    %753 = vmatpush1.msra.mxu0 0.0
    %754 = vmatprep.subr.mxu0 0.0
    %755 = vmatpush1.msra.mxu0 0.0
    %756 = vmatprep.subr.mxu0 0.0
    %757 = vmatpush1.msra.mxu0 0.0
    %758 = vmatprep.subr.mxu0 0.0
    %759 = vmatpush1.msra.mxu0 0.0
    %760 = vmatprep.subr.mxu0 0.0
    %761 = vmatpush1.msra.mxu0 0.0
    %762 = vmatprep.subr.mxu0 0.0
    %763 = vmatpush1.msra.mxu0 0.0
    %764 = vmatprep.subr.mxu0 0.0
    %765 = vmatpush1.msra.mxu0 0.0
    %766 = vmatprep.subr.mxu0 0.0
    %767 = vmatpush1.msra.mxu0 0.0
    %768 = vmatprep.subr.mxu0 0.0
    %769 = vmatpush1.msra.mxu0 0.0
    %770 = vmatprep.subr.mxu0 0.0
    %771 = vmatpush1.msra.mxu0 0.0
    %772 = vmatprep.subr.mxu0 0.0
    %773 = vmatpush1.msra.mxu0 %v737
    %774 = vmatprep.subr.mxu0 0.0
    %775 = vmatpush2.msra.mxu0 0.0
    %776 = vmatprep.subr.mxu0 0.0
    %777 = vmatpush2.msra.mxu0 0.0
    %778 = vmatprep.subr.mxu0 0.0
    %779 = vmatpush2.msra.mxu0 0.0
    %780 = vmatprep.subr.mxu0 0.0
    %781 = vmatpush2.msra.mxu0 0.0
    %782 = vmatprep.subr.mxu0 0.0
    %783 = vmatpush2.msra.mxu0 0.0
    %784 = vmatprep.subr.mxu0 0.0
    %785 = vmatpush2.msra.mxu0 0.0
    %786 = vmatprep.subr.mxu0 0.0
    %787 = vmatpush2.msra.mxu0 0.0
    %788 = vmatprep.subr.mxu0 0.0
    %789 = vmatpush2.msra.mxu0 0.0
    %790 = vmatprep.subr.mxu0 0.0
    %791 = vmatpush2.msra.mxu0 0.0
    %792 = vmatprep.subr.mxu0 0.0
    %793 = vmatpush2.msra.mxu0 0.0
    %794 = vmatprep.subr.mxu0 0.0
    %795 = vmatpush2.msra.mxu0 0.0
    %796 = vmatprep.subr.mxu0 0.0
    %797 = vmatpush2.msra.mxu0 0.0
    %798 = vmatprep.subr.mxu0 0.0
    %799 = vmatpush2.msra.mxu0 0.0
    %800 = vmatprep.subr.mxu0 0.0
    %801 = vmatpush2.msra.mxu0 0.0
    %802 = vmatprep.subr.mxu0 0.0
    %803 = vmatpush2.msra.mxu0 0.0
    %804 = vmatprep.subr.mxu0 0.0
    %805 = vmatpush2.msra.mxu0 0.0
    %806 = vmatprep.mubr.f32.mxu0 0.0
    %807 = vmatmul.mubr.f32.gmra.mxu0 %v740
    %v808 = vpop.f32.mrf.mxu0
    %v809 = vadd.f32 0.0, %v808
    %v810 = vpop.f32.mrf.mxu0
    %811 = vdwg.mxu0
    %812 = vrot.lane.b32.xlu0 %v145, 112
    %v813 = vpop.permute.xlu0 %812
    %814 = vrot.lane.b32.xlu0 %v145, 80
    %v815 = vpop.permute.xlu0 %814
    %v816 = vsel %vm156, %v813, 0
    %v818 = vsel %vm156, %v815, 0
    %820 = vmatprep.subr.mxu0 0.0
    %821 = vmatpush1.xpose.msra.mxu0 0.0
    %822 = vmatprep.subr.mxu0 0.0
    %823 = vmatpush1.xpose.msra.mxu0 0.0
    %824 = vmatprep.subr.mxu0 0.0
    %825 = vmatpush1.xpose.msra.mxu0 0.0
    %826 = vmatprep.subr.mxu0 0.0
    %827 = vmatpush1.xpose.msra.mxu0 0.0
    %828 = vmatprep.subr.mxu0 0.0
    %829 = vmatpush1.xpose.msra.mxu0 0.0
    %830 = vmatprep.subr.mxu0 0.0
    %831 = vmatpush1.xpose.msra.mxu0 0.0
    %832 = vmatprep.subr.mxu0 0.0
    %833 = vmatpush1.xpose.msra.mxu0 0.0
    %834 = vmatprep.subr.mxu0 0.0
    %835 = vmatpush1.xpose.msra.mxu0 0.0
    %836 = vmatprep.subr.mxu0 0.0
    %837 = vmatpush1.xpose.msra.mxu0 0.0
    %838 = vmatprep.subr.mxu0 0.0
    %839 = vmatpush1.xpose.msra.mxu0 0.0
    %840 = vmatprep.subr.mxu0 0.0
    %841 = vmatpush1.xpose.msra.mxu0 0.0
    %842 = vmatprep.subr.mxu0 0.0
    %843 = vmatpush1.xpose.msra.mxu0 0.0
    %844 = vmatprep.subr.mxu0 0.0
    %845 = vmatpush1.xpose.msra.mxu0 0.0
    %846 = vmatprep.subr.mxu0 0.0
    %847 = vmatpush1.xpose.msra.mxu0 0.0
    %848 = vmatprep.subr.mxu0 0.0
    %849 = vmatpush1.xpose.msra.mxu0 0.0
    %850 = vmatprep.subr.mxu0 0.0
    %851 = vmatpush1.xpose.msra.mxu0 %v818
    %852 = vmatprep.subr.mxu0 0.0
    %853 = vmatpush2.xpose.msra.mxu0 0.0
    %854 = vmatprep.subr.mxu0 0.0
    %855 = vmatpush2.xpose.msra.mxu0 0.0
    %856 = vmatprep.subr.mxu0 0.0
    %857 = vmatpush2.xpose.msra.mxu0 0.0
    %858 = vmatprep.subr.mxu0 0.0
    %859 = vmatpush2.xpose.msra.mxu0 0.0
    %860 = vmatprep.subr.mxu0 0.0
    %861 = vmatpush2.xpose.msra.mxu0 0.0
    %862 = vmatprep.subr.mxu0 0.0
    %863 = vmatpush2.xpose.msra.mxu0 0.0
    %864 = vmatprep.subr.mxu0 0.0
    %865 = vmatpush2.xpose.msra.mxu0 0.0
    %866 = vmatprep.subr.mxu0 0.0
    %867 = vmatpush2.xpose.msra.mxu0 0.0
    %868 = vmatprep.subr.mxu0 0.0
    %869 = vmatpush2.xpose.msra.mxu0 0.0
    %870 = vmatprep.subr.mxu0 0.0
    %871 = vmatpush2.xpose.msra.mxu0 0.0
    %872 = vmatprep.subr.mxu0 0.0
    %873 = vmatpush2.xpose.msra.mxu0 0.0
    %874 = vmatprep.subr.mxu0 0.0
    %875 = vmatpush2.xpose.msra.mxu0 0.0
    %876 = vmatprep.subr.mxu0 0.0
    %877 = vmatpush2.xpose.msra.mxu0 0.0
    %878 = vmatprep.subr.mxu0 0.0
    %879 = vmatpush2.xpose.msra.mxu0 0.0
    %880 = vmatprep.subr.mxu0 0.0
    %881 = vmatpush2.xpose.msra.mxu0 0.0
    %882 = vmatprep.subr.mxu0 0.0
    %883 = vmatpush2.xpose.msra.mxu0 0.0
    %884 = vmatprep.mubr.f32.mxu0 0.0
    %885 = vmatmul.mubr.f32.gmra.mxu0 %v816
    %v886 = vpop.f32.mrf.mxu0
    %v887 = vadd.f32 0.0, %v886
    %v888 = vpop.f32.mrf.mxu0
    %889 = vdwg.mxu0
    %890 = vrot.lane.b32.xlu0 %v150, 112
    %v891 = vpop.permute.xlu0 %890
    %892 = vrot.lane.b32.xlu0 %v150, 80
    %v893 = vpop.permute.xlu0 %892
    %v894 = vsel %vm156, %v891, 0
    %v896 = vsel %vm156, %v893, 0
    %898 = vmatprep.subr.mxu0 0.0
    %899 = vmatpush1.xpose.msra.mxu0 0.0
    %900 = vmatprep.subr.mxu0 0.0
    %901 = vmatpush1.xpose.msra.mxu0 0.0
    %902 = vmatprep.subr.mxu0 0.0
    %903 = vmatpush1.xpose.msra.mxu0 0.0
    %904 = vmatprep.subr.mxu0 0.0
    %905 = vmatpush1.xpose.msra.mxu0 0.0
    %906 = vmatprep.subr.mxu0 0.0
    %907 = vmatpush1.xpose.msra.mxu0 0.0
    %908 = vmatprep.subr.mxu0 0.0
    %909 = vmatpush1.xpose.msra.mxu0 0.0
    %910 = vmatprep.subr.mxu0 0.0
    %911 = vmatpush1.xpose.msra.mxu0 0.0
    %912 = vmatprep.subr.mxu0 0.0
    %913 = vmatpush1.xpose.msra.mxu0 0.0
    %914 = vmatprep.subr.mxu0 0.0
    %915 = vmatpush1.xpose.msra.mxu0 0.0
    %916 = vmatprep.subr.mxu0 0.0
    %917 = vmatpush1.xpose.msra.mxu0 0.0
    %918 = vmatprep.subr.mxu0 0.0
    %919 = vmatpush1.xpose.msra.mxu0 0.0
    %920 = vmatprep.subr.mxu0 0.0
    %921 = vmatpush1.xpose.msra.mxu0 0.0
    %922 = vmatprep.subr.mxu0 0.0
    %923 = vmatpush1.xpose.msra.mxu0 0.0
    %924 = vmatprep.subr.mxu0 0.0
    %925 = vmatpush1.xpose.msra.mxu0 0.0
    %926 = vmatprep.subr.mxu0 0.0
    %927 = vmatpush1.xpose.msra.mxu0 0.0
    %928 = vmatprep.subr.mxu0 0.0
    %929 = vmatpush1.xpose.msra.mxu0 %v896
    %930 = vmatprep.subr.mxu0 0.0
    %931 = vmatpush2.xpose.msra.mxu0 0.0
    %932 = vmatprep.subr.mxu0 0.0
    %933 = vmatpush2.xpose.msra.mxu0 0.0
    %934 = vmatprep.subr.mxu0 0.0
    %935 = vmatpush2.xpose.msra.mxu0 0.0
    %936 = vmatprep.subr.mxu0 0.0
    %937 = vmatpush2.xpose.msra.mxu0 0.0
    %938 = vmatprep.subr.mxu0 0.0
    %939 = vmatpush2.xpose.msra.mxu0 0.0
    %940 = vmatprep.subr.mxu0 0.0
    %941 = vmatpush2.xpose.msra.mxu0 0.0
    %942 = vmatprep.subr.mxu0 0.0
    %943 = vmatpush2.xpose.msra.mxu0 0.0
    %944 = vmatprep.subr.mxu0 0.0
    %945 = vmatpush2.xpose.msra.mxu0 0.0
    %946 = vmatprep.subr.mxu0 0.0
    %947 = vmatpush2.xpose.msra.mxu0 0.0
    %948 = vmatprep.subr.mxu0 0.0
    %949 = vmatpush2.xpose.msra.mxu0 0.0
    %950 = vmatprep.subr.mxu0 0.0
    %951 = vmatpush2.xpose.msra.mxu0 0.0
    %952 = vmatprep.subr.mxu0 0.0
    %953 = vmatpush2.xpose.msra.mxu0 0.0
    %954 = vmatprep.subr.mxu0 0.0
    %955 = vmatpush2.xpose.msra.mxu0 0.0
    %956 = vmatprep.subr.mxu0 0.0
    %957 = vmatpush2.xpose.msra.mxu0 0.0
    %958 = vmatprep.subr.mxu0 0.0
    %959 = vmatpush2.xpose.msra.mxu0 0.0
    %960 = vmatprep.subr.mxu0 0.0
    %961 = vmatpush2.xpose.msra.mxu0 0.0
    %962 = vmatprep.mubr.f32.mxu0 0.0
    %963 = vmatmul.mubr.f32.gmra.mxu0 %v894
    %v964 = vpop.f32.mrf.mxu0
    %v965 = vadd.f32 0.0, %v964
    %v966 = vpop.f32.mrf.mxu0
    %967 = vdwg.mxu0
    %v968 = vsel %vm156, %v887, -inf
    %969 = vmax.xlane.f32.xlu0 %v968
    %v970 = vpop.xlane.xlu0 %969
    %v971 = vsel %vm156, %v965, -inf
    %972 = vmax.xlane.f32.xlu0 %v971
    %v973 = vpop.xlane.xlu0 %972
    %v974 = vsub.f32 %v887, %v970
    %v975 = vsub.f32 %v965, %v973
    %v976 = vmul.f32 %v974, 1.442695
    %v977 = vpow.pop %v976
    %v978 = vmul.f32 %v975, 1.442695
    %v979 = vpow.pop %v978
    %v980 = vsel %vm156, %v977, 0.0
    %981 = vadd.xlane.f32.xlu0 %v980
    %v982 = vpop.xlane.xlu0 %981
    %v983 = vsel %vm156, %v979, 0.0
    %984 = vadd.xlane.f32.xlu0 %v983
    %v985 = vpop.xlane.xlu0 %984
    %v986 = vrcp.pop %v982
    %v987 = vrcp.pop %v985
    %v988 = vmul.f32 %v977, %v986
    %v989 = vmul.f32 %v979, %v987
    %990 = vrot.lane.b32.xlu0 %v145, 48
    %v991 = vpop.permute.xlu0 %990
    %v994 = vsel %vm156, %v988, 0
    %996 = vmatprep.subr.mxu0 0.0
    %997 = vmatpush1.msra.mxu0 0.0
    %998 = vmatprep.subr.mxu0 0.0
    %999 = vmatpush1.msra.mxu0 0.0
    %1000 = vmatprep.subr.mxu0 0.0
    %1001 = vmatpush1.msra.mxu0 0.0
    %1002 = vmatprep.subr.mxu0 0.0
    %1003 = vmatpush1.msra.mxu0 0.0
    %1004 = vmatprep.subr.mxu0 0.0
    %1005 = vmatpush1.msra.mxu0 0.0
    %1006 = vmatprep.subr.mxu0 0.0
    %1007 = vmatpush1.msra.mxu0 0.0
    %1008 = vmatprep.subr.mxu0 0.0
    %1009 = vmatpush1.msra.mxu0 0.0
    %1010 = vmatprep.subr.mxu0 0.0
    %1011 = vmatpush1.msra.mxu0 0.0
    %1012 = vmatprep.subr.mxu0 0.0
    %1013 = vmatpush1.msra.mxu0 0.0
    %1014 = vmatprep.subr.mxu0 0.0
    %1015 = vmatpush1.msra.mxu0 0.0
    %1016 = vmatprep.subr.mxu0 0.0
    %1017 = vmatpush1.msra.mxu0 0.0
    %1018 = vmatprep.subr.mxu0 0.0
    %1019 = vmatpush1.msra.mxu0 0.0
    %1020 = vmatprep.subr.mxu0 0.0
    %1021 = vmatpush1.msra.mxu0 0.0
    %1022 = vmatprep.subr.mxu0 0.0
    %1023 = vmatpush1.msra.mxu0 0.0
    %1024 = vmatprep.subr.mxu0 0.0
    %1025 = vmatpush1.msra.mxu0 0.0
    %1026 = vmatprep.subr.mxu0 0.0
    %1027 = vmatpush1.msra.mxu0 %v991
    %1028 = vmatprep.subr.mxu0 0.0
    %1029 = vmatpush2.msra.mxu0 0.0
    %1030 = vmatprep.subr.mxu0 0.0
    %1031 = vmatpush2.msra.mxu0 0.0
    %1032 = vmatprep.subr.mxu0 0.0
    %1033 = vmatpush2.msra.mxu0 0.0
    %1034 = vmatprep.subr.mxu0 0.0
    %1035 = vmatpush2.msra.mxu0 0.0
    %1036 = vmatprep.subr.mxu0 0.0
    %1037 = vmatpush2.msra.mxu0 0.0
    %1038 = vmatprep.subr.mxu0 0.0
    %1039 = vmatpush2.msra.mxu0 0.0
    %1040 = vmatprep.subr.mxu0 0.0
    %1041 = vmatpush2.msra.mxu0 0.0
    %1042 = vmatprep.subr.mxu0 0.0
    %1043 = vmatpush2.msra.mxu0 0.0
    %1044 = vmatprep.subr.mxu0 0.0
    %1045 = vmatpush2.msra.mxu0 0.0
    %1046 = vmatprep.subr.mxu0 0.0
    %1047 = vmatpush2.msra.mxu0 0.0
    %1048 = vmatprep.subr.mxu0 0.0
    %1049 = vmatpush2.msra.mxu0 0.0
    %1050 = vmatprep.subr.mxu0 0.0
    %1051 = vmatpush2.msra.mxu0 0.0
    %1052 = vmatprep.subr.mxu0 0.0
    %1053 = vmatpush2.msra.mxu0 0.0
    %1054 = vmatprep.subr.mxu0 0.0
    %1055 = vmatpush2.msra.mxu0 0.0
    %1056 = vmatprep.subr.mxu0 0.0
    %1057 = vmatpush2.msra.mxu0 0.0
    %1058 = vmatprep.subr.mxu0 0.0
    %1059 = vmatpush2.msra.mxu0 0.0
    %1060 = vmatprep.mubr.f32.mxu0 0.0
    %1061 = vmatmul.mubr.f32.gmra.mxu0 %v994
    %v1062 = vpop.f32.mrf.mxu0
    %v1063 = vadd.f32 0.0, %v1062
    %v1064 = vpop.f32.mrf.mxu0
    %1065 = vdwg.mxu0
    %1066 = vrot.lane.b32.xlu0 %v150, 48
    %v1067 = vpop.permute.xlu0 %1066
    %v1070 = vsel %vm156, %v989, 0
    %1072 = vmatprep.subr.mxu0 0.0
    %1073 = vmatpush1.msra.mxu0 0.0
    %1074 = vmatprep.subr.mxu0 0.0
    %1075 = vmatpush1.msra.mxu0 0.0
    %1076 = vmatprep.subr.mxu0 0.0
    %1077 = vmatpush1.msra.mxu0 0.0
    %1078 = vmatprep.subr.mxu0 0.0
    %1079 = vmatpush1.msra.mxu0 0.0
    %1080 = vmatprep.subr.mxu0 0.0
    %1081 = vmatpush1.msra.mxu0 0.0
    %1082 = vmatprep.subr.mxu0 0.0
    %1083 = vmatpush1.msra.mxu0 0.0
    %1084 = vmatprep.subr.mxu0 0.0
    %1085 = vmatpush1.msra.mxu0 0.0
    %1086 = vmatprep.subr.mxu0 0.0
    %1087 = vmatpush1.msra.mxu0 0.0
    %1088 = vmatprep.subr.mxu0 0.0
    %1089 = vmatpush1.msra.mxu0 0.0
    %1090 = vmatprep.subr.mxu0 0.0
    %1091 = vmatpush1.msra.mxu0 0.0
    %1092 = vmatprep.subr.mxu0 0.0
    %1093 = vmatpush1.msra.mxu0 0.0
    %1094 = vmatprep.subr.mxu0 0.0
    %1095 = vmatpush1.msra.mxu0 0.0
    %1096 = vmatprep.subr.mxu0 0.0
    %1097 = vmatpush1.msra.mxu0 0.0
    %1098 = vmatprep.subr.mxu0 0.0
    %1099 = vmatpush1.msra.mxu0 0.0
    %1100 = vmatprep.subr.mxu0 0.0
    %1101 = vmatpush1.msra.mxu0 0.0
    %1102 = vmatprep.subr.mxu0 0.0
    %1103 = vmatpush1.msra.mxu0 %v1067
    %1104 = vmatprep.subr.mxu0 0.0
    %1105 = vmatpush2.msra.mxu0 0.0
    %1106 = vmatprep.subr.mxu0 0.0
    %1107 = vmatpush2.msra.mxu0 0.0
    %1108 = vmatprep.subr.mxu0 0.0
    %1109 = vmatpush2.msra.mxu0 0.0
    %1110 = vmatprep.subr.mxu0 0.0
    %1111 = vmatpush2.msra.mxu0 0.0
    %1112 = vmatprep.subr.mxu0 0.0
    %1113 = vmatpush2.msra.mxu0 0.0
    %1114 = vmatprep.subr.mxu0 0.0
    %1115 = vmatpush2.msra.mxu0 0.0
    %1116 = vmatprep.subr.mxu0 0.0
    %1117 = vmatpush2.msra.mxu0 0.0
    %1118 = vmatprep.subr.mxu0 0.0
    %1119 = vmatpush2.msra.mxu0 0.0
    %1120 = vmatprep.subr.mxu0 0.0
    %1121 = vmatpush2.msra.mxu0 0.0
    %1122 = vmatprep.subr.mxu0 0.0
    %1123 = vmatpush2.msra.mxu0 0.0
    %1124 = vmatprep.subr.mxu0 0.0
    %1125 = vmatpush2.msra.mxu0 0.0
    %1126 = vmatprep.subr.mxu0 0.0
    %1127 = vmatpush2.msra.mxu0 0.0
    %1128 = vmatprep.subr.mxu0 0.0
    %1129 = vmatpush2.msra.mxu0 0.0
    %1130 = vmatprep.subr.mxu0 0.0
    %1131 = vmatpush2.msra.mxu0 0.0
    %1132 = vmatprep.subr.mxu0 0.0
    %1133 = vmatpush2.msra.mxu0 0.0
    %1134 = vmatprep.subr.mxu0 0.0
    %1135 = vmatpush2.msra.mxu0 0.0
    %1136 = vmatprep.mubr.f32.mxu0 0.0
    %1137 = vmatmul.mubr.f32.gmra.mxu0 %v1070
    %v1138 = vpop.f32.mrf.mxu0
    %v1139 = vadd.f32 0.0, %v1138
    %v1140 = vpop.f32.mrf.mxu0
    %1141 = vdwg.mxu0
    %1142 = vrot.lane.b32.xlu0 %v145, 104
    %v1143 = vpop.permute.xlu0 %1142
    %1144 = vrot.lane.b32.xlu0 %v145, 72
    %v1145 = vpop.permute.xlu0 %1144
    %v1146 = vsel %vm156, %v1143, 0
    %v1148 = vsel %vm156, %v1145, 0
    %1150 = vmatprep.subr.mxu0 0.0
    %1151 = vmatpush1.xpose.msra.mxu0 0.0
    %1152 = vmatprep.subr.mxu0 0.0
    %1153 = vmatpush1.xpose.msra.mxu0 0.0
    %1154 = vmatprep.subr.mxu0 0.0
    %1155 = vmatpush1.xpose.msra.mxu0 0.0
    %1156 = vmatprep.subr.mxu0 0.0
    %1157 = vmatpush1.xpose.msra.mxu0 0.0
    %1158 = vmatprep.subr.mxu0 0.0
    %1159 = vmatpush1.xpose.msra.mxu0 0.0
    %1160 = vmatprep.subr.mxu0 0.0
    %1161 = vmatpush1.xpose.msra.mxu0 0.0
    %1162 = vmatprep.subr.mxu0 0.0
    %1163 = vmatpush1.xpose.msra.mxu0 0.0
    %1164 = vmatprep.subr.mxu0 0.0
    %1165 = vmatpush1.xpose.msra.mxu0 0.0
    %1166 = vmatprep.subr.mxu0 0.0
    %1167 = vmatpush1.xpose.msra.mxu0 0.0
    %1168 = vmatprep.subr.mxu0 0.0
    %1169 = vmatpush1.xpose.msra.mxu0 0.0
    %1170 = vmatprep.subr.mxu0 0.0
    %1171 = vmatpush1.xpose.msra.mxu0 0.0
    %1172 = vmatprep.subr.mxu0 0.0
    %1173 = vmatpush1.xpose.msra.mxu0 0.0
    %1174 = vmatprep.subr.mxu0 0.0
    %1175 = vmatpush1.xpose.msra.mxu0 0.0
    %1176 = vmatprep.subr.mxu0 0.0
    %1177 = vmatpush1.xpose.msra.mxu0 0.0
    %1178 = vmatprep.subr.mxu0 0.0
    %1179 = vmatpush1.xpose.msra.mxu0 0.0
    %1180 = vmatprep.subr.mxu0 0.0
    %1181 = vmatpush1.xpose.msra.mxu0 %v1148
    %1182 = vmatprep.subr.mxu0 0.0
    %1183 = vmatpush2.xpose.msra.mxu0 0.0
    %1184 = vmatprep.subr.mxu0 0.0
    %1185 = vmatpush2.xpose.msra.mxu0 0.0
    %1186 = vmatprep.subr.mxu0 0.0
    %1187 = vmatpush2.xpose.msra.mxu0 0.0
    %1188 = vmatprep.subr.mxu0 0.0
    %1189 = vmatpush2.xpose.msra.mxu0 0.0
    %1190 = vmatprep.subr.mxu0 0.0
    %1191 = vmatpush2.xpose.msra.mxu0 0.0
    %1192 = vmatprep.subr.mxu0 0.0
    %1193 = vmatpush2.xpose.msra.mxu0 0.0
    %1194 = vmatprep.subr.mxu0 0.0
    %1195 = vmatpush2.xpose.msra.mxu0 0.0
    %1196 = vmatprep.subr.mxu0 0.0
    %1197 = vmatpush2.xpose.msra.mxu0 0.0
    %1198 = vmatprep.subr.mxu0 0.0
    %1199 = vmatpush2.xpose.msra.mxu0 0.0
    %1200 = vmatprep.subr.mxu0 0.0
    %1201 = vmatpush2.xpose.msra.mxu0 0.0
    %1202 = vmatprep.subr.mxu0 0.0
    %1203 = vmatpush2.xpose.msra.mxu0 0.0
    %1204 = vmatprep.subr.mxu0 0.0
    %1205 = vmatpush2.xpose.msra.mxu0 0.0
    %1206 = vmatprep.subr.mxu0 0.0
    %1207 = vmatpush2.xpose.msra.mxu0 0.0
    %1208 = vmatprep.subr.mxu0 0.0
    %1209 = vmatpush2.xpose.msra.mxu0 0.0
    %1210 = vmatprep.subr.mxu0 0.0
    %1211 = vmatpush2.xpose.msra.mxu0 0.0
    %1212 = vmatprep.subr.mxu0 0.0
    %1213 = vmatpush2.xpose.msra.mxu0 0.0
    %1214 = vmatprep.mubr.f32.mxu0 0.0
    %1215 = vmatmul.mubr.f32.gmra.mxu0 %v1146
    %v1216 = vpop.f32.mrf.mxu0
    %v1217 = vadd.f32 0.0, %v1216
    %v1218 = vpop.f32.mrf.mxu0
    %1219 = vdwg.mxu0
    %1220 = vrot.lane.b32.xlu0 %v150, 104
    %v1221 = vpop.permute.xlu0 %1220
    %1222 = vrot.lane.b32.xlu0 %v150, 72
    %v1223 = vpop.permute.xlu0 %1222
    %v1224 = vsel %vm156, %v1221, 0
    %v1226 = vsel %vm156, %v1223, 0
    %1228 = vmatprep.subr.mxu0 0.0
    %1229 = vmatpush1.xpose.msra.mxu0 0.0
    %1230 = vmatprep.subr.mxu0 0.0
    %1231 = vmatpush1.xpose.msra.mxu0 0.0
    %1232 = vmatprep.subr.mxu0 0.0
    %1233 = vmatpush1.xpose.msra.mxu0 0.0
    %1234 = vmatprep.subr.mxu0 0.0
    %1235 = vmatpush1.xpose.msra.mxu0 0.0
    %1236 = vmatprep.subr.mxu0 0.0
    %1237 = vmatpush1.xpose.msra.mxu0 0.0
    %1238 = vmatprep.subr.mxu0 0.0
    %1239 = vmatpush1.xpose.msra.mxu0 0.0
    %1240 = vmatprep.subr.mxu0 0.0
    %1241 = vmatpush1.xpose.msra.mxu0 0.0
    %1242 = vmatprep.subr.mxu0 0.0
    %1243 = vmatpush1.xpose.msra.mxu0 0.0
    %1244 = vmatprep.subr.mxu0 0.0
    %1245 = vmatpush1.xpose.msra.mxu0 0.0
    %1246 = vmatprep.subr.mxu0 0.0
    %1247 = vmatpush1.xpose.msra.mxu0 0.0
    %1248 = vmatprep.subr.mxu0 0.0
    %1249 = vmatpush1.xpose.msra.mxu0 0.0
    %1250 = vmatprep.subr.mxu0 0.0
    %1251 = vmatpush1.xpose.msra.mxu0 0.0
    %1252 = vmatprep.subr.mxu0 0.0
    %1253 = vmatpush1.xpose.msra.mxu0 0.0
    %1254 = vmatprep.subr.mxu0 0.0
    %1255 = vmatpush1.xpose.msra.mxu0 0.0
    %1256 = vmatprep.subr.mxu0 0.0
    %1257 = vmatpush1.xpose.msra.mxu0 0.0
    %1258 = vmatprep.subr.mxu0 0.0
    %1259 = vmatpush1.xpose.msra.mxu0 %v1226
    %1260 = vmatprep.subr.mxu0 0.0
    %1261 = vmatpush2.xpose.msra.mxu0 0.0
    %1262 = vmatprep.subr.mxu0 0.0
    %1263 = vmatpush2.xpose.msra.mxu0 0.0
    %1264 = vmatprep.subr.mxu0 0.0
    %1265 = vmatpush2.xpose.msra.mxu0 0.0
    %1266 = vmatprep.subr.mxu0 0.0
    %1267 = vmatpush2.xpose.msra.mxu0 0.0
    %1268 = vmatprep.subr.mxu0 0.0
    %1269 = vmatpush2.xpose.msra.mxu0 0.0
    %1270 = vmatprep.subr.mxu0 0.0
    %1271 = vmatpush2.xpose.msra.mxu0 0.0
    %1272 = vmatprep.subr.mxu0 0.0
    %1273 = vmatpush2.xpose.msra.mxu0 0.0
    %1274 = vmatprep.subr.mxu0 0.0
    %1275 = vmatpush2.xpose.msra.mxu0 0.0
    %1276 = vmatprep.subr.mxu0 0.0
    %1277 = vmatpush2.xpose.msra.mxu0 0.0
    %1278 = vmatprep.subr.mxu0 0.0
    %1279 = vmatpush2.xpose.msra.mxu0 0.0
    %1280 = vmatprep.subr.mxu0 0.0
    %1281 = vmatpush2.xpose.msra.mxu0 0.0
    %1282 = vmatprep.subr.mxu0 0.0
    %1283 = vmatpush2.xpose.msra.mxu0 0.0
    %1284 = vmatprep.subr.mxu0 0.0
    %1285 = vmatpush2.xpose.msra.mxu0 0.0
    %1286 = vmatprep.subr.mxu0 0.0
    %1287 = vmatpush2.xpose.msra.mxu0 0.0
    %1288 = vmatprep.subr.mxu0 0.0
    %1289 = vmatpush2.xpose.msra.mxu0 0.0
    %1290 = vmatprep.subr.mxu0 0.0
    %1291 = vmatpush2.xpose.msra.mxu0 0.0
    %1292 = vmatprep.mubr.f32.mxu0 0.0
    %1293 = vmatmul.mubr.f32.gmra.mxu0 %v1224
    %v1294 = vpop.f32.mrf.mxu0
    %v1295 = vadd.f32 0.0, %v1294
    %v1296 = vpop.f32.mrf.mxu0
    %1297 = vdwg.mxu0
    %v1298 = vsel %vm156, %v1217, -inf
    %1299 = vmax.xlane.f32.xlu0 %v1298
    %v1300 = vpop.xlane.xlu0 %1299
    %v1301 = vsel %vm156, %v1295, -inf
    %1302 = vmax.xlane.f32.xlu0 %v1301
    %v1303 = vpop.xlane.xlu0 %1302
    %v1304 = vsub.f32 %v1217, %v1300
    %v1305 = vsub.f32 %v1295, %v1303
    %v1306 = vmul.f32 %v1304, 1.442695
    %v1307 = vpow.pop %v1306
    %v1308 = vmul.f32 %v1305, 1.442695
    %v1309 = vpow.pop %v1308
    %v1310 = vsel %vm156, %v1307, 0.0
    %1311 = vadd.xlane.f32.xlu0 %v1310
    %v1312 = vpop.xlane.xlu0 %1311
    %v1313 = vsel %vm156, %v1309, 0.0
    %1314 = vadd.xlane.f32.xlu0 %v1313
    %v1315 = vpop.xlane.xlu0 %1314
    %v1316 = vrcp.pop %v1312
    %v1317 = vrcp.pop %v1315
    %v1318 = vmul.f32 %v1307, %v1316
    %v1319 = vmul.f32 %v1309, %v1317
    %1320 = vrot.lane.b32.xlu0 %v145, 40
    %v1321 = vpop.permute.xlu0 %1320
    %v1324 = vsel %vm156, %v1318, 0
    %1326 = vmatprep.subr.mxu0 0.0
    %1327 = vmatpush1.msra.mxu0 0.0
    %1328 = vmatprep.subr.mxu0 0.0
    %1329 = vmatpush1.msra.mxu0 0.0
    %1330 = vmatprep.subr.mxu0 0.0
    %1331 = vmatpush1.msra.mxu0 0.0
    %1332 = vmatprep.subr.mxu0 0.0
    %1333 = vmatpush1.msra.mxu0 0.0
    %1334 = vmatprep.subr.mxu0 0.0
    %1335 = vmatpush1.msra.mxu0 0.0
    %1336 = vmatprep.subr.mxu0 0.0
    %1337 = vmatpush1.msra.mxu0 0.0
    %1338 = vmatprep.subr.mxu0 0.0
    %1339 = vmatpush1.msra.mxu0 0.0
    %1340 = vmatprep.subr.mxu0 0.0
    %1341 = vmatpush1.msra.mxu0 0.0
    %1342 = vmatprep.subr.mxu0 0.0
    %1343 = vmatpush1.msra.mxu0 0.0
    %1344 = vmatprep.subr.mxu0 0.0
    %1345 = vmatpush1.msra.mxu0 0.0
    %1346 = vmatprep.subr.mxu0 0.0
    %1347 = vmatpush1.msra.mxu0 0.0
    %1348 = vmatprep.subr.mxu0 0.0
    %1349 = vmatpush1.msra.mxu0 0.0
    %1350 = vmatprep.subr.mxu0 0.0
    %1351 = vmatpush1.msra.mxu0 0.0
    %1352 = vmatprep.subr.mxu0 0.0
    %1353 = vmatpush1.msra.mxu0 0.0
    %1354 = vmatprep.subr.mxu0 0.0
    %1355 = vmatpush1.msra.mxu0 0.0
    %1356 = vmatprep.subr.mxu0 0.0
    %1357 = vmatpush1.msra.mxu0 %v1321
    %1358 = vmatprep.subr.mxu0 0.0
    %1359 = vmatpush2.msra.mxu0 0.0
    %1360 = vmatprep.subr.mxu0 0.0
    %1361 = vmatpush2.msra.mxu0 0.0
    %1362 = vmatprep.subr.mxu0 0.0
    %1363 = vmatpush2.msra.mxu0 0.0
    %1364 = vmatprep.subr.mxu0 0.0
    %1365 = vmatpush2.msra.mxu0 0.0
    %1366 = vmatprep.subr.mxu0 0.0
    %1367 = vmatpush2.msra.mxu0 0.0
    %1368 = vmatprep.subr.mxu0 0.0
    %1369 = vmatpush2.msra.mxu0 0.0
    %1370 = vmatprep.subr.mxu0 0.0
    %1371 = vmatpush2.msra.mxu0 0.0
    %1372 = vmatprep.subr.mxu0 0.0
    %1373 = vmatpush2.msra.mxu0 0.0
    %1374 = vmatprep.subr.mxu0 0.0
    %1375 = vmatpush2.msra.mxu0 0.0
    %1376 = vmatprep.subr.mxu0 0.0
    %1377 = vmatpush2.msra.mxu0 0.0
    %1378 = vmatprep.subr.mxu0 0.0
    %1379 = vmatpush2.msra.mxu0 0.0
    %1380 = vmatprep.subr.mxu0 0.0
    %1381 = vmatpush2.msra.mxu0 0.0
    %1382 = vmatprep.subr.mxu0 0.0
    %1383 = vmatpush2.msra.mxu0 0.0
    %1384 = vmatprep.subr.mxu0 0.0
    %1385 = vmatpush2.msra.mxu0 0.0
    %1386 = vmatprep.subr.mxu0 0.0
    %1387 = vmatpush2.msra.mxu0 0.0
    %1388 = vmatprep.subr.mxu0 0.0
    %1389 = vmatpush2.msra.mxu0 0.0
    %1390 = vmatprep.mubr.f32.mxu0 0.0
    %1391 = vmatmul.mubr.f32.gmra.mxu0 %v1324
    %v1392 = vpop.f32.mrf.mxu0
    %v1393 = vadd.f32 0.0, %v1392
    %v1394 = vpop.f32.mrf.mxu0
    %1395 = vdwg.mxu0
    %1396 = vrot.lane.b32.xlu0 %v150, 40
    %v1397 = vpop.permute.xlu0 %1396
    %v1400 = vsel %vm156, %v1319, 0
    %1402 = vmatprep.subr.mxu0 0.0
    %1403 = vmatpush1.msra.mxu0 0.0
    %1404 = vmatprep.subr.mxu0 0.0
    %1405 = vmatpush1.msra.mxu0 0.0
    %1406 = vmatprep.subr.mxu0 0.0
    %1407 = vmatpush1.msra.mxu0 0.0
    %1408 = vmatprep.subr.mxu0 0.0
    %1409 = vmatpush1.msra.mxu0 0.0
    %1410 = vmatprep.subr.mxu0 0.0
    %1411 = vmatpush1.msra.mxu0 0.0
    %1412 = vmatprep.subr.mxu0 0.0
    %1413 = vmatpush1.msra.mxu0 0.0
    %1414 = vmatprep.subr.mxu0 0.0
    %1415 = vmatpush1.msra.mxu0 0.0
    %1416 = vmatprep.subr.mxu0 0.0
    %1417 = vmatpush1.msra.mxu0 0.0
    %1418 = vmatprep.subr.mxu0 0.0
    %1419 = vmatpush1.msra.mxu0 0.0
    %1420 = vmatprep.subr.mxu0 0.0
    %1421 = vmatpush1.msra.mxu0 0.0
    %1422 = vmatprep.subr.mxu0 0.0
    %1423 = vmatpush1.msra.mxu0 0.0
    %1424 = vmatprep.subr.mxu0 0.0
    %1425 = vmatpush1.msra.mxu0 0.0
    %1426 = vmatprep.subr.mxu0 0.0
    %1427 = vmatpush1.msra.mxu0 0.0
    %1428 = vmatprep.subr.mxu0 0.0
    %1429 = vmatpush1.msra.mxu0 0.0
    %1430 = vmatprep.subr.mxu0 0.0
    %1431 = vmatpush1.msra.mxu0 0.0
    %1432 = vmatprep.subr.mxu0 0.0
    %1433 = vmatpush1.msra.mxu0 %v1397
    %1434 = vmatprep.subr.mxu0 0.0
    %1435 = vmatpush2.msra.mxu0 0.0
    %1436 = vmatprep.subr.mxu0 0.0
    %1437 = vmatpush2.msra.mxu0 0.0
    %1438 = vmatprep.subr.mxu0 0.0
    %1439 = vmatpush2.msra.mxu0 0.0
    %1440 = vmatprep.subr.mxu0 0.0
    %1441 = vmatpush2.msra.mxu0 0.0
    %1442 = vmatprep.subr.mxu0 0.0
    %1443 = vmatpush2.msra.mxu0 0.0
    %1444 = vmatprep.subr.mxu0 0.0
    %1445 = vmatpush2.msra.mxu0 0.0
    %1446 = vmatprep.subr.mxu0 0.0
    %1447 = vmatpush2.msra.mxu0 0.0
    %1448 = vmatprep.subr.mxu0 0.0
    %1449 = vmatpush2.msra.mxu0 0.0
    %1450 = vmatprep.subr.mxu0 0.0
    %1451 = vmatpush2.msra.mxu0 0.0
    %1452 = vmatprep.subr.mxu0 0.0
    %1453 = vmatpush2.msra.mxu0 0.0
    %1454 = vmatprep.subr.mxu0 0.0
    %1455 = vmatpush2.msra.mxu0 0.0
    %1456 = vmatprep.subr.mxu0 0.0
    %1457 = vmatpush2.msra.mxu0 0.0
    %1458 = vmatprep.subr.mxu0 0.0
    %1459 = vmatpush2.msra.mxu0 0.0
    %1460 = vmatprep.subr.mxu0 0.0
    %1461 = vmatpush2.msra.mxu0 0.0
    %1462 = vmatprep.subr.mxu0 0.0
    %1463 = vmatpush2.msra.mxu0 0.0
    %1464 = vmatprep.subr.mxu0 0.0
    %1465 = vmatpush2.msra.mxu0 0.0
    %1466 = vmatprep.mubr.f32.mxu0 0.0
    %1467 = vmatmul.mubr.f32.gmra.mxu0 %v1400
    %v1468 = vpop.f32.mrf.mxu0
    %v1469 = vadd.f32 0.0, %v1468
    %v1470 = vpop.f32.mrf.mxu0
    %1471 = vdwg.mxu0
    %1474 = vrot.lane.b32.xlu0 %v733, 8
    %v1475 = vpop.permute.xlu0 %1474
    %1476 = vrot.lane.b32.xlu0 %v809, 8
    %v1477 = vpop.permute.xlu0 %1476
    %1482 = vrot.lane.b32.xlu0 %v1063, 16
    %v1483 = vpop.permute.xlu0 %1482
    %1484 = vrot.lane.b32.xlu0 %v1139, 16
    %v1485 = vpop.permute.xlu0 %1484
    %1490 = vrot.lane.b32.xlu0 %v1393, 24
    %v1491 = vpop.permute.xlu0 %1490
    %1492 = vrot.lane.b32.xlu0 %v1469, 24
    %v1493 = vpop.permute.xlu0 %1492
    %v1496 = vsel %vm156, %v403, %v1475
    %v1497 = vsel %vm156, %v479, %v1477
    %vm1498 = vcmask 130048
    %v1499 = vsel %vm1498, %v1496, %v1483
    %v1500 = vsel %vm1498, %v1497, %v1485
    %vm1501 = vcmask 195584
    %v1502 = vsel %vm1501, %v1499, %v1491
    %v1503 = vsel %vm1501, %v1500, %v1493
    %v1504 = vld [vmem:[%s4] sm:$0xff]
    %v1505 = vld [vmem:[%s4 + $0x8] sm:$0xff]
    %v1506 = vld [vmem:[%s4 + $0x10] sm:$0xff]
    %v1507 = vld [vmem:[%s4 + $0x18] sm:$0xff]
    %v1508 = vld [vmem:[%s5] sm:$0x1]
    %v1510 = vlaneseq
    %v1511 = vshrl.u32 %v1510, 7
    %v1512 = vsub.s32 0, %v1511
    %v1513 = vrot.slane %v1508, %v1512
    %v1516 = vsel %vm71, %v1502, 0
    %v1519 = vsel %vm71, %v1503, 0
    %1521 = vmatprep.subr.mxu0 0.0
    %1522 = vmatpush1.msra.mxu0 0.0
    %1523 = vmatprep.subr.mxu0 0.0
    %1524 = vmatpush1.msra.mxu0 0.0
    %1525 = vmatprep.subr.mxu0 0.0
    %1526 = vmatpush1.msra.mxu0 0.0
    %1527 = vmatprep.subr.mxu0 0.0
    %1528 = vmatpush1.msra.mxu0 0.0
    %1529 = vmatprep.subr.mxu0 0.0
    %1530 = vmatpush1.msra.mxu0 0.0
    %1531 = vmatprep.subr.mxu0 0.0
    %1532 = vmatpush1.msra.mxu0 0.0
    %1533 = vmatprep.subr.mxu0 0.0
    %1534 = vmatpush1.msra.mxu0 0.0
    %1535 = vmatprep.subr.mxu0 0.0
    %1536 = vmatpush1.msra.mxu0 0.0
    %1537 = vmatprep.subr.mxu0 0.0
    %1538 = vmatpush1.msra.mxu0 0.0
    %1539 = vmatprep.subr.mxu0 0.0
    %1540 = vmatpush1.msra.mxu0 0.0
    %1541 = vmatprep.subr.mxu0 0.0
    %1542 = vmatpush1.msra.mxu0 0.0
    %1543 = vmatprep.subr.mxu0 0.0
    %1544 = vmatpush1.msra.mxu0 0.0
    %1545 = vmatprep.subr.mxu0 0.0
    %1546 = vmatpush1.msra.mxu0 %v1507
    %1547 = vmatprep.subr.mxu0 0.0
    %1548 = vmatpush1.msra.mxu0 %v1506
    %1549 = vmatprep.subr.mxu0 0.0
    %1550 = vmatpush1.msra.mxu0 %v1505
    %1551 = vmatprep.subr.mxu0 0.0
    %1552 = vmatpush1.msra.mxu0 %v1504
    %1553 = vmatprep.subr.mxu0 0.0
    %1554 = vmatpush2.msra.mxu0 0.0
    %1555 = vmatprep.subr.mxu0 0.0
    %1556 = vmatpush2.msra.mxu0 0.0
    %1557 = vmatprep.subr.mxu0 0.0
    %1558 = vmatpush2.msra.mxu0 0.0
    %1559 = vmatprep.subr.mxu0 0.0
    %1560 = vmatpush2.msra.mxu0 0.0
    %1561 = vmatprep.subr.mxu0 0.0
    %1562 = vmatpush2.msra.mxu0 0.0
    %1563 = vmatprep.subr.mxu0 0.0
    %1564 = vmatpush2.msra.mxu0 0.0
    %1565 = vmatprep.subr.mxu0 0.0
    %1566 = vmatpush2.msra.mxu0 0.0
    %1567 = vmatprep.subr.mxu0 0.0
    %1568 = vmatpush2.msra.mxu0 0.0
    %1569 = vmatprep.subr.mxu0 0.0
    %1570 = vmatpush2.msra.mxu0 0.0
    %1571 = vmatprep.subr.mxu0 0.0
    %1572 = vmatpush2.msra.mxu0 0.0
    %1573 = vmatprep.subr.mxu0 0.0
    %1574 = vmatpush2.msra.mxu0 0.0
    %1575 = vmatprep.subr.mxu0 0.0
    %1576 = vmatpush2.msra.mxu0 0.0
    %1577 = vmatprep.subr.mxu0 0.0
    %1578 = vmatpush2.msra.mxu0 0.0
    %1579 = vmatprep.subr.mxu0 0.0
    %1580 = vmatpush2.msra.mxu0 0.0
    %1581 = vmatprep.subr.mxu0 0.0
    %1582 = vmatpush2.msra.mxu0 0.0
    %1583 = vmatprep.subr.mxu0 0.0
    %1584 = vmatpush2.msra.mxu0 0.0
    %1585 = vmatprep.mubr.f32.mxu0 0.0
    %1586 = vmatmul.mubr.f32.gmra.mxu0 %v1516
    %v1587 = vpop.f32.mrf.mxu0
    %v1588 = vadd.f32 %v1513, %v1587
    %v1589 = vpop.f32.mrf.mxu0
    %1590 = vmatprep.mubr.f32.mxu0 0.0
    %1591 = vmatmul.mubr.f32.gmra.mxu0 %v1519
    %v1592 = vpop.f32.mrf.mxu0
    %v1593 = vadd.f32 %v1513, %v1592
    %v1594 = vpop.f32.mrf.mxu0
    %1595 = vdwg.mxu0
    %v1596 = vadd.f32 %v58, %v1588
    %v1597 = vadd.f32 %v59, %v1593
    %v1598 = vsel %vm71, %v1596, 0.0
    %1599 = vadd.xlane.f32.xlu0 %v1598
    %v1600 = vpop.xlane.xlu0 %1599
    %v1601 = vsel %vm71, %v1597, 0.0
    %1602 = vadd.xlane.f32.xlu0 %v1601
    %v1603 = vpop.xlane.xlu0 %1602
    %v1604 = vrcp.pop 32.0
    %v1605 = vmul.f32 %v1600, %v1604
    %v1606 = vmul.f32 %v1603, %v1604
    %v1607 = vsub.f32 %v1596, %v1605
    %v1608 = vsub.f32 %v1597, %v1606
    %v1609 = vmul.f32 %v1607, %v1607
    %v1610 = vmul.f32 %v1608, %v1608
    %v1611 = vsel %vm71, %v1609, 0.0
    %1612 = vadd.xlane.f32.xlu0 %v1611
    %v1613 = vpop.xlane.xlu0 %1612
    %v1614 = vsel %vm71, %v1610, 0.0
    %1615 = vadd.xlane.f32.xlu0 %v1614
    %v1616 = vpop.xlane.xlu0 %1615
    %v1617 = vmul.f32 %v1613, %v1604
    %v1618 = vmul.f32 %v1616, %v1604
    %v1619 = vadd.f32 %v1617, 1e-05
    %v1620 = vadd.f32 %v1618, 1e-05
    %v1621 = vrsqrt.pop %v1619
    %v1622 = vrsqrt.pop %v1620
    %v1623 = vmul.f32 %v1607, %v1621
    %v1624 = vmul.f32 %v1608, %v1622
    %v1625 = vld [vmem:[%s6] sm:$0x1]
    %v1627 = vlaneseq
    %v1628 = vshrl.u32 %v1627, 7
    %v1629 = vsub.s32 0, %v1628
    %v1630 = vrot.slane %v1625, %v1629
    %v1632 = vmul.f32 %v1623, %v1630
    %v1633 = vmul.f32 %v1624, %v1630
    %v1634 = vld [vmem:[%s7] sm:$0x1]
    %v1636 = vlaneseq
    %v1637 = vshrl.u32 %v1636, 7
    %v1638 = vsub.s32 0, %v1637
    %v1639 = vrot.slane %v1634, %v1638
    %v1641 = vadd.f32 %v1632, %v1639
    %v1642 = vadd.f32 %v1633, %v1639
    %v1643 = vld [vmem:[%s8] sm:$0xff]
    %v1644 = vld [vmem:[%s8 + $0x8] sm:$0xff]
    %v1645 = vld [vmem:[%s8 + $0x10] sm:$0xff]
    %v1646 = vld [vmem:[%s8 + $0x18] sm:$0xff]
    %v1647 = vld [vmem:[%s9] sm:$0x1]
    %v1649 = vlaneseq
    %v1650 = vshrl.u32 %v1649, 7
    %v1651 = vsub.s32 0, %v1650
    %v1652 = vrot.slane %v1647, %v1651
    %v1655 = vsel %vm71, %v1641, 0
    %v1658 = vsel %vm71, %v1642, 0
    %1660 = vmatprep.subr.mxu0 0.0
    %1661 = vmatpush1.msra.mxu0 0.0
    %1662 = vmatprep.subr.mxu0 0.0
    %1663 = vmatpush1.msra.mxu0 0.0
    %1664 = vmatprep.subr.mxu0 0.0
    %1665 = vmatpush1.msra.mxu0 0.0
    %1666 = vmatprep.subr.mxu0 0.0
    %1667 = vmatpush1.msra.mxu0 0.0
    %1668 = vmatprep.subr.mxu0 0.0
    %1669 = vmatpush1.msra.mxu0 0.0
    %1670 = vmatprep.subr.mxu0 0.0
    %1671 = vmatpush1.msra.mxu0 0.0
    %1672 = vmatprep.subr.mxu0 0.0
    %1673 = vmatpush1.msra.mxu0 0.0
    %1674 = vmatprep.subr.mxu0 0.0
    %1675 = vmatpush1.msra.mxu0 0.0
    %1676 = vmatprep.subr.mxu0 0.0
    %1677 = vmatpush1.msra.mxu0 0.0
    %1678 = vmatprep.subr.mxu0 0.0
    %1679 = vmatpush1.msra.mxu0 0.0
    %1680 = vmatprep.subr.mxu0 0.0
    %1681 = vmatpush1.msra.mxu0 0.0
    %1682 = vmatprep.subr.mxu0 0.0
    %1683 = vmatpush1.msra.mxu0 0.0
    %1684 = vmatprep.subr.mxu0 0.0
    %1685 = vmatpush1.msra.mxu0 %v1646
    %1686 = vmatprep.subr.mxu0 0.0
    %1687 = vmatpush1.msra.mxu0 %v1645
    %1688 = vmatprep.subr.mxu0 0.0
    %1689 = vmatpush1.msra.mxu0 %v1644
    %1690 = vmatprep.subr.mxu0 0.0
    %1691 = vmatpush1.msra.mxu0 %v1643
    %1692 = vmatprep.subr.mxu0 0.0
    %1693 = vmatpush2.msra.mxu0 0.0
    %1694 = vmatprep.subr.mxu0 0.0
    %1695 = vmatpush2.msra.mxu0 0.0
    %1696 = vmatprep.subr.mxu0 0.0
    %1697 = vmatpush2.msra.mxu0 0.0
    %1698 = vmatprep.subr.mxu0 0.0
    %1699 = vmatpush2.msra.mxu0 0.0
    %1700 = vmatprep.subr.mxu0 0.0
    %1701 = vmatpush2.msra.mxu0 0.0
    %1702 = vmatprep.subr.mxu0 0.0
    %1703 = vmatpush2.msra.mxu0 0.0
    %1704 = vmatprep.subr.mxu0 0.0
    %1705 = vmatpush2.msra.mxu0 0.0
    %1706 = vmatprep.subr.mxu0 0.0
    %1707 = vmatpush2.msra.mxu0 0.0
    %1708 = vmatprep.subr.mxu0 0.0
    %1709 = vmatpush2.msra.mxu0 0.0
    %1710 = vmatprep.subr.mxu0 0.0
    %1711 = vmatpush2.msra.mxu0 0.0
    %1712 = vmatprep.subr.mxu0 0.0
    %1713 = vmatpush2.msra.mxu0 0.0
    %1714 = vmatprep.subr.mxu0 0.0
    %1715 = vmatpush2.msra.mxu0 0.0
    %1716 = vmatprep.subr.mxu0 0.0
    %1717 = vmatpush2.msra.mxu0 0.0
    %1718 = vmatprep.subr.mxu0 0.0
    %1719 = vmatpush2.msra.mxu0 0.0
    %1720 = vmatprep.subr.mxu0 0.0
    %1721 = vmatpush2.msra.mxu0 0.0
    %1722 = vmatprep.subr.mxu0 0.0
    %1723 = vmatpush2.msra.mxu0 0.0
    %1724 = vmatprep.mubr.f32.mxu0 0.0
    %1725 = vmatmul.mubr.f32.gmra.mxu0 %v1655
    %v1726 = vpop.f32.mrf.mxu0
    %v1727 = vadd.f32 %v1652, %v1726
    %v1728 = vpop.f32.mrf.mxu0
    %1729 = vmatprep.mubr.f32.mxu0 0.0
    %1730 = vmatmul.mubr.f32.gmra.mxu0 %v1658
    %v1731 = vpop.f32.mrf.mxu0
    %v1732 = vadd.f32 %v1652, %v1731
    %v1733 = vpop.f32.mrf.mxu0
    %1734 = vdwg.mxu0
    %v1735 = vmax.f32 %v1727, 0.0
    %v1736 = vmax.f32 %v1732, 0.0
    %v1737 = vld [vmem:[%s10] sm:$0xff]
    %v1738 = vld [vmem:[%s10 + $0x8] sm:$0xff]
    %v1739 = vld [vmem:[%s10 + $0x10] sm:$0xff]
    %v1740 = vld [vmem:[%s10 + $0x18] sm:$0xff]
    %v1741 = vld [vmem:[%s10 + $0x20] sm:$0xff]
    %v1742 = vld [vmem:[%s10 + $0x28] sm:$0xff]
    %v1743 = vld [vmem:[%s10 + $0x30] sm:$0xff]
    %v1744 = vld [vmem:[%s10 + $0x38] sm:$0xff]
    %v1745 = vld [vmem:[%s11] sm:$0x1]
    %v1747 = vlaneseq
    %v1748 = vshrl.u32 %v1747, 7
    %v1749 = vsub.s32 0, %v1748
    %v1750 = vrot.slane %v1745, %v1749
    %vm1752 = vcmask 523264
    %v1754 = vsel %vm1752, %v1735, 0
    %v1757 = vsel %vm1752, %v1736, 0
    %1759 = vmatprep.subr.mxu0 0.0
    %1760 = vmatpush1.msra.mxu0 0.0
    %1761 = vmatprep.subr.mxu0 0.0
    %1762 = vmatpush1.msra.mxu0 0.0
    %1763 = vmatprep.subr.mxu0 0.0
    %1764 = vmatpush1.msra.mxu0 0.0
    %1765 = vmatprep.subr.mxu0 0.0
    %1766 = vmatpush1.msra.mxu0 0.0
    %1767 = vmatprep.subr.mxu0 0.0
    %1768 = vmatpush1.msra.mxu0 0.0
    %1769 = vmatprep.subr.mxu0 0.0
    %1770 = vmatpush1.msra.mxu0 0.0
    %1771 = vmatprep.subr.mxu0 0.0
    %1772 = vmatpush1.msra.mxu0 0.0
    %1773 = vmatprep.subr.mxu0 0.0
    %1774 = vmatpush1.msra.mxu0 0.0
    %1775 = vmatprep.subr.mxu0 0.0
    %1776 = vmatpush1.msra.mxu0 %v1744
    %1777 = vmatprep.subr.mxu0 0.0
    %1778 = vmatpush1.msra.mxu0 %v1743
    %1779 = vmatprep.subr.mxu0 0.0
    %1780 = vmatpush1.msra.mxu0 %v1742
    %1781 = vmatprep.subr.mxu0 0.0
    %1782 = vmatpush1.msra.mxu0 %v1741
    %1783 = vmatprep.subr.mxu0 0.0
    %1784 = vmatpush1.msra.mxu0 %v1740
    %1785 = vmatprep.subr.mxu0 0.0
    %1786 = vmatpush1.msra.mxu0 %v1739
    %1787 = vmatprep.subr.mxu0 0.0
    %1788 = vmatpush1.msra.mxu0 %v1738
    %1789 = vmatprep.subr.mxu0 0.0
    %1790 = vmatpush1.msra.mxu0 %v1737
    %1791 = vmatprep.subr.mxu0 0.0
    %1792 = vmatpush2.msra.mxu0 0.0
    %1793 = vmatprep.subr.mxu0 0.0
    %1794 = vmatpush2.msra.mxu0 0.0
    %1795 = vmatprep.subr.mxu0 0.0
    %1796 = vmatpush2.msra.mxu0 0.0
    %1797 = vmatprep.subr.mxu0 0.0
    %1798 = vmatpush2.msra.mxu0 0.0
    %1799 = vmatprep.subr.mxu0 0.0
    %1800 = vmatpush2.msra.mxu0 0.0
    %1801 = vmatprep.subr.mxu0 0.0
    %1802 = vmatpush2.msra.mxu0 0.0
    %1803 = vmatprep.subr.mxu0 0.0
    %1804 = vmatpush2.msra.mxu0 0.0
    %1805 = vmatprep.subr.mxu0 0.0
    %1806 = vmatpush2.msra.mxu0 0.0
    %1807 = vmatprep.subr.mxu0 0.0
    %1808 = vmatpush2.msra.mxu0 0.0
    %1809 = vmatprep.subr.mxu0 0.0
    %1810 = vmatpush2.msra.mxu0 0.0
    %1811 = vmatprep.subr.mxu0 0.0
    %1812 = vmatpush2.msra.mxu0 0.0
    %1813 = vmatprep.subr.mxu0 0.0
    %1814 = vmatpush2.msra.mxu0 0.0
    %1815 = vmatprep.subr.mxu0 0.0
    %1816 = vmatpush2.msra.mxu0 0.0
    %1817 = vmatprep.subr.mxu0 0.0
    %1818 = vmatpush2.msra.mxu0 0.0
    %1819 = vmatprep.subr.mxu0 0.0
    %1820 = vmatpush2.msra.mxu0 0.0
    %1821 = vmatprep.subr.mxu0 0.0
    %1822 = vmatpush2.msra.mxu0 0.0
    %1823 = vmatprep.mubr.f32.mxu0 0.0
    %1824 = vmatmul.mubr.f32.gmra.mxu0 %v1754
    %v1825 = vpop.f32.mrf.mxu0
    %v1826 = vadd.f32 %v1750, %v1825
    %v1827 = vpop.f32.mrf.mxu0
    %1828 = vmatprep.mubr.f32.mxu0 0.0
    %1829 = vmatmul.mubr.f32.gmra.mxu0 %v1757
    %v1830 = vpop.f32.mrf.mxu0
    %v1831 = vadd.f32 %v1750, %v1830
    %v1832 = vpop.f32.mrf.mxu0
    %1833 = vdwg.mxu0
    %v1834 = vadd.f32 %v1641, %v1826
    %v1835 = vadd.f32 %v1642, %v1831
    %v1836 = vsel %vm71, %v1834, 0.0
    %1837 = vadd.xlane.f32.xlu0 %v1836
    %v1838 = vpop.xlane.xlu0 %1837
    %v1839 = vsel %vm71, %v1835, 0.0
    %1840 = vadd.xlane.f32.xlu0 %v1839
    %v1841 = vpop.xlane.xlu0 %1840
    %v1842 = vmul.f32 %v1838, %v1604
    %v1843 = vmul.f32 %v1841, %v1604
    %v1844 = vsub.f32 %v1834, %v1842
    %v1845 = vsub.f32 %v1835, %v1843
    %v1846 = vmul.f32 %v1844, %v1844
    %v1847 = vmul.f32 %v1845, %v1845
    %v1848 = vsel %vm71, %v1846, 0.0
    %1849 = vadd.xlane.f32.xlu0 %v1848
    %v1850 = vpop.xlane.xlu0 %1849
    %v1851 = vsel %vm71, %v1847, 0.0
    %1852 = vadd.xlane.f32.xlu0 %v1851
    %v1853 = vpop.xlane.xlu0 %1852
    %v1854 = vmul.f32 %v1850, %v1604
    %v1855 = vmul.f32 %v1853, %v1604
    %v1856 = vadd.f32 %v1854, 1e-05
    %v1857 = vadd.f32 %v1855, 1e-05
    %v1858 = vrsqrt.pop %v1856
    %v1859 = vrsqrt.pop %v1857
    %v1860 = vmul.f32 %v1844, %v1858
    %v1861 = vmul.f32 %v1845, %v1859
    %v1862 = vld [vmem:[%s12] sm:$0x1]
    %v1864 = vlaneseq
    %v1865 = vshrl.u32 %v1864, 7
    %v1866 = vsub.s32 0, %v1865
    %v1867 = vrot.slane %v1862, %v1866
    %v1869 = vmul.f32 %v1860, %v1867
    %v1870 = vmul.f32 %v1861, %v1867
    %v1871 = vld [vmem:[%s13] sm:$0x1]
    %v1873 = vlaneseq
    %v1874 = vshrl.u32 %v1873, 7
    %v1875 = vsub.s32 0, %v1874
    %v1876 = vrot.slane %v1871, %v1875
    %v1878 = vadd.f32 %v1869, %v1876
    %v1879 = vadd.f32 %v1870, %v1876
  $region62: #{albert_encoder_forward.1} parent=0 // loop_footer
    %s57 = sadd.s32 1, %s53
  $region63: #{albert_encoder_forward.1} parent=0 // loop_footer_branch
    %52 = sbr.rel target = $region59
  $region64: #{albert_encoder_forward.1} parent=0 // loop_exit
    _
  %v1882 = vrot.slane %v59, 7
  %vm1883 = vcmask 1041409
  %v1884 = vsel %vm1883, %v1882, %v58
  %vm1886 = vcmask 254976
  %1887 = vst.msk [vmem:[%s14] sm:$0x3] %vm1886, %v1884
  // Predicated region
  $region65: #{albert_encoder_forward.1} parent=0 // pred_check
    _
  $region66: #{albert_encoder_forward.1} parent=0 // pred_check_branch
    %1889 = sbr.rel (0) target = $region68
  $region67: #{albert_encoder_forward.1} parent=0 // pred_region
    _
  $region68: #{albert_encoder_forward.1} parent=0 // pred_fallthru
    _
  // Predicated region
  $region69: #{albert_encoder_forward.1} parent=0 // pred_check
    _
  $region70: #{albert_encoder_forward.1} parent=0 // pred_check_branch
    %1891 = sbr.rel (0) target = $region72
  $region71: #{albert_encoder_forward.1} parent=0 // pred_region
    _
  $region72: #{albert_encoder_forward.1} parent=0 // pred_fallthru
    _

</llo_original>
